<compile_context>
chip_gen: v6e
topology: v6e:2x2x1
jax: 0.10.0
libtpu: 0.0.40
codegen_flags: <defaults>
</compile_context>

<pallas_src>
import functools

import numpy as np
import jax
import jax.numpy as jnp
from jax.experimental import pallas as pl
from jax.experimental.pallas import tpu as pltpu


def _round_up(x, m):
    return ((x + m - 1) // m) * m


_MOSAIC_PARAMS = pltpu.CompilerParams(
    dimension_semantics=("parallel",),
    vmem_limit_bytes=32 * 1024 * 1024,
)


# ---------------------------------------------------------------------------
# Pallas kernels
# ---------------------------------------------------------------------------
def _linear_kernel(a_ref, w_ref, b_ref, o_ref):
    # fc: out = a @ w + b   (bf16 operands, f32 accumulate/epilogue)
    acc = jnp.dot(a_ref[...], w_ref[...], preferred_element_type=jnp.float32)
    acc = acc + b_ref[...]
    o_ref[...] = acc.astype(o_ref.dtype)


def _deconv_tap_kernel(a0_ref, a1_ref, a2_ref, a3_ref, w_ref, b_ref, o_ref, *, act):
    # Sub-pixel ConvTranspose2d: accumulate the four 2x2 taps (dy, dx) with an
    # unrolled loop of MXU matmuls into one f32 accumulator, then bias + activation.
    acc = jnp.dot(a0_ref[...], w_ref[0], preferred_element_type=jnp.float32)
    acc = acc + jnp.dot(a1_ref[...], w_ref[1], preferred_element_type=jnp.float32)
    acc = acc + jnp.dot(a2_ref[...], w_ref[2], preferred_element_type=jnp.float32)
    acc = acc + jnp.dot(a3_ref[...], w_ref[3], preferred_element_type=jnp.float32)
    acc = acc + b_ref[...]
    if act == "leaky_relu":
        acc = jnp.maximum(acc, 0.01 * acc)          # single vmax (slope 0.01)
    elif act == "sigmoid":
        acc = pl.reciprocal(1.0 + jnp.exp(-acc), approx=True)   # EUP exp + vrcp
    o_ref[...] = acc.astype(o_ref.dtype)


# ---------------------------------------------------------------------------
# Kernel wrappers
# ---------------------------------------------------------------------------
def fused_linear(x, w_t, bias_row, out_dtype=jnp.bfloat16):
    """out = x @ w_t + bias.  x:(M,K), w_t:(K,N) bf16, bias_row:(1,N) f32."""
    M, K = x.shape
    N = w_t.shape[1]                      # 768 here -> already a multiple of 128
    tm = _round_up(M, 16)
    x_p = jnp.pad(x.astype(jnp.bfloat16), ((0, tm - M), (0, 0)))
    out = pl.pallas_call(
        _linear_kernel,
        out_shape=jax.ShapeDtypeStruct((tm, N), out_dtype),
        grid=(1,),
        in_specs=[
            pl.BlockSpec((tm, K), lambda i: (i, 0)),
            pl.BlockSpec((K, N), lambda i: (0, 0)),
            pl.BlockSpec((1, N), lambda i: (0, 0)),
        ],
        out_specs=pl.BlockSpec((tm, N), lambda i: (i, 0)),
        compiler_params=_MOSAIC_PARAMS,
    )(x_p, w_t, bias_row)
    return out[:M]


def fused_deconv_matmul(slabs, w_stack, bias_row, act, out_dtype):
    """slabs: 4 arrays (M, Cin) bf16 (shifted 2x2-tap views of the padded input),
    w_stack: (4, Cin, 128) bf16, bias_row: (1, 128) f32.
    Returns act(sum_t slabs[t] @ w_stack[t] + bias) of shape (M, 128)."""
    M, Cin = slabs[0].shape
    Npad = w_stack.shape[-1]              # 128 -> unmasked lane-dense stores
    m16 = _round_up(M, 16)
    grid_m = 2 if m16 >= 256 else 1       # split only the biggest layer (v7x megacore)
    tm = _round_up(-(-M // grid_m), 16)
    m_pad = tm * grid_m
    slabs_p = [jnp.pad(s, ((0, m_pad - M), (0, 0))) for s in slabs]
    out = pl.pallas_call(
        functools.partial(_deconv_tap_kernel, act=act),
        out_shape=jax.ShapeDtypeStruct((m_pad, Npad), out_dtype),
        grid=(grid_m,),
        in_specs=[pl.BlockSpec((tm, Cin), lambda i: (i, 0))] * 4
        + [
            pl.BlockSpec((4, Cin, Npad), lambda i: (0, 0, 0)),   # resident weights
            pl.BlockSpec((1, Npad), lambda i: (0, 0)),           # resident bias row
        ],
        out_specs=pl.BlockSpec((tm, Npad), lambda i: (i, 0)),
        compiler_params=_MOSAIC_PARAMS,
    )(*slabs_p, w_stack, bias_row)
    return out[:M]


def conv_transpose_layer(x, w_stack, bias_row, cout, act, out_dtype):
    """x: (B, H, W, Cin) NHWC.  ConvTranspose2d(k=4, s=2, p=1) via sub-pixel decomposition.

    Patch (m, n) over the 1-padded input (rows m..m+1, cols n..n+1 of x_pad) produces the
    2x2 output block at rows {2m-1, 2m}, cols {2n-1, 2n}; the depth-to-space interleave
    plus a 1-pixel crop reassembles the (2H, 2W) output.
    """
    B, H, W, Cin = x.shape
    Hp, Wp = H + 1, W + 1
    xp = jnp.pad(x, ((0, 0), (1, 1), (1, 1), (0, 0)))
    # TODO(synk): the 4 shifted slab copies below could be avoided entirely by passing the
    # padded NHWC activation and gathering 2x2 windows in-kernel; kept as cheap XLA slices
    # since every layer's activation is only a few KB.
    slabs = [
        xp[:, dy:dy + Hp, dx:dx + Wp, :].reshape(B * Hp * Wp, Cin)
        for dy in range(2) for dx in range(2)
    ]
    y = fused_deconv_matmul(slabs, w_stack, bias_row, act, out_dtype)      # (M, 128)
    y = y[:, :4 * cout].reshape(B, Hp, Wp, 2, 2, cout)
    y = jnp.transpose(y, (0, 1, 3, 2, 4, 5)).reshape(B, 2 * Hp, 2 * Wp, cout)
    return y[:, 1:2 * H + 1, 1:2 * W + 1, :]


# ---------------------------------------------------------------------------
# Parameters: synthetic PyTorch-layout weights + one-time kernel preprocessing
# ---------------------------------------------------------------------------
class KeyGen:
    def __init__(self, seed=0):
        self.key = jax.random.PRNGKey(seed)

    def __call__(self):
        self.key, sub = jax.random.split(self.key)
        return sub


def _prep_deconv_weight(w, b, n_pad=128):
    """w: (Cin, Cout, 4, 4) ConvTranspose2d layout -> stacked per-tap matrices
    (4, Cin, n_pad) bf16; b -> parity-tiled (1, n_pad) f32 bias.

    Tap t = dy*2+dx reads padded-input offset (dy, dx); packed output column
    (dy_out*2+dx_out)*Cout + co is the output parity (dy_out, dx_out); the original
    kernel tap is kh = 2 + dy_out - 2*dy, kw = 2 + dx_out - 2*dx.
    """
    Cin, Cout = w.shape[0], w.shape[1]
    d = np.arange(2)
    k_idx = 2 + d[None, :] - 2 * d[:, None]               # [tap, parity] -> kernel index
    w_k = w[:, :, k_idx[:, :, None, None], k_idx[None, None, :, :]]
    # (Cin, Cout, dy, dy_out, dx, dx_out) -> (dy, dx, Cin, dy_out, dx_out, Cout)
    w6 = jnp.transpose(w_k, (2, 4, 0, 3, 5, 1))
    w_stack = w6.reshape(4, Cin, 4 * Cout)
    w_stack = jnp.pad(w_stack, ((0, 0), (0, 0), (0, n_pad - 4 * Cout))).astype(jnp.bfloat16)
    b_row = jnp.pad(jnp.tile(b, 4), (0, n_pad - 4 * Cout)).reshape(1, n_pad).astype(jnp.float32)
    return w_stack, b_row


def make_params(seed=0, depth=3, hidden_dim=512,
                input_sample_shape=(1, 48, 4, 4), output_channel=3):
    kg = KeyGen(seed)
    flat = int(np.prod(input_sample_shape[1:]))            # 48*4*4 = 768
    raw = {
        'fc_w': jax.random.normal(kg(), (flat, hidden_dim), jnp.float32) / np.sqrt(hidden_dim),
        'fc_b': 0.1 * jax.random.normal(kg(), (flat,), jnp.float32),
        'deconv': [],
    }
    couts = []
    for d in range(depth):
        cin = 2 ** (depth - d - 1) * 12
        cout = 2 ** (depth - d - 2) * 12 if d < depth - 1 else output_channel
        k = 4
        w = jax.random.normal(kg(), (cin, cout, k, k), jnp.float32) / np.sqrt(cin * k * k)
        b = 0.1 * jax.random.normal(kg(), (cout,), jnp.float32)
        raw['deconv'].append(dict(w=w, b=b))
        couts.append(cout)

    # One-time preprocessing for the kernels (hoisted out of the forward pass).
    params = {
        'fc_w_t': raw['fc_w'].T.astype(jnp.bfloat16),       # (hidden, flat)
        'fc_b': raw['fc_b'].reshape(1, flat).astype(jnp.float32),
        'deconv': [],
    }
    for layer in raw['deconv']:
        w_stack, b_row = _prep_deconv_weight(layer['w'], layer['b'])
        params['deconv'].append(dict(w=w_stack, b=b_row))

    # Static metadata stays OUT of the traced pytree (fixes the jit reshape crash).
    meta = dict(view_shape=tuple(int(s) for s in input_sample_shape[1:]),
                couts=tuple(couts))
    return params, raw, meta


# ---------------------------------------------------------------------------
# Forward pass (matches decoder.forward: fc -> View -> [ConvT + LeakyReLU]*2 -> ConvT + Sigmoid)
# ---------------------------------------------------------------------------
def decoder_forward(params, x, *, meta):
    B = x.shape[0]
    C0, H0, W0 = meta['view_shape']                         # static Python ints
    h = fused_linear(x, params['fc_w_t'], params['fc_b'], out_dtype=jnp.bfloat16)
    h = h.reshape(B, C0, H0, W0)                            # View(-1, C0, H0, W0)
    h = jnp.transpose(h, (0, 2, 3, 1))                      # NHWC for the deconv stack
    n = len(params['deconv'])
    for i, layer in enumerate(params['deconv']):
        last = i == n - 1
        h = conv_transpose_layer(
            h, layer['w'], layer['b'], meta['couts'][i],
            act=("sigmoid" if last else "leaky_relu"),
            out_dtype=(jnp.float32 if last else jnp.bfloat16))
    return jnp.transpose(h, (0, 3, 1, 2))                   # back to NCHW


# ---------------------------------------------------------------------------
# Pure-JAX f32 reference of the PyTorch module (for a tolerance check)
# ---------------------------------------------------------------------------
def _ref_conv_transpose(x, w, b, stride=2, pad=1):
    B, H, W, _ = x.shape
    Cout, k = w.shape[1], w.shape[2]
    Ho, Wo = (H - 1) * stride - 2 * pad + k, (W - 1) * stride - 2 * pad + k
    yf = jnp.zeros((B, (H - 1) * stride + k, (W - 1) * stride + k, Cout), jnp.float32)
    for kh in range(k):
        for kw in range(k):
            contrib = jnp.einsum('bhwc,cd->bhwd', x, w[:, :, kh, kw])
            yf = yf.at[:, kh:kh + (H - 1) * stride + 1:stride,
                          kw:kw + (W - 1) * stride + 1:stride, :].add(contrib)
    return yf[:, pad:pad + Ho, pad:pad + Wo, :] + b


def reference_forward(raw, x, meta):
    B = x.shape[0]
    C0, H0, W0 = meta['view_shape']
    h = x @ raw['fc_w'].T + raw['fc_b']
    h = h.reshape(B, C0, H0, W0).transpose(0, 2, 3, 1)
    n = len(raw['deconv'])
    for i, layer in enumerate(raw['deconv']):
        h = _ref_conv_transpose(h, layer['w'], layer['b'])
        h = jax.nn.sigmoid(h) if i == n - 1 else jnp.where(h >= 0, h, 0.01 * h)
    return h.transpose(0, 3, 1, 2)


if __name__ == "__main__":
    params, raw, meta = make_params(seed=0)
    x = jax.random.normal(jax.random.PRNGKey(0), (2, 512), jnp.float32)   # (B, hidden_dim)

    fwd = jax.jit(functools.partial(decoder_forward, meta=meta))
    y = jax.block_until_ready(fwd(params, x))

    assert y.shape == (2, 3, 32, 32), y.shape
    assert bool(jnp.all(jnp.isfinite(y)))
    assert bool(jnp.all((y >= -1e-2) & (y <= 1.0 + 1e-2)))   # sigmoid range (approx recip)

    # Tolerance check against the f32 reference (bf16 operands + approx sigmoid).
    y_ref = reference_forward(raw, x, meta)
    max_err = float(jnp.max(jnp.abs(y.astype(jnp.float32) - y_ref)))
    assert max_err < 6e-2, max_err

    print("KERNEL_OK")
</pallas_src>

<mosaic_0001>
module attributes {stable_mosaic.version = 11 : i64} {
  func.func @_linear_kernel(%arg0: i32, %arg1: memref<16x512xbf16, #tpu.memory_space<vmem>>, %arg2: memref<512x768xbf16, #tpu.memory_space<vmem>>, %arg3: memref<1x768xf32, #tpu.memory_space<vmem>>, %arg4: memref<16x768xbf16, #tpu.memory_space<vmem>>) attributes {dimension_semantics = [#tpu.dimension_semantics<parallel>], iteration_bounds = array<i64: 1>, scalar_prefetch = 0 : i64, scratch_operands = 0 : i64, tpu.core_type = #tpu.core_type<tc>, window_params = [{transform_indices = @transform_0, window_bounds = array<i64: 16, 512>}, {pipeline_mode = #tpu.pipeline_mode<synchronous>, transform_indices = @transform_1, window_bounds = array<i64: 512, 768>}, {pipeline_mode = #tpu.pipeline_mode<synchronous>, transform_indices = @transform_2, window_bounds = array<i64: 1, 768>}, {transform_indices = @transform_3, window_bounds = array<i64: 16, 768>}]} {
    %c0 = arith.constant 0 : index
    %c0_0 = arith.constant 0 : index
    %0 = vector.load %arg1[%c0, %c0_0] : memref<16x512xbf16, #tpu.memory_space<vmem>>, vector<16x512xbf16>
    %c0_1 = arith.constant 0 : index
    %c0_2 = arith.constant 0 : index
    %1 = vector.load %arg2[%c0_1, %c0_2] : memref<512x768xbf16, #tpu.memory_space<vmem>>, vector<512x768xbf16>
    %cst = arith.constant dense<0.000000e+00> : vector<16x768xf32>
    %2 = tpu.matmul %0, %1, %cst {dimension_numbers = #tpu.dot_dimension_numbers<[1], [0], [0], [1], [0, 0, 1, 1], [], []>} : vector<16x512xbf16>, vector<512x768xbf16>, vector<16x768xf32> -> vector<16x768xf32>
    %c0_3 = arith.constant 0 : index
    %c0_4 = arith.constant 0 : index
    %3 = vector.load %arg3[%c0_3, %c0_4] : memref<1x768xf32, #tpu.memory_space<vmem>>, vector<1x768xf32>
    %4 = vector.broadcast %3 : vector<1x768xf32> to vector<16x768xf32>
    %5 = arith.addf %2, %4 : vector<16x768xf32>
    %6 = arith.truncf %5 : vector<16x768xf32> to vector<16x768xbf16>
    %c0_5 = arith.constant 0 : index
    %c0_6 = arith.constant 0 : index
    %7 = vector.load %arg4[%c0_5, %c0_6] : memref<16x768xbf16, #tpu.memory_space<vmem>>, vector<16x768xbf16>
    tpu.vector_store %arg4[%c0_5, %c0_6], %6 {strides = array<i32>} : memref<16x768xbf16, #tpu.memory_space<vmem>>, vector<16x768xbf16>,
    return
  }
  func.func @transform_0(%arg0: i32) -> (i32, i32) {
    %c0_i32 = arith.constant 0 : i32
    %c0_i32_0 = arith.constant 0 : i32
    return %arg0, %c0_i32 : i32, i32
  }
  func.func @transform_1(%arg0: i32) -> (i32, i32) {
    %c0_i32 = arith.constant 0 : i32
    %c0_i32_0 = arith.constant 0 : i32
    %c0_i32_1 = arith.constant 0 : i32
    return %c0_i32, %c0_i32_0 : i32, i32
  }
  func.func @transform_2(%arg0: i32) -> (i32, i32) {
    %c0_i32 = arith.constant 0 : i32
    %c0_i32_0 = arith.constant 0 : i32
    %c0_i32_1 = arith.constant 0 : i32
    return %c0_i32, %c0_i32_0 : i32, i32
  }
  func.func @transform_3(%arg0: i32) -> (i32, i32) {
    %c0_i32 = arith.constant 0 : i32
    %c0_i32_0 = arith.constant 0 : i32
    return %arg0, %c0_i32 : i32, i32
  }
}

module attributes {stable_mosaic.version = 11 : i64} {
  func.func @_deconv_tap_kernel(%arg0: i32, %arg1: memref<64x48xbf16, #tpu.memory_space<vmem>>, %arg2: memref<64x48xbf16, #tpu.memory_space<vmem>>, %arg3: memref<64x48xbf16, #tpu.memory_space<vmem>>, %arg4: memref<64x48xbf16, #tpu.memory_space<vmem>>, %arg5: memref<4x48x128xbf16, #tpu.memory_space<vmem>>, %arg6: memref<1x128xf32, #tpu.memory_space<vmem>>, %arg7: memref<64x128xbf16, #tpu.memory_space<vmem>>) attributes {dimension_semantics = [#tpu.dimension_semantics<parallel>], iteration_bounds = array<i64: 1>, scalar_prefetch = 0 : i64, scratch_operands = 0 : i64, tpu.core_type = #tpu.core_type<tc>, window_params = [{transform_indices = @transform_0, window_bounds = array<i64: 64, 48>}, {transform_indices = @transform_1, window_bounds = array<i64: 64, 48>}, {transform_indices = @transform_2, window_bounds = array<i64: 64, 48>}, {transform_indices = @transform_3, window_bounds = array<i64: 64, 48>}, {pipeline_mode = #tpu.pipeline_mode<synchronous>, transform_indices = @transform_4, window_bounds = array<i64: 4, 48, 128>}, {pipeline_mode = #tpu.pipeline_mode<synchronous>, transform_indices = @transform_5, window_bounds = array<i64: 1, 128>}, {transform_indices = @transform_6, window_bounds = array<i64: 64, 128>}]} {
    %c0 = arith.constant 0 : index
    %c0_0 = arith.constant 0 : index
    %0 = vector.load %arg1[%c0, %c0_0] : memref<64x48xbf16, #tpu.memory_space<vmem>>, vector<64x48xbf16>
    %c0_1 = arith.constant 0 : index
    %c0_2 = arith.constant 0 : index
    %c0_3 = arith.constant 0 : index
    %1 = vector.load %arg5[%c0_1, %c0_2, %c0_3] : memref<4x48x128xbf16, #tpu.memory_space<vmem>>, vector<1x48x128xbf16>
    %2 = vector.shape_cast %1 : vector<1x48x128xbf16> to vector<48x128xbf16>
    %cst = arith.constant dense<0.000000e+00> : vector<64x128xf32>
    %3 = tpu.matmul %0, %2, %cst {dimension_numbers = #tpu.dot_dimension_numbers<[1], [0], [0], [1], [0, 0, 1, 1], [], []>} : vector<64x48xbf16>, vector<48x128xbf16>, vector<64x128xf32> -> vector<64x128xf32>
    %c0_4 = arith.constant 0 : index
    %c0_5 = arith.constant 0 : index
    %4 = vector.load %arg2[%c0_4, %c0_5] : memref<64x48xbf16, #tpu.memory_space<vmem>>, vector<64x48xbf16>
    %c1 = arith.constant 1 : index
    %c0_6 = arith.constant 0 : index
    %c0_7 = arith.constant 0 : index
    %5 = vector.load %arg5[%c1, %c0_6, %c0_7] : memref<4x48x128xbf16, #tpu.memory_space<vmem>>, vector<1x48x128xbf16>
    %6 = vector.shape_cast %5 : vector<1x48x128xbf16> to vector<48x128xbf16>
    %cst_8 = arith.constant dense<0.000000e+00> : vector<64x128xf32>
    %7 = tpu.matmul %4, %6, %cst_8 {dimension_numbers = #tpu.dot_dimension_numbers<[1], [0], [0], [1], [0, 0, 1, 1], [], []>} : vector<64x48xbf16>, vector<48x128xbf16>, vector<64x128xf32> -> vector<64x128xf32>
    %8 = arith.addf %3, %7 : vector<64x128xf32>
    %c0_9 = arith.constant 0 : index
    %c0_10 = arith.constant 0 : index
    %9 = vector.load %arg3[%c0_9, %c0_10] : memref<64x48xbf16, #tpu.memory_space<vmem>>, vector<64x48xbf16>
    %c2 = arith.constant 2 : index
    %c0_11 = arith.constant 0 : index
    %c0_12 = arith.constant 0 : index
    %10 = vector.load %arg5[%c2, %c0_11, %c0_12] : memref<4x48x128xbf16, #tpu.memory_space<vmem>>, vector<1x48x128xbf16>
    %11 = vector.shape_cast %10 : vector<1x48x128xbf16> to vector<48x128xbf16>
    %cst_13 = arith.constant dense<0.000000e+00> : vector<64x128xf32>
    %12 = tpu.matmul %9, %11, %cst_13 {dimension_numbers = #tpu.dot_dimension_numbers<[1], [0], [0], [1], [0, 0, 1, 1], [], []>} : vector<64x48xbf16>, vector<48x128xbf16>, vector<64x128xf32> -> vector<64x128xf32>
    %13 = arith.addf %8, %12 : vector<64x128xf32>
    %c0_14 = arith.constant 0 : index
    %c0_15 = arith.constant 0 : index
    %14 = vector.load %arg4[%c0_14, %c0_15] : memref<64x48xbf16, #tpu.memory_space<vmem>>, vector<64x48xbf16>
    %c3 = arith.constant 3 : index
    %c0_16 = arith.constant 0 : index
    %c0_17 = arith.constant 0 : index
    %15 = vector.load %arg5[%c3, %c0_16, %c0_17] : memref<4x48x128xbf16, #tpu.memory_space<vmem>>, vector<1x48x128xbf16>
    %16 = vector.shape_cast %15 : vector<1x48x128xbf16> to vector<48x128xbf16>
    %cst_18 = arith.constant dense<0.000000e+00> : vector<64x128xf32>
    %17 = tpu.matmul %14, %16, %cst_18 {dimension_numbers = #tpu.dot_dimension_numbers<[1], [0], [0], [1], [0, 0, 1, 1], [], []>} : vector<64x48xbf16>, vector<48x128xbf16>, vector<64x128xf32> -> vector<64x128xf32>
    %18 = arith.addf %13, %17 : vector<64x128xf32>
    %c0_19 = arith.constant 0 : index
    %c0_20 = arith.constant 0 : index
    %19 = vector.load %arg6[%c0_19, %c0_20] : memref<1x128xf32, #tpu.memory_space<vmem>>, vector<1x128xf32>
    %20 = vector.broadcast %19 : vector<1x128xf32> to vector<64x128xf32>
    %21 = arith.addf %18, %20 : vector<64x128xf32>
    %cst_21 = arith.constant 0.00999999977 : f32
    %22 = vector.broadcast %cst_21 : f32 to vector<64x128xf32>
    %23 = arith.mulf %22, %21 : vector<64x128xf32>
    %24 = arith.maximumf %21, %23 : vector<64x128xf32>
    %25 = arith.truncf %24 : vector<64x128xf32> to vector<64x128xbf16>
    %c0_22 = arith.constant 0 : index
    %c0_23 = arith.constant 0 : index
    %26 = vector.load %arg7[%c0_22, %c0_23] : memref<64x128xbf16, #tpu.memory_space<vmem>>, vector<64x128xbf16>
    tpu.vector_store %arg7[%c0_22, %c0_23], %25 {strides = array<i32>} : memref<64x128xbf16, #tpu.memory_space<vmem>>, vector<64x128xbf16>,
    return
  }
  func.func @transform_0(%arg0: i32) -> (i32, i32) {
    %c0_i32 = arith.constant 0 : i32
    %c0_i32_0 = arith.constant 0 : i32
    return %arg0, %c0_i32 : i32, i32
  }
  func.func @transform_1(%arg0: i32) -> (i32, i32) {
    %c0_i32 = arith.constant 0 : i32
    %c0_i32_0 = arith.constant 0 : i32
    return %arg0, %c0_i32 : i32, i32
  }
  func.func @transform_2(%arg0: i32) -> (i32, i32) {
    %c0_i32 = arith.constant 0 : i32
    %c0_i32_0 = arith.constant 0 : i32
    return %arg0, %c0_i32 : i32, i32
  }
  func.func @transform_3(%arg0: i32) -> (i32, i32) {
    %c0_i32 = arith.constant 0 : i32
    %c0_i32_0 = arith.constant 0 : i32
    return %arg0, %c0_i32 : i32, i32
  }
  func.func @transform_4(%arg0: i32) -> (i32, i32, i32) {
    %c0_i32 = arith.constant 0 : i32
    %c0_i32_0 = arith.constant 0 : i32
    %c0_i32_1 = arith.constant 0 : i32
    %c0_i32_2 = arith.constant 0 : i32
    return %c0_i32, %c0_i32_0, %c0_i32_1 : i32, i32, i32
  }
  func.func @transform_5(%arg0: i32) -> (i32, i32) {
    %c0_i32 = arith.constant 0 : i32
    %c0_i32_0 = arith.constant 0 : i32
    %c0_i32_1 = arith.constant 0 : i32
    return %c0_i32, %c0_i32_0 : i32, i32
  }
  func.func @transform_6(%arg0: i32) -> (i32, i32) {
    %c0_i32 = arith.constant 0 : i32
    %c0_i32_0 = arith.constant 0 : i32
    return %arg0, %c0_i32 : i32, i32
  }
}

module attributes {stable_mosaic.version = 11 : i64} {
  func.func @_deconv_tap_kernel(%arg0: i32, %arg1: memref<176x24xbf16, #tpu.memory_space<vmem>>, %arg2: memref<176x24xbf16, #tpu.memory_space<vmem>>, %arg3: memref<176x24xbf16, #tpu.memory_space<vmem>>, %arg4: memref<176x24xbf16, #tpu.memory_space<vmem>>, %arg5: memref<4x24x128xbf16, #tpu.memory_space<vmem>>, %arg6: memref<1x128xf32, #tpu.memory_space<vmem>>, %arg7: memref<176x128xbf16, #tpu.memory_space<vmem>>) attributes {dimension_semantics = [#tpu.dimension_semantics<parallel>], iteration_bounds = array<i64: 1>, scalar_prefetch = 0 : i64, scratch_operands = 0 : i64, tpu.core_type = #tpu.core_type<tc>, window_params = [{transform_indices = @transform_0, window_bounds = array<i64: 176, 24>}, {transform_indices = @transform_1, window_bounds = array<i64: 176, 24>}, {transform_indices = @transform_2, window_bounds = array<i64: 176, 24>}, {transform_indices = @transform_3, window_bounds = array<i64: 176, 24>}, {pipeline_mode = #tpu.pipeline_mode<synchronous>, transform_indices = @transform_4, window_bounds = array<i64: 4, 24, 128>}, {pipeline_mode = #tpu.pipeline_mode<synchronous>, transform_indices = @transform_5, window_bounds = array<i64: 1, 128>}, {transform_indices = @transform_6, window_bounds = array<i64: 176, 128>}]} {
    %c0 = arith.constant 0 : index
    %c0_0 = arith.constant 0 : index
    %0 = vector.load %arg1[%c0, %c0_0] : memref<176x24xbf16, #tpu.memory_space<vmem>>, vector<176x24xbf16>
    %c0_1 = arith.constant 0 : index
    %c0_2 = arith.constant 0 : index
    %c0_3 = arith.constant 0 : index
    %1 = vector.load %arg5[%c0_1, %c0_2, %c0_3] : memref<4x24x128xbf16, #tpu.memory_space<vmem>>, vector<1x24x128xbf16>
    %2 = vector.shape_cast %1 : vector<1x24x128xbf16> to vector<24x128xbf16>
    %cst = arith.constant dense<0.000000e+00> : vector<176x128xf32>
    %3 = tpu.matmul %0, %2, %cst {dimension_numbers = #tpu.dot_dimension_numbers<[1], [0], [0], [1], [0, 0, 1, 1], [], []>} : vector<176x24xbf16>, vector<24x128xbf16>, vector<176x128xf32> -> vector<176x128xf32>
    %c0_4 = arith.constant 0 : index
    %c0_5 = arith.constant 0 : index
    %4 = vector.load %arg2[%c0_4, %c0_5] : memref<176x24xbf16, #tpu.memory_space<vmem>>, vector<176x24xbf16>
    %c1 = arith.constant 1 : index
    %c0_6 = arith.constant 0 : index
    %c0_7 = arith.constant 0 : index
    %5 = vector.load %arg5[%c1, %c0_6, %c0_7] : memref<4x24x128xbf16, #tpu.memory_space<vmem>>, vector<1x24x128xbf16>
    %6 = vector.shape_cast %5 : vector<1x24x128xbf16> to vector<24x128xbf16>
    %cst_8 = arith.constant dense<0.000000e+00> : vector<176x128xf32>
    %7 = tpu.matmul %4, %6, %cst_8 {dimension_numbers = #tpu.dot_dimension_numbers<[1], [0], [0], [1], [0, 0, 1, 1], [], []>} : vector<176x24xbf16>, vector<24x128xbf16>, vector<176x128xf32> -> vector<176x128xf32>
    %8 = arith.addf %3, %7 : vector<176x128xf32>
    %c0_9 = arith.constant 0 : index
    %c0_10 = arith.constant 0 : index
    %9 = vector.load %arg3[%c0_9, %c0_10] : memref<176x24xbf16, #tpu.memory_space<vmem>>, vector<176x24xbf16>
    %c2 = arith.constant 2 : index
    %c0_11 = arith.constant 0 : index
    %c0_12 = arith.constant 0 : index
    %10 = vector.load %arg5[%c2, %c0_11, %c0_12] : memref<4x24x128xbf16, #tpu.memory_space<vmem>>, vector<1x24x128xbf16>
    %11 = vector.shape_cast %10 : vector<1x24x128xbf16> to vector<24x128xbf16>
    %cst_13 = arith.constant dense<0.000000e+00> : vector<176x128xf32>
    %12 = tpu.matmul %9, %11, %cst_13 {dimension_numbers = #tpu.dot_dimension_numbers<[1], [0], [0], [1], [0, 0, 1, 1], [], []>} : vector<176x24xbf16>, vector<24x128xbf16>, vector<176x128xf32> -> vector<176x128xf32>
    %13 = arith.addf %8, %12 : vector<176x128xf32>
    %c0_14 = arith.constant 0 : index
    %c0_15 = arith.constant 0 : index
    %14 = vector.load %arg4[%c0_14, %c0_15] : memref<176x24xbf16, #tpu.memory_space<vmem>>, vector<176x24xbf16>
    %c3 = arith.constant 3 : index
    %c0_16 = arith.constant 0 : index
    %c0_17 = arith.constant 0 : index
    %15 = vector.load %arg5[%c3, %c0_16, %c0_17] : memref<4x24x128xbf16, #tpu.memory_space<vmem>>, vector<1x24x128xbf16>
    %16 = vector.shape_cast %15 : vector<1x24x128xbf16> to vector<24x128xbf16>
    %cst_18 = arith.constant dense<0.000000e+00> : vector<176x128xf32>
    %17 = tpu.matmul %14, %16, %cst_18 {dimension_numbers = #tpu.dot_dimension_numbers<[1], [0], [0], [1], [0, 0, 1, 1], [], []>} : vector<176x24xbf16>, vector<24x128xbf16>, vector<176x128xf32> -> vector<176x128xf32>
    %18 = arith.addf %13, %17 : vector<176x128xf32>
    %c0_19 = arith.constant 0 : index
    %c0_20 = arith.constant 0 : index
    %19 = vector.load %arg6[%c0_19, %c0_20] : memref<1x128xf32, #tpu.memory_space<vmem>>, vector<1x128xf32>
    %20 = vector.broadcast %19 : vector<1x128xf32> to vector<176x128xf32>
    %21 = arith.addf %18, %20 : vector<176x128xf32>
    %cst_21 = arith.constant 0.00999999977 : f32
    %22 = vector.broadcast %cst_21 : f32 to vector<176x128xf32>
    %23 = arith.mulf %22, %21 : vector<176x128xf32>
    %24 = arith.maximumf %21, %23 : vector<176x128xf32>
    %25 = arith.truncf %24 : vector<176x128xf32> to vector<176x128xbf16>
    %c0_22 = arith.constant 0 : index
    %c0_23 = arith.constant 0 : index
    %26 = vector.load %arg7[%c0_22, %c0_23] : memref<176x128xbf16, #tpu.memory_space<vmem>>, vector<176x128xbf16>
    tpu.vector_store %arg7[%c0_22, %c0_23], %25 {strides = array<i32>} : memref<176x128xbf16, #tpu.memory_space<vmem>>, vector<176x128xbf16>,
    return
  }
  func.func @transform_0(%arg0: i32) -> (i32, i32) {
    %c0_i32 = arith.constant 0 : i32
    %c0_i32_0 = arith.constant 0 : i32
    return %arg0, %c0_i32 : i32, i32
  }
  func.func @transform_1(%arg0: i32) -> (i32, i32) {
    %c0_i32 = arith.constant 0 : i32
    %c0_i32_0 = arith.constant 0 : i32
    return %arg0, %c0_i32 : i32, i32
  }
  func.func @transform_2(%arg0: i32) -> (i32, i32) {
    %c0_i32 = arith.constant 0 : i32
    %c0_i32_0 = arith.constant 0 : i32
    return %arg0, %c0_i32 : i32, i32
  }
  func.func @transform_3(%arg0: i32) -> (i32, i32) {
    %c0_i32 = arith.constant 0 : i32
    %c0_i32_0 = arith.constant 0 : i32
    return %arg0, %c0_i32 : i32, i32
  }
  func.func @transform_4(%arg0: i32) -> (i32, i32, i32) {
    %c0_i32 = arith.constant 0 : i32
    %c0_i32_0 = arith.constant 0 : i32
    %c0_i32_1 = arith.constant 0 : i32
    %c0_i32_2 = arith.constant 0 : i32
    return %c0_i32, %c0_i32_0, %c0_i32_1 : i32, i32, i32
  }
  func.func @transform_5(%arg0: i32) -> (i32, i32) {
    %c0_i32 = arith.constant 0 : i32
    %c0_i32_0 = arith.constant 0 : i32
    %c0_i32_1 = arith.constant 0 : i32
    return %c0_i32, %c0_i32_0 : i32, i32
  }
  func.func @transform_6(%arg0: i32) -> (i32, i32) {
    %c0_i32 = arith.constant 0 : i32
    %c0_i32_0 = arith.constant 0 : i32
    return %arg0, %c0_i32 : i32, i32
  }
}

module attributes {stable_mosaic.version = 11 : i64} {
  func.func @_deconv_tap_kernel(%arg0: i32, %arg1: memref<304x12xbf16, #tpu.memory_space<vmem>>, %arg2: memref<304x12xbf16, #tpu.memory_space<vmem>>, %arg3: memref<304x12xbf16, #tpu.memory_space<vmem>>, %arg4: memref<304x12xbf16, #tpu.memory_space<vmem>>, %arg5: memref<4x12x128xbf16, #tpu.memory_space<vmem>>, %arg6: memref<1x128xf32, #tpu.memory_space<vmem>>, %arg7: memref<304x128xf32, #tpu.memory_space<vmem>>) attributes {dimension_semantics = [#tpu.dimension_semantics<parallel>], iteration_bounds = array<i64: 2>, scalar_prefetch = 0 : i64, scratch_operands = 0 : i64, tpu.core_type = #tpu.core_type<tc>, window_params = [{transform_indices = @transform_0, window_bounds = array<i64: 304, 12>}, {transform_indices = @transform_1, window_bounds = array<i64: 304, 12>}, {transform_indices = @transform_2, window_bounds = array<i64: 304, 12>}, {transform_indices = @transform_3, window_bounds = array<i64: 304, 12>}, {pipeline_mode = #tpu.pipeline_mode<synchronous>, transform_indices = @transform_4, window_bounds = array<i64: 4, 12, 128>}, {pipeline_mode = #tpu.pipeline_mode<synchronous>, transform_indices = @transform_5, window_bounds = array<i64: 1, 128>}, {transform_indices = @transform_6, window_bounds = array<i64: 304, 128>}]} {
    %c0 = arith.constant 0 : index
    %c0_0 = arith.constant 0 : index
    %0 = vector.load %arg1[%c0, %c0_0] : memref<304x12xbf16, #tpu.memory_space<vmem>>, vector<304x12xbf16>
    %c0_1 = arith.constant 0 : index
    %c0_2 = arith.constant 0 : index
    %c0_3 = arith.constant 0 : index
    %1 = vector.load %arg5[%c0_1, %c0_2, %c0_3] : memref<4x12x128xbf16, #tpu.memory_space<vmem>>, vector<1x12x128xbf16>
    %2 = vector.shape_cast %1 : vector<1x12x128xbf16> to vector<12x128xbf16>
    %cst = arith.constant dense<0.000000e+00> : vector<304x128xf32>
    %3 = tpu.matmul %0, %2, %cst {dimension_numbers = #tpu.dot_dimension_numbers<[1], [0], [0], [1], [0, 0, 1, 1], [], []>} : vector<304x12xbf16>, vector<12x128xbf16>, vector<304x128xf32> -> vector<304x128xf32>
    %c0_4 = arith.constant 0 : index
    %c0_5 = arith.constant 0 : index
    %4 = vector.load %arg2[%c0_4, %c0_5] : memref<304x12xbf16, #tpu.memory_space<vmem>>, vector<304x12xbf16>
    %c1 = arith.constant 1 : index
    %c0_6 = arith.constant 0 : index
    %c0_7 = arith.constant 0 : index
    %5 = vector.load %arg5[%c1, %c0_6, %c0_7] : memref<4x12x128xbf16, #tpu.memory_space<vmem>>, vector<1x12x128xbf16>
    %6 = vector.shape_cast %5 : vector<1x12x128xbf16> to vector<12x128xbf16>
    %cst_8 = arith.constant dense<0.000000e+00> : vector<304x128xf32>
    %7 = tpu.matmul %4, %6, %cst_8 {dimension_numbers = #tpu.dot_dimension_numbers<[1], [0], [0], [1], [0, 0, 1, 1], [], []>} : vector<304x12xbf16>, vector<12x128xbf16>, vector<304x128xf32> -> vector<304x128xf32>
    %8 = arith.addf %3, %7 : vector<304x128xf32>
    %c0_9 = arith.constant 0 : index
    %c0_10 = arith.constant 0 : index
    %9 = vector.load %arg3[%c0_9, %c0_10] : memref<304x12xbf16, #tpu.memory_space<vmem>>, vector<304x12xbf16>
    %c2 = arith.constant 2 : index
    %c0_11 = arith.constant 0 : index
    %c0_12 = arith.constant 0 : index
    %10 = vector.load %arg5[%c2, %c0_11, %c0_12] : memref<4x12x128xbf16, #tpu.memory_space<vmem>>, vector<1x12x128xbf16>
    %11 = vector.shape_cast %10 : vector<1x12x128xbf16> to vector<12x128xbf16>
    %cst_13 = arith.constant dense<0.000000e+00> : vector<304x128xf32>
    %12 = tpu.matmul %9, %11, %cst_13 {dimension_numbers = #tpu.dot_dimension_numbers<[1], [0], [0], [1], [0, 0, 1, 1], [], []>} : vector<304x12xbf16>, vector<12x128xbf16>, vector<304x128xf32> -> vector<304x128xf32>
    %13 = arith.addf %8, %12 : vector<304x128xf32>
    %c0_14 = arith.constant 0 : index
    %c0_15 = arith.constant 0 : index
    %14 = vector.load %arg4[%c0_14, %c0_15] : memref<304x12xbf16, #tpu.memory_space<vmem>>, vector<304x12xbf16>
    %c3 = arith.constant 3 : index
    %c0_16 = arith.constant 0 : index
    %c0_17 = arith.constant 0 : index
    %15 = vector.load %arg5[%c3, %c0_16, %c0_17] : memref<4x12x128xbf16, #tpu.memory_space<vmem>>, vector<1x12x128xbf16>
    %16 = vector.shape_cast %15 : vector<1x12x128xbf16> to vector<12x128xbf16>
    %cst_18 = arith.constant dense<0.000000e+00> : vector<304x128xf32>
    %17 = tpu.matmul %14, %16, %cst_18 {dimension_numbers = #tpu.dot_dimension_numbers<[1], [0], [0], [1], [0, 0, 1, 1], [], []>} : vector<304x12xbf16>, vector<12x128xbf16>, vector<304x128xf32> -> vector<304x128xf32>
    %18 = arith.addf %13, %17 : vector<304x128xf32>
    %c0_19 = arith.constant 0 : index
    %c0_20 = arith.constant 0 : index
    %19 = vector.load %arg6[%c0_19, %c0_20] : memref<1x128xf32, #tpu.memory_space<vmem>>, vector<1x128xf32>
    %20 = vector.broadcast %19 : vector<1x128xf32> to vector<304x128xf32>
    %21 = arith.addf %18, %20 : vector<304x128xf32>
    %cst_21 = arith.constant 0.000000e+00 : f32
    %22 = vector.broadcast %cst_21 : f32 to vector<304x128xf32>
    %23 = arith.subf %22, %21 : vector<304x128xf32>
    %24 = math.exp %23 : vector<304x128xf32>
    %cst_22 = arith.constant 1.000000e+00 : f32
    %25 = vector.broadcast %cst_22 : f32 to vector<304x128xf32>
    %26 = arith.addf %25, %24 : vector<304x128xf32>
    %27 = tpu.reciprocal %26 {approx = true} : vector<304x128xf32> -> vector<304x128xf32>
    %c0_23 = arith.constant 0 : index
    %c0_24 = arith.constant 0 : index
    %28 = vector.load %arg7[%c0_23, %c0_24] : memref<304x128xf32, #tpu.memory_space<vmem>>, vector<304x128xf32>
    tpu.vector_store %arg7[%c0_23, %c0_24], %27 {strides = array<i32>} : memref<304x128xf32, #tpu.memory_space<vmem>>, vector<304x128xf32>,
    return
  }
  func.func @transform_0(%arg0: i32) -> (i32, i32) {
    %c0_i32 = arith.constant 0 : i32
    %c0_i32_0 = arith.constant 0 : i32
    return %arg0, %c0_i32 : i32, i32
  }
  func.func @transform_1(%arg0: i32) -> (i32, i32) {
    %c0_i32 = arith.constant 0 : i32
    %c0_i32_0 = arith.constant 0 : i32
    return %arg0, %c0_i32 : i32, i32
  }
  func.func @transform_2(%arg0: i32) -> (i32, i32) {
    %c0_i32 = arith.constant 0 : i32
    %c0_i32_0 = arith.constant 0 : i32
    return %arg0, %c0_i32 : i32, i32
  }
  func.func @transform_3(%arg0: i32) -> (i32, i32) {
    %c0_i32 = arith.constant 0 : i32
    %c0_i32_0 = arith.constant 0 : i32
    return %arg0, %c0_i32 : i32, i32
  }
  func.func @transform_4(%arg0: i32) -> (i32, i32, i32) {
    %c0_i32 = arith.constant 0 : i32
    %c0_i32_0 = arith.constant 0 : i32
    %c0_i32_1 = arith.constant 0 : i32
    %c0_i32_2 = arith.constant 0 : i32
    return %c0_i32, %c0_i32_0, %c0_i32_1 : i32, i32, i32
  }
  func.func @transform_5(%arg0: i32) -> (i32, i32) {
    %c0_i32 = arith.constant 0 : i32
    %c0_i32_0 = arith.constant 0 : i32
    %c0_i32_1 = arith.constant 0 : i32
    return %c0_i32, %c0_i32_0 : i32, i32
  }
  func.func @transform_6(%arg0: i32) -> (i32, i32) {
    %c0_i32 = arith.constant 0 : i32
    %c0_i32_0 = arith.constant 0 : i32
    return %arg0, %c0_i32 : i32, i32
  }
}

</mosaic_0001>

<llo_original>
// kernel: decoder_forward.4
$region0: #{decoder_forward.4}
  #allocation0 [shape = 'u32[]', space=smem, size = 0x4, offset = 0x4, fixed_abs, tag = 'smem constant byte address 0x4 - core index']
  #allocation1 [shape = 'u32[144,128]{1,0:T(1,128)}', space=vmem, size = 0x12000, scoped, tag = 'internal scratch']
  %s0 = inlined_call_operand.vmem [shape: bf16[16,512], index: 0, kind: input, shape index: {}]
  %s1 = inlined_call_operand.hbm [shape: bf16[512,768], index: 1, kind: input, shape index: {}]
  %s2 = inlined_call_operand.hbm [shape: f32[1,768], index: 2, kind: input, shape index: {}]
  %s3 = inlined_call_operand.vmem [shape: bf16[16,768], index: 3, kind: output, shape index: {}]
  %s4 = sld [smem:[#allocation0]]
  $region30: #{decoder_forward.4} parent=0
    _
  %s6 = ssub.s32 1, %s4
  %s7 = scalar_select 0, %s6, %s4
  $region1: #{decoder_forward.4} parent=0
    #allocation2 [shape = 'u8[786432]{0}', space=vmem, size = 0xc0000, scoped, tag = 'input window, operand 1, single buffered']
    #allocation3 [shape = 's32[1]{0}', space=sflag, size = 0x4, scoped, tag = 'scoped memory for decoder_forward.4']
    #allocation4 [shape = 'u8[3072]{0}', space=vmem, size = 0xc00, scoped, tag = 'input window, operand 2, single buffered']
    #allocation5 [shape = 's32[1]{0}', space=sflag, size = 0x4, scoped, tag = 'scoped memory for decoder_forward.4']
    %8 = vsyncpa [#allocation3], 0
    %9 = vsyncpa [#allocation5], 0
    // Predicated region
    $region2: #{decoder_forward.4} parent=1 // pred_check
      _
    $region3: #{decoder_forward.4} parent=1 // pred_check_branch
      %11 = sbr.rel (0) target = $region5
    $region4: #{decoder_forward.4} parent=1 // pred_region
      _
    $region5: #{decoder_forward.4} parent=1 // pred_fallthru
      _
    // Predicated region
    $region6: #{decoder_forward.4} parent=1 // pred_check
      _
    $region7: #{decoder_forward.4} parent=1 // pred_check_branch
      %13 = sbr.rel (0) target = $region9
    $region8: #{decoder_forward.4} parent=1 // pred_region
      %s15 = ssub.s32 24576, 24576
      %16 = vsyncadd [#allocation3], %s15
      %s17 = sshll.u32 [#allocation2], 4
      %s18 = int_to_ptr.vmem [resolvable:$true] %s17
      %23 = dma.hbm_to_vmem [thread:$0]  %s1, 24576, %s18, [#allocation3], 384, 384, 24
    $region9: #{decoder_forward.4} parent=1 // pred_fallthru
      _
    // Predicated region
    $region10: #{decoder_forward.4} parent=1 // pred_check
      _
    $region11: #{decoder_forward.4} parent=1 // pred_check_branch
      %25 = sbr.rel (0) target = $region13
    $region12: #{decoder_forward.4} parent=1 // pred_region
      %s27 = ssub.s32 96, 96
      %28 = vsyncadd [#allocation5], %s27
      %s30 = sshll.u32 [#allocation4], 4
      %s31 = int_to_ptr.vmem [resolvable:$true] %s30
      %33 = dma.hbm_to_vmem [thread:$0]  %s2, 96, %s31, [#allocation5]
    $region13: #{decoder_forward.4} parent=1 // pred_fallthru
      _
    // Predicated region
    $region14: #{decoder_forward.4} parent=1 // pred_check
      _
    $region15: #{decoder_forward.4} parent=1 // pred_check_branch
      %35 = sbr.rel (0) target = $region17
    $region16: #{decoder_forward.4} parent=1 // pred_region
      %36 = dma.done [#allocation3], 24576
    $region17: #{decoder_forward.4} parent=1 // pred_fallthru
      _
    // Predicated region
    $region18: #{decoder_forward.4} parent=1 // pred_check
      _
    $region19: #{decoder_forward.4} parent=1 // pred_check_branch
      %38 = sbr.rel (0) target = $region21
    $region20: #{decoder_forward.4} parent=1 // pred_region
      %39 = dma.done [#allocation5], 96
    $region21: #{decoder_forward.4} parent=1 // pred_fallthru
      _
    %v40 = vld [vmem:[%s0] sm:$0xff]
    %v41 = vld [vmem:[%s0 + $0x8] sm:$0xff]
    %v42 = vld [vmem:[%s0 + $0x10] sm:$0xff]
    %v43 = vld [vmem:[%s0 + $0x18] sm:$0xff]
    %v44 = vld [vmem:[#allocation2] sm:$0xff]
    %v45 = vld [vmem:[#allocation2 + $0x8] sm:$0xff]
    %v46 = vld [vmem:[#allocation2 + $0x10] sm:$0xff]
    %v47 = vld [vmem:[#allocation2 + $0x18] sm:$0xff]
    %v48 = vld [vmem:[#allocation2 + $0x20] sm:$0xff]
    %v49 = vld [vmem:[#allocation2 + $0x28] sm:$0xff]
    %v50 = vld [vmem:[#allocation2 + $0x30] sm:$0xff]
    %v51 = vld [vmem:[#allocation2 + $0x38] sm:$0xff]
    %v52 = vld [vmem:[#allocation2 + $0x40] sm:$0xff]
    %v53 = vld [vmem:[#allocation2 + $0x48] sm:$0xff]
    %v54 = vld [vmem:[#allocation2 + $0x50] sm:$0xff]
    %v55 = vld [vmem:[#allocation2 + $0x58] sm:$0xff]
    %v56 = vld [vmem:[#allocation2 + $0x60] sm:$0xff]
    %v57 = vld [vmem:[#allocation2 + $0x68] sm:$0xff]
    %v58 = vld [vmem:[#allocation2 + $0x70] sm:$0xff]
    %v59 = vld [vmem:[#allocation2 + $0x78] sm:$0xff]
    %v60 = vld [vmem:[#allocation2 + $0x80] sm:$0xff]
    %v61 = vld [vmem:[#allocation2 + $0x88] sm:$0xff]
    %v62 = vld [vmem:[#allocation2 + $0x90] sm:$0xff]
    %v63 = vld [vmem:[#allocation2 + $0x98] sm:$0xff]
    %v64 = vld [vmem:[#allocation2 + $0xa0] sm:$0xff]
    %v65 = vld [vmem:[#allocation2 + $0xa8] sm:$0xff]
    %v66 = vld [vmem:[#allocation2 + $0xb0] sm:$0xff]
    %v67 = vld [vmem:[#allocation2 + $0xb8] sm:$0xff]
    %v68 = vld [vmem:[#allocation2 + $0xc0] sm:$0xff]
    %v69 = vld [vmem:[#allocation2 + $0xc8] sm:$0xff]
    %v70 = vld [vmem:[#allocation2 + $0xd0] sm:$0xff]
    %v71 = vld [vmem:[#allocation2 + $0xd8] sm:$0xff]
    %v72 = vld [vmem:[#allocation2 + $0xe0] sm:$0xff]
    %v73 = vld [vmem:[#allocation2 + $0xe8] sm:$0xff]
    %v74 = vld [vmem:[#allocation2 + $0xf0] sm:$0xff]
    %v75 = vld [vmem:[#allocation2 + $0xf8] sm:$0xff]
    %v76 = vld [vmem:[#allocation2 + $0x100] sm:$0xff]
    %v77 = vld [vmem:[#allocation2 + $0x108] sm:$0xff]
    %v78 = vld [vmem:[#allocation2 + $0x110] sm:$0xff]
    %v79 = vld [vmem:[#allocation2 + $0x118] sm:$0xff]
    %v80 = vld [vmem:[#allocation2 + $0x120] sm:$0xff]
    %v81 = vld [vmem:[#allocation2 + $0x128] sm:$0xff]
    %v82 = vld [vmem:[#allocation2 + $0x130] sm:$0xff]
    %v83 = vld [vmem:[#allocation2 + $0x138] sm:$0xff]
    %v84 = vld [vmem:[#allocation2 + $0x140] sm:$0xff]
    %v85 = vld [vmem:[#allocation2 + $0x148] sm:$0xff]
    %v86 = vld [vmem:[#allocation2 + $0x150] sm:$0xff]
    %v87 = vld [vmem:[#allocation2 + $0x158] sm:$0xff]
    %v88 = vld [vmem:[#allocation2 + $0x160] sm:$0xff]
    %v89 = vld [vmem:[#allocation2 + $0x168] sm:$0xff]
    %v90 = vld [vmem:[#allocation2 + $0x170] sm:$0xff]
    %v91 = vld [vmem:[#allocation2 + $0x178] sm:$0xff]
    %v92 = vld [vmem:[#allocation2 + $0x180] sm:$0xff]
    %v93 = vld [vmem:[#allocation2 + $0x188] sm:$0xff]
    %v94 = vld [vmem:[#allocation2 + $0x190] sm:$0xff]
    %v95 = vld [vmem:[#allocation2 + $0x198] sm:$0xff]
    %v96 = vld [vmem:[#allocation2 + $0x1a0] sm:$0xff]
    %v97 = vld [vmem:[#allocation2 + $0x1a8] sm:$0xff]
    %v98 = vld [vmem:[#allocation2 + $0x1b0] sm:$0xff]
    %v99 = vld [vmem:[#allocation2 + $0x1b8] sm:$0xff]
    %v100 = vld [vmem:[#allocation2 + $0x1c0] sm:$0xff]
    %v101 = vld [vmem:[#allocation2 + $0x1c8] sm:$0xff]
    %v102 = vld [vmem:[#allocation2 + $0x1d0] sm:$0xff]
    %v103 = vld [vmem:[#allocation2 + $0x1d8] sm:$0xff]
    %v104 = vld [vmem:[#allocation2 + $0x1e0] sm:$0xff]
    %v105 = vld [vmem:[#allocation2 + $0x1e8] sm:$0xff]
    %v106 = vld [vmem:[#allocation2 + $0x1f0] sm:$0xff]
    %v107 = vld [vmem:[#allocation2 + $0x1f8] sm:$0xff]
    %v108 = vld [vmem:[#allocation2 + $0x200] sm:$0xff]
    %v109 = vld [vmem:[#allocation2 + $0x208] sm:$0xff]
    %v110 = vld [vmem:[#allocation2 + $0x210] sm:$0xff]
    %v111 = vld [vmem:[#allocation2 + $0x218] sm:$0xff]
    %v112 = vld [vmem:[#allocation2 + $0x220] sm:$0xff]
    %v113 = vld [vmem:[#allocation2 + $0x228] sm:$0xff]
    %v114 = vld [vmem:[#allocation2 + $0x230] sm:$0xff]
    %v115 = vld [vmem:[#allocation2 + $0x238] sm:$0xff]
    %v116 = vld [vmem:[#allocation2 + $0x240] sm:$0xff]
    %v117 = vld [vmem:[#allocation2 + $0x248] sm:$0xff]
    %v118 = vld [vmem:[#allocation2 + $0x250] sm:$0xff]
    %v119 = vld [vmem:[#allocation2 + $0x258] sm:$0xff]
    %v120 = vld [vmem:[#allocation2 + $0x260] sm:$0xff]
    %v121 = vld [vmem:[#allocation2 + $0x268] sm:$0xff]
    %v122 = vld [vmem:[#allocation2 + $0x270] sm:$0xff]
    %v123 = vld [vmem:[#allocation2 + $0x278] sm:$0xff]
    %v124 = vld [vmem:[#allocation2 + $0x280] sm:$0xff]
    %v125 = vld [vmem:[#allocation2 + $0x288] sm:$0xff]
    %v126 = vld [vmem:[#allocation2 + $0x290] sm:$0xff]
    %v127 = vld [vmem:[#allocation2 + $0x298] sm:$0xff]
    %v128 = vld [vmem:[#allocation2 + $0x2a0] sm:$0xff]
    %v129 = vld [vmem:[#allocation2 + $0x2a8] sm:$0xff]
    %v130 = vld [vmem:[#allocation2 + $0x2b0] sm:$0xff]
    %v131 = vld [vmem:[#allocation2 + $0x2b8] sm:$0xff]
    %v132 = vld [vmem:[#allocation2 + $0x2c0] sm:$0xff]
    %v133 = vld [vmem:[#allocation2 + $0x2c8] sm:$0xff]
    %v134 = vld [vmem:[#allocation2 + $0x2d0] sm:$0xff]
    %v135 = vld [vmem:[#allocation2 + $0x2d8] sm:$0xff]
    %v136 = vld [vmem:[#allocation2 + $0x2e0] sm:$0xff]
    %v137 = vld [vmem:[#allocation2 + $0x2e8] sm:$0xff]
    %v138 = vld [vmem:[#allocation2 + $0x2f0] sm:$0xff]
    %v139 = vld [vmem:[#allocation2 + $0x2f8] sm:$0xff]
    %v140 = vld [vmem:[#allocation2 + $0x300] sm:$0xff]
    %v141 = vld [vmem:[#allocation2 + $0x308] sm:$0xff]
    %v142 = vld [vmem:[#allocation2 + $0x310] sm:$0xff]
    %v143 = vld [vmem:[#allocation2 + $0x318] sm:$0xff]
    %v144 = vld [vmem:[#allocation2 + $0x320] sm:$0xff]
    %v145 = vld [vmem:[#allocation2 + $0x328] sm:$0xff]
    %v146 = vld [vmem:[#allocation2 + $0x330] sm:$0xff]
    %v147 = vld [vmem:[#allocation2 + $0x338] sm:$0xff]
    %v148 = vld [vmem:[#allocation2 + $0x340] sm:$0xff]
    %v149 = vld [vmem:[#allocation2 + $0x348] sm:$0xff]
    %v150 = vld [vmem:[#allocation2 + $0x350] sm:$0xff]
    %v151 = vld [vmem:[#allocation2 + $0x358] sm:$0xff]
    %v152 = vld [vmem:[#allocation2 + $0x360] sm:$0xff]
    %v153 = vld [vmem:[#allocation2 + $0x368] sm:$0xff]
    %v154 = vld [vmem:[#allocation2 + $0x370] sm:$0xff]
    %v155 = vld [vmem:[#allocation2 + $0x378] sm:$0xff]
    %v156 = vld [vmem:[#allocation2 + $0x380] sm:$0xff]
    %v157 = vld [vmem:[#allocation2 + $0x388] sm:$0xff]
    %v158 = vld [vmem:[#allocation2 + $0x390] sm:$0xff]
    %v159 = vld [vmem:[#allocation2 + $0x398] sm:$0xff]
    %v160 = vld [vmem:[#allocation2 + $0x3a0] sm:$0xff]
    %v161 = vld [vmem:[#allocation2 + $0x3a8] sm:$0xff]
    %v162 = vld [vmem:[#allocation2 + $0x3b0] sm:$0xff]
    %v163 = vld [vmem:[#allocation2 + $0x3b8] sm:$0xff]
    %v164 = vld [vmem:[#allocation2 + $0x3c0] sm:$0xff]
    %v165 = vld [vmem:[#allocation2 + $0x3c8] sm:$0xff]
    %v166 = vld [vmem:[#allocation2 + $0x3d0] sm:$0xff]
    %v167 = vld [vmem:[#allocation2 + $0x3d8] sm:$0xff]
    %v168 = vld [vmem:[#allocation2 + $0x3e0] sm:$0xff]
    %v169 = vld [vmem:[#allocation2 + $0x3e8] sm:$0xff]
    %v170 = vld [vmem:[#allocation2 + $0x3f0] sm:$0xff]
    %v171 = vld [vmem:[#allocation2 + $0x3f8] sm:$0xff]
    %v172 = vld [vmem:[#allocation2 + $0x400] sm:$0xff]
    %v173 = vld [vmem:[#allocation2 + $0x408] sm:$0xff]
    %v174 = vld [vmem:[#allocation2 + $0x410] sm:$0xff]
    %v175 = vld [vmem:[#allocation2 + $0x418] sm:$0xff]
    %v176 = vld [vmem:[#allocation2 + $0x420] sm:$0xff]
    %v177 = vld [vmem:[#allocation2 + $0x428] sm:$0xff]
    %v178 = vld [vmem:[#allocation2 + $0x430] sm:$0xff]
    %v179 = vld [vmem:[#allocation2 + $0x438] sm:$0xff]
    %v180 = vld [vmem:[#allocation2 + $0x440] sm:$0xff]
    %v181 = vld [vmem:[#allocation2 + $0x448] sm:$0xff]
    %v182 = vld [vmem:[#allocation2 + $0x450] sm:$0xff]
    %v183 = vld [vmem:[#allocation2 + $0x458] sm:$0xff]
    %v184 = vld [vmem:[#allocation2 + $0x460] sm:$0xff]
    %v185 = vld [vmem:[#allocation2 + $0x468] sm:$0xff]
    %v186 = vld [vmem:[#allocation2 + $0x470] sm:$0xff]
    %v187 = vld [vmem:[#allocation2 + $0x478] sm:$0xff]
    %v188 = vld [vmem:[#allocation2 + $0x480] sm:$0xff]
    %v189 = vld [vmem:[#allocation2 + $0x488] sm:$0xff]
    %v190 = vld [vmem:[#allocation2 + $0x490] sm:$0xff]
    %v191 = vld [vmem:[#allocation2 + $0x498] sm:$0xff]
    %v192 = vld [vmem:[#allocation2 + $0x4a0] sm:$0xff]
    %v193 = vld [vmem:[#allocation2 + $0x4a8] sm:$0xff]
    %v194 = vld [vmem:[#allocation2 + $0x4b0] sm:$0xff]
    %v195 = vld [vmem:[#allocation2 + $0x4b8] sm:$0xff]
    %v196 = vld [vmem:[#allocation2 + $0x4c0] sm:$0xff]
    %v197 = vld [vmem:[#allocation2 + $0x4c8] sm:$0xff]
    %v198 = vld [vmem:[#allocation2 + $0x4d0] sm:$0xff]
    %v199 = vld [vmem:[#allocation2 + $0x4d8] sm:$0xff]
    %v200 = vld [vmem:[#allocation2 + $0x4e0] sm:$0xff]
    %v201 = vld [vmem:[#allocation2 + $0x4e8] sm:$0xff]
    %v202 = vld [vmem:[#allocation2 + $0x4f0] sm:$0xff]
    %v203 = vld [vmem:[#allocation2 + $0x4f8] sm:$0xff]
    %v204 = vld [vmem:[#allocation2 + $0x500] sm:$0xff]
    %v205 = vld [vmem:[#allocation2 + $0x508] sm:$0xff]
    %v206 = vld [vmem:[#allocation2 + $0x510] sm:$0xff]
    %v207 = vld [vmem:[#allocation2 + $0x518] sm:$0xff]
    %v208 = vld [vmem:[#allocation2 + $0x520] sm:$0xff]
    %v209 = vld [vmem:[#allocation2 + $0x528] sm:$0xff]
    %v210 = vld [vmem:[#allocation2 + $0x530] sm:$0xff]
    %v211 = vld [vmem:[#allocation2 + $0x538] sm:$0xff]
    %v212 = vld [vmem:[#allocation2 + $0x540] sm:$0xff]
    %v213 = vld [vmem:[#allocation2 + $0x548] sm:$0xff]
    %v214 = vld [vmem:[#allocation2 + $0x550] sm:$0xff]
    %v215 = vld [vmem:[#allocation2 + $0x558] sm:$0xff]
    %v216 = vld [vmem:[#allocation2 + $0x560] sm:$0xff]
    %v217 = vld [vmem:[#allocation2 + $0x568] sm:$0xff]
    %v218 = vld [vmem:[#allocation2 + $0x570] sm:$0xff]
    %v219 = vld [vmem:[#allocation2 + $0x578] sm:$0xff]
    %v220 = vld [vmem:[#allocation2 + $0x580] sm:$0xff]
    %v221 = vld [vmem:[#allocation2 + $0x588] sm:$0xff]
    %v222 = vld [vmem:[#allocation2 + $0x590] sm:$0xff]
    %v223 = vld [vmem:[#allocation2 + $0x598] sm:$0xff]
    %v224 = vld [vmem:[#allocation2 + $0x5a0] sm:$0xff]
    %v225 = vld [vmem:[#allocation2 + $0x5a8] sm:$0xff]
    %v226 = vld [vmem:[#allocation2 + $0x5b0] sm:$0xff]
    %v227 = vld [vmem:[#allocation2 + $0x5b8] sm:$0xff]
    %v228 = vld [vmem:[#allocation2 + $0x5c0] sm:$0xff]
    %v229 = vld [vmem:[#allocation2 + $0x5c8] sm:$0xff]
    %v230 = vld [vmem:[#allocation2 + $0x5d0] sm:$0xff]
    %v231 = vld [vmem:[#allocation2 + $0x5d8] sm:$0xff]
    %v232 = vld [vmem:[#allocation2 + $0x5e0] sm:$0xff]
    %v233 = vld [vmem:[#allocation2 + $0x5e8] sm:$0xff]
    %v234 = vld [vmem:[#allocation2 + $0x5f0] sm:$0xff]
    %v235 = vld [vmem:[#allocation2 + $0x5f8] sm:$0xff]
    %v236 = vld [vmem:[#allocation4] sm:$0x3f]
    %v238 = vlaneseq
    %v239 = vshrl.u32 %v238, 7
    %v240 = vsub.s32 0, %v239
    %v241 = vrot.slane %v236, %v240
    %v242 = vlaneseq
    %v243 = vshrl.u32 %v242, 7
    %v244 = vsub.s32 1, %v243
    %v245 = vrot.slane %v236, %v244
    %v246 = vlaneseq
    %v247 = vshrl.u32 %v246, 7
    %v248 = vsub.s32 2, %v247
    %v249 = vrot.slane %v236, %v248
    %v250 = vlaneseq
    %v251 = vshrl.u32 %v250, 7
    %v252 = vsub.s32 3, %v251
    %v253 = vrot.slane %v236, %v252
    %v254 = vlaneseq
    %v255 = vshrl.u32 %v254, 7
    %v256 = vsub.s32 4, %v255
    %v257 = vrot.slane %v236, %v256
    %v258 = vlaneseq
    %v259 = vshrl.u32 %v258, 7
    %v260 = vsub.s32 5, %v259
    %v261 = vrot.slane %v236, %v260
    %v272 = vunpack.c.l.b16 %v40
    %v273 = vunpack.c.h.b16 %v40
    %v274 = vunpack.c.l.b16 %v41
    %v275 = vunpack.c.h.b16 %v41
    %v276 = vunpack.c.l.b16 %v42
    %v277 = vunpack.c.h.b16 %v42
    %v278 = vunpack.c.l.b16 %v43
    %v279 = vunpack.c.h.b16 %v43
    %v280 = vpack.c.b16 %v276, %v272
    %v281 = vpack.c.b16 %v277, %v273
    %v282 = vpack.c.b16 %v278, %v274
    %v283 = vpack.c.b16 %v279, %v275
    %v480 = vunpack.c.l.b16 %v44
    %v481 = vunpack.c.h.b16 %v44
    %v482 = vunpack.c.l.b16 %v45
    %v483 = vunpack.c.h.b16 %v45
    %v484 = vunpack.c.l.b16 %v46
    %v485 = vunpack.c.h.b16 %v46
    %v486 = vunpack.c.l.b16 %v47
    %v487 = vunpack.c.h.b16 %v47
    %v488 = vunpack.c.l.b16 %v48
    %v489 = vunpack.c.h.b16 %v48
    %v490 = vunpack.c.l.b16 %v49
    %v491 = vunpack.c.h.b16 %v49
    %v492 = vunpack.c.l.b16 %v50
    %v493 = vunpack.c.h.b16 %v50
    %v494 = vunpack.c.l.b16 %v51
    %v495 = vunpack.c.h.b16 %v51
    %v496 = vunpack.c.l.b16 %v52
    %v497 = vunpack.c.h.b16 %v52
    %v498 = vunpack.c.l.b16 %v53
    %v499 = vunpack.c.h.b16 %v53
    %v500 = vunpack.c.l.b16 %v54
    %v501 = vunpack.c.h.b16 %v54
    %v502 = vunpack.c.l.b16 %v55
    %v503 = vunpack.c.h.b16 %v55
    %v504 = vunpack.c.l.b16 %v56
    %v505 = vunpack.c.h.b16 %v56
    %v506 = vunpack.c.l.b16 %v57
    %v507 = vunpack.c.h.b16 %v57
    %v508 = vunpack.c.l.b16 %v58
    %v509 = vunpack.c.h.b16 %v58
    %v510 = vunpack.c.l.b16 %v59
    %v511 = vunpack.c.h.b16 %v59
    %v512 = vunpack.c.l.b16 %v60
    %v513 = vunpack.c.h.b16 %v60
    %v514 = vunpack.c.l.b16 %v61
    %v515 = vunpack.c.h.b16 %v61
    %v516 = vunpack.c.l.b16 %v62
    %v517 = vunpack.c.h.b16 %v62
    %v518 = vunpack.c.l.b16 %v63
    %v519 = vunpack.c.h.b16 %v63
    %v520 = vunpack.c.l.b16 %v64
    %v521 = vunpack.c.h.b16 %v64
    %v522 = vunpack.c.l.b16 %v65
    %v523 = vunpack.c.h.b16 %v65
    %v524 = vunpack.c.l.b16 %v66
    %v525 = vunpack.c.h.b16 %v66
    %v526 = vunpack.c.l.b16 %v67
    %v527 = vunpack.c.h.b16 %v67
    %v528 = vunpack.c.l.b16 %v68
    %v529 = vunpack.c.h.b16 %v68
    %v530 = vunpack.c.l.b16 %v69
    %v531 = vunpack.c.h.b16 %v69
    %v532 = vunpack.c.l.b16 %v70
    %v533 = vunpack.c.h.b16 %v70
    %v534 = vunpack.c.l.b16 %v71
    %v535 = vunpack.c.h.b16 %v71
    %v536 = vunpack.c.l.b16 %v72
    %v537 = vunpack.c.h.b16 %v72
    %v538 = vunpack.c.l.b16 %v73
    %v539 = vunpack.c.h.b16 %v73
    %v540 = vunpack.c.l.b16 %v74
    %v541 = vunpack.c.h.b16 %v74
    %v542 = vunpack.c.l.b16 %v75
    %v543 = vunpack.c.h.b16 %v75
    %v544 = vunpack.c.l.b16 %v76
    %v545 = vunpack.c.h.b16 %v76
    %v546 = vunpack.c.l.b16 %v77
    %v547 = vunpack.c.h.b16 %v77
    %v548 = vunpack.c.l.b16 %v78
    %v549 = vunpack.c.h.b16 %v78
    %v550 = vunpack.c.l.b16 %v79
    %v551 = vunpack.c.h.b16 %v79
    %v552 = vunpack.c.l.b16 %v80
    %v553 = vunpack.c.h.b16 %v80
    %v554 = vunpack.c.l.b16 %v81
    %v555 = vunpack.c.h.b16 %v81
    %v556 = vunpack.c.l.b16 %v82
    %v557 = vunpack.c.h.b16 %v82
    %v558 = vunpack.c.l.b16 %v83
    %v559 = vunpack.c.h.b16 %v83
    %v560 = vunpack.c.l.b16 %v84
    %v561 = vunpack.c.h.b16 %v84
    %v562 = vunpack.c.l.b16 %v85
    %v563 = vunpack.c.h.b16 %v85
    %v564 = vunpack.c.l.b16 %v86
    %v565 = vunpack.c.h.b16 %v86
    %v566 = vunpack.c.l.b16 %v87
    %v567 = vunpack.c.h.b16 %v87
    %v568 = vunpack.c.l.b16 %v88
    %v569 = vunpack.c.h.b16 %v88
    %v570 = vunpack.c.l.b16 %v89
    %v571 = vunpack.c.h.b16 %v89
    %v572 = vunpack.c.l.b16 %v90
    %v573 = vunpack.c.h.b16 %v90
    %v574 = vunpack.c.l.b16 %v91
    %v575 = vunpack.c.h.b16 %v91
    %v576 = vunpack.c.l.b16 %v92
    %v577 = vunpack.c.h.b16 %v92
    %v578 = vunpack.c.l.b16 %v93
    %v579 = vunpack.c.h.b16 %v93
    %v580 = vunpack.c.l.b16 %v94
    %v581 = vunpack.c.h.b16 %v94
    %v582 = vunpack.c.l.b16 %v95
    %v583 = vunpack.c.h.b16 %v95
    %v584 = vunpack.c.l.b16 %v96
    %v585 = vunpack.c.h.b16 %v96
    %v586 = vunpack.c.l.b16 %v97
    %v587 = vunpack.c.h.b16 %v97
    %v588 = vunpack.c.l.b16 %v98
    %v589 = vunpack.c.h.b16 %v98
    %v590 = vunpack.c.l.b16 %v99
    %v591 = vunpack.c.h.b16 %v99
    %v592 = vunpack.c.l.b16 %v100
    %v593 = vunpack.c.h.b16 %v100
    %v594 = vunpack.c.l.b16 %v101
    %v595 = vunpack.c.h.b16 %v101
    %v596 = vunpack.c.l.b16 %v102
    %v597 = vunpack.c.h.b16 %v102
    %v598 = vunpack.c.l.b16 %v103
    %v599 = vunpack.c.h.b16 %v103
    %v600 = vunpack.c.l.b16 %v104
    %v601 = vunpack.c.h.b16 %v104
    %v602 = vunpack.c.l.b16 %v105
    %v603 = vunpack.c.h.b16 %v105
    %v604 = vunpack.c.l.b16 %v106
    %v605 = vunpack.c.h.b16 %v106
    %v606 = vunpack.c.l.b16 %v107
    %v607 = vunpack.c.h.b16 %v107
    %v608 = vunpack.c.l.b16 %v108
    %v609 = vunpack.c.h.b16 %v108
    %v610 = vunpack.c.l.b16 %v109
    %v611 = vunpack.c.h.b16 %v109
    %v612 = vunpack.c.l.b16 %v110
    %v613 = vunpack.c.h.b16 %v110
    %v614 = vunpack.c.l.b16 %v111
    %v615 = vunpack.c.h.b16 %v111
    %v616 = vunpack.c.l.b16 %v112
    %v617 = vunpack.c.h.b16 %v112
    %v618 = vunpack.c.l.b16 %v113
    %v619 = vunpack.c.h.b16 %v113
    %v620 = vunpack.c.l.b16 %v114
    %v621 = vunpack.c.h.b16 %v114
    %v622 = vunpack.c.l.b16 %v115
    %v623 = vunpack.c.h.b16 %v115
    %v624 = vunpack.c.l.b16 %v116
    %v625 = vunpack.c.h.b16 %v116
    %v626 = vunpack.c.l.b16 %v117
    %v627 = vunpack.c.h.b16 %v117
    %v628 = vunpack.c.l.b16 %v118
    %v629 = vunpack.c.h.b16 %v118
    %v630 = vunpack.c.l.b16 %v119
    %v631 = vunpack.c.h.b16 %v119
    %v632 = vunpack.c.l.b16 %v120
    %v633 = vunpack.c.h.b16 %v120
    %v634 = vunpack.c.l.b16 %v121
    %v635 = vunpack.c.h.b16 %v121
    %v636 = vunpack.c.l.b16 %v122
    %v637 = vunpack.c.h.b16 %v122
    %v638 = vunpack.c.l.b16 %v123
    %v639 = vunpack.c.h.b16 %v123
    %v640 = vunpack.c.l.b16 %v124
    %v641 = vunpack.c.h.b16 %v124
    %v642 = vunpack.c.l.b16 %v125
    %v643 = vunpack.c.h.b16 %v125
    %v644 = vunpack.c.l.b16 %v126
    %v645 = vunpack.c.h.b16 %v126
    %v646 = vunpack.c.l.b16 %v127
    %v647 = vunpack.c.h.b16 %v127
    %v648 = vunpack.c.l.b16 %v128
    %v649 = vunpack.c.h.b16 %v128
    %v650 = vunpack.c.l.b16 %v129
    %v651 = vunpack.c.h.b16 %v129
    %v652 = vunpack.c.l.b16 %v130
    %v653 = vunpack.c.h.b16 %v130
    %v654 = vunpack.c.l.b16 %v131
    %v655 = vunpack.c.h.b16 %v131
    %v656 = vunpack.c.l.b16 %v132
    %v657 = vunpack.c.h.b16 %v132
    %v658 = vunpack.c.l.b16 %v133
    %v659 = vunpack.c.h.b16 %v133
    %v660 = vunpack.c.l.b16 %v134
    %v661 = vunpack.c.h.b16 %v134
    %v662 = vunpack.c.l.b16 %v135
    %v663 = vunpack.c.h.b16 %v135
    %v664 = vunpack.c.l.b16 %v136
    %v665 = vunpack.c.h.b16 %v136
    %v666 = vunpack.c.l.b16 %v137
    %v667 = vunpack.c.h.b16 %v137
    %v668 = vunpack.c.l.b16 %v138
    %v669 = vunpack.c.h.b16 %v138
    %v670 = vunpack.c.l.b16 %v139
    %v671 = vunpack.c.h.b16 %v139
    %v672 = vunpack.c.l.b16 %v140
    %v673 = vunpack.c.h.b16 %v140
    %v674 = vunpack.c.l.b16 %v141
    %v675 = vunpack.c.h.b16 %v141
    %v676 = vunpack.c.l.b16 %v142
    %v677 = vunpack.c.h.b16 %v142
    %v678 = vunpack.c.l.b16 %v143
    %v679 = vunpack.c.h.b16 %v143
    %v680 = vunpack.c.l.b16 %v144
    %v681 = vunpack.c.h.b16 %v144
    %v682 = vunpack.c.l.b16 %v145
    %v683 = vunpack.c.h.b16 %v145
    %v684 = vunpack.c.l.b16 %v146
    %v685 = vunpack.c.h.b16 %v146
    %v686 = vunpack.c.l.b16 %v147
    %v687 = vunpack.c.h.b16 %v147
    %v688 = vunpack.c.l.b16 %v148
    %v689 = vunpack.c.h.b16 %v148
    %v690 = vunpack.c.l.b16 %v149
    %v691 = vunpack.c.h.b16 %v149
    %v692 = vunpack.c.l.b16 %v150
    %v693 = vunpack.c.h.b16 %v150
    %v694 = vunpack.c.l.b16 %v151
    %v695 = vunpack.c.h.b16 %v151
    %v696 = vunpack.c.l.b16 %v152
    %v697 = vunpack.c.h.b16 %v152
    %v698 = vunpack.c.l.b16 %v153
    %v699 = vunpack.c.h.b16 %v153
    %v700 = vunpack.c.l.b16 %v154
    %v701 = vunpack.c.h.b16 %v154
    %v702 = vunpack.c.l.b16 %v155
    %v703 = vunpack.c.h.b16 %v155
    %v704 = vunpack.c.l.b16 %v156
    %v705 = vunpack.c.h.b16 %v156
    %v706 = vunpack.c.l.b16 %v157
    %v707 = vunpack.c.h.b16 %v157
    %v708 = vunpack.c.l.b16 %v158
    %v709 = vunpack.c.h.b16 %v158
    %v710 = vunpack.c.l.b16 %v159
    %v711 = vunpack.c.h.b16 %v159
    %v712 = vunpack.c.l.b16 %v160
    %v713 = vunpack.c.h.b16 %v160
    %v714 = vunpack.c.l.b16 %v161
    %v715 = vunpack.c.h.b16 %v161
    %v716 = vunpack.c.l.b16 %v162
    %v717 = vunpack.c.h.b16 %v162
    %v718 = vunpack.c.l.b16 %v163
    %v719 = vunpack.c.h.b16 %v163
    %v720 = vunpack.c.l.b16 %v164
    %v721 = vunpack.c.h.b16 %v164
    %v722 = vunpack.c.l.b16 %v165
    %v723 = vunpack.c.h.b16 %v165
    %v724 = vunpack.c.l.b16 %v166
    %v725 = vunpack.c.h.b16 %v166
    %v726 = vunpack.c.l.b16 %v167
    %v727 = vunpack.c.h.b16 %v167
    %v728 = vunpack.c.l.b16 %v168
    %v729 = vunpack.c.h.b16 %v168
    %v730 = vunpack.c.l.b16 %v169
    %v731 = vunpack.c.h.b16 %v169
    %v732 = vunpack.c.l.b16 %v170
    %v733 = vunpack.c.h.b16 %v170
    %v734 = vunpack.c.l.b16 %v171
    %v735 = vunpack.c.h.b16 %v171
    %v736 = vunpack.c.l.b16 %v172
    %v737 = vunpack.c.h.b16 %v172
    %v738 = vunpack.c.l.b16 %v173
    %v739 = vunpack.c.h.b16 %v173
    %v740 = vunpack.c.l.b16 %v174
    %v741 = vunpack.c.h.b16 %v174
    %v742 = vunpack.c.l.b16 %v175
    %v743 = vunpack.c.h.b16 %v175
    %v744 = vunpack.c.l.b16 %v176
    %v745 = vunpack.c.h.b16 %v176
    %v746 = vunpack.c.l.b16 %v177
    %v747 = vunpack.c.h.b16 %v177
    %v748 = vunpack.c.l.b16 %v178
    %v749 = vunpack.c.h.b16 %v178
    %v750 = vunpack.c.l.b16 %v179
    %v751 = vunpack.c.h.b16 %v179
    %v752 = vunpack.c.l.b16 %v180
    %v753 = vunpack.c.h.b16 %v180
    %v754 = vunpack.c.l.b16 %v181
    %v755 = vunpack.c.h.b16 %v181
    %v756 = vunpack.c.l.b16 %v182
    %v757 = vunpack.c.h.b16 %v182
    %v758 = vunpack.c.l.b16 %v183
    %v759 = vunpack.c.h.b16 %v183
    %v760 = vunpack.c.l.b16 %v184
    %v761 = vunpack.c.h.b16 %v184
    %v762 = vunpack.c.l.b16 %v185
    %v763 = vunpack.c.h.b16 %v185
    %v764 = vunpack.c.l.b16 %v186
    %v765 = vunpack.c.h.b16 %v186
    %v766 = vunpack.c.l.b16 %v187
    %v767 = vunpack.c.h.b16 %v187
    %v768 = vunpack.c.l.b16 %v188
    %v769 = vunpack.c.h.b16 %v188
    %v770 = vunpack.c.l.b16 %v189
    %v771 = vunpack.c.h.b16 %v189
    %v772 = vunpack.c.l.b16 %v190
    %v773 = vunpack.c.h.b16 %v190
    %v774 = vunpack.c.l.b16 %v191
    %v775 = vunpack.c.h.b16 %v191
    %v776 = vunpack.c.l.b16 %v192
    %v777 = vunpack.c.h.b16 %v192
    %v778 = vunpack.c.l.b16 %v193
    %v779 = vunpack.c.h.b16 %v193
    %v780 = vunpack.c.l.b16 %v194
    %v781 = vunpack.c.h.b16 %v194
    %v782 = vunpack.c.l.b16 %v195
    %v783 = vunpack.c.h.b16 %v195
    %v784 = vunpack.c.l.b16 %v196
    %v785 = vunpack.c.h.b16 %v196
    %v786 = vunpack.c.l.b16 %v197
    %v787 = vunpack.c.h.b16 %v197
    %v788 = vunpack.c.l.b16 %v198
    %v789 = vunpack.c.h.b16 %v198
    %v790 = vunpack.c.l.b16 %v199
    %v791 = vunpack.c.h.b16 %v199
    %v792 = vunpack.c.l.b16 %v200
    %v793 = vunpack.c.h.b16 %v200
    %v794 = vunpack.c.l.b16 %v201
    %v795 = vunpack.c.h.b16 %v201
    %v796 = vunpack.c.l.b16 %v202
    %v797 = vunpack.c.h.b16 %v202
    %v798 = vunpack.c.l.b16 %v203
    %v799 = vunpack.c.h.b16 %v203
    %v800 = vunpack.c.l.b16 %v204
    %v801 = vunpack.c.h.b16 %v204
    %v802 = vunpack.c.l.b16 %v205
    %v803 = vunpack.c.h.b16 %v205
    %v804 = vunpack.c.l.b16 %v206
    %v805 = vunpack.c.h.b16 %v206
    %v806 = vunpack.c.l.b16 %v207
    %v807 = vunpack.c.h.b16 %v207
    %v808 = vunpack.c.l.b16 %v208
    %v809 = vunpack.c.h.b16 %v208
    %v810 = vunpack.c.l.b16 %v209
    %v811 = vunpack.c.h.b16 %v209
    %v812 = vunpack.c.l.b16 %v210
    %v813 = vunpack.c.h.b16 %v210
    %v814 = vunpack.c.l.b16 %v211
    %v815 = vunpack.c.h.b16 %v211
    %v816 = vunpack.c.l.b16 %v212
    %v817 = vunpack.c.h.b16 %v212
    %v818 = vunpack.c.l.b16 %v213
    %v819 = vunpack.c.h.b16 %v213
    %v820 = vunpack.c.l.b16 %v214
    %v821 = vunpack.c.h.b16 %v214
    %v822 = vunpack.c.l.b16 %v215
    %v823 = vunpack.c.h.b16 %v215
    %v824 = vunpack.c.l.b16 %v216
    %v825 = vunpack.c.h.b16 %v216
    %v826 = vunpack.c.l.b16 %v217
    %v827 = vunpack.c.h.b16 %v217
    %v828 = vunpack.c.l.b16 %v218
    %v829 = vunpack.c.h.b16 %v218
    %v830 = vunpack.c.l.b16 %v219
    %v831 = vunpack.c.h.b16 %v219
    %v832 = vunpack.c.l.b16 %v220
    %v833 = vunpack.c.h.b16 %v220
    %v834 = vunpack.c.l.b16 %v221
    %v835 = vunpack.c.h.b16 %v221
    %v836 = vunpack.c.l.b16 %v222
    %v837 = vunpack.c.h.b16 %v222
    %v838 = vunpack.c.l.b16 %v223
    %v839 = vunpack.c.h.b16 %v223
    %v840 = vunpack.c.l.b16 %v224
    %v841 = vunpack.c.h.b16 %v224
    %v842 = vunpack.c.l.b16 %v225
    %v843 = vunpack.c.h.b16 %v225
    %v844 = vunpack.c.l.b16 %v226
    %v845 = vunpack.c.h.b16 %v226
    %v846 = vunpack.c.l.b16 %v227
    %v847 = vunpack.c.h.b16 %v227
    %v848 = vunpack.c.l.b16 %v228
    %v849 = vunpack.c.h.b16 %v228
    %v850 = vunpack.c.l.b16 %v229
    %v851 = vunpack.c.h.b16 %v229
    %v852 = vunpack.c.l.b16 %v230
    %v853 = vunpack.c.h.b16 %v230
    %v854 = vunpack.c.l.b16 %v231
    %v855 = vunpack.c.h.b16 %v231
    %v856 = vunpack.c.l.b16 %v232
    %v857 = vunpack.c.h.b16 %v232
    %v858 = vunpack.c.l.b16 %v233
    %v859 = vunpack.c.h.b16 %v233
    %v860 = vunpack.c.l.b16 %v234
    %v861 = vunpack.c.h.b16 %v234
    %v862 = vunpack.c.l.b16 %v235
    %v863 = vunpack.c.h.b16 %v235
    %v864 = vpack.c.b16 %v486, %v480
    %v865 = vpack.c.b16 %v487, %v481
    %v866 = vpack.c.b16 %v488, %v482
    %v867 = vpack.c.b16 %v489, %v483
    %v868 = vpack.c.b16 %v490, %v484
    %v869 = vpack.c.b16 %v491, %v485
    %v870 = vpack.c.b16 %v498, %v492
    %v871 = vpack.c.b16 %v499, %v493
    %v872 = vpack.c.b16 %v500, %v494
    %v873 = vpack.c.b16 %v501, %v495
    %v874 = vpack.c.b16 %v502, %v496
    %v875 = vpack.c.b16 %v503, %v497
    %v876 = vpack.c.b16 %v510, %v504
    %v877 = vpack.c.b16 %v511, %v505
    %v878 = vpack.c.b16 %v512, %v506
    %v879 = vpack.c.b16 %v513, %v507
    %v880 = vpack.c.b16 %v514, %v508
    %v881 = vpack.c.b16 %v515, %v509
    %v882 = vpack.c.b16 %v522, %v516
    %v883 = vpack.c.b16 %v523, %v517
    %v884 = vpack.c.b16 %v524, %v518
    %v885 = vpack.c.b16 %v525, %v519
    %v886 = vpack.c.b16 %v526, %v520
    %v887 = vpack.c.b16 %v527, %v521
    %v888 = vpack.c.b16 %v534, %v528
    %v889 = vpack.c.b16 %v535, %v529
    %v890 = vpack.c.b16 %v536, %v530
    %v891 = vpack.c.b16 %v537, %v531
    %v892 = vpack.c.b16 %v538, %v532
    %v893 = vpack.c.b16 %v539, %v533
    %v894 = vpack.c.b16 %v546, %v540
    %v895 = vpack.c.b16 %v547, %v541
    %v896 = vpack.c.b16 %v548, %v542
    %v897 = vpack.c.b16 %v549, %v543
    %v898 = vpack.c.b16 %v550, %v544
    %v899 = vpack.c.b16 %v551, %v545
    %v900 = vpack.c.b16 %v558, %v552
    %v901 = vpack.c.b16 %v559, %v553
    %v902 = vpack.c.b16 %v560, %v554
    %v903 = vpack.c.b16 %v561, %v555
    %v904 = vpack.c.b16 %v562, %v556
    %v905 = vpack.c.b16 %v563, %v557
    %v906 = vpack.c.b16 %v570, %v564
    %v907 = vpack.c.b16 %v571, %v565
    %v908 = vpack.c.b16 %v572, %v566
    %v909 = vpack.c.b16 %v573, %v567
    %v910 = vpack.c.b16 %v574, %v568
    %v911 = vpack.c.b16 %v575, %v569
    %v912 = vpack.c.b16 %v582, %v576
    %v913 = vpack.c.b16 %v583, %v577
    %v914 = vpack.c.b16 %v584, %v578
    %v915 = vpack.c.b16 %v585, %v579
    %v916 = vpack.c.b16 %v586, %v580
    %v917 = vpack.c.b16 %v587, %v581
    %v918 = vpack.c.b16 %v594, %v588
    %v919 = vpack.c.b16 %v595, %v589
    %v920 = vpack.c.b16 %v596, %v590
    %v921 = vpack.c.b16 %v597, %v591
    %v922 = vpack.c.b16 %v598, %v592
    %v923 = vpack.c.b16 %v599, %v593
    %v924 = vpack.c.b16 %v606, %v600
    %v925 = vpack.c.b16 %v607, %v601
    %v926 = vpack.c.b16 %v608, %v602
    %v927 = vpack.c.b16 %v609, %v603
    %v928 = vpack.c.b16 %v610, %v604
    %v929 = vpack.c.b16 %v611, %v605
    %v930 = vpack.c.b16 %v618, %v612
    %v931 = vpack.c.b16 %v619, %v613
    %v932 = vpack.c.b16 %v620, %v614
    %v933 = vpack.c.b16 %v621, %v615
    %v934 = vpack.c.b16 %v622, %v616
    %v935 = vpack.c.b16 %v623, %v617
    %v936 = vpack.c.b16 %v630, %v624
    %v937 = vpack.c.b16 %v631, %v625
    %v938 = vpack.c.b16 %v632, %v626
    %v939 = vpack.c.b16 %v633, %v627
    %v940 = vpack.c.b16 %v634, %v628
    %v941 = vpack.c.b16 %v635, %v629
    %v942 = vpack.c.b16 %v642, %v636
    %v943 = vpack.c.b16 %v643, %v637
    %v944 = vpack.c.b16 %v644, %v638
    %v945 = vpack.c.b16 %v645, %v639
    %v946 = vpack.c.b16 %v646, %v640
    %v947 = vpack.c.b16 %v647, %v641
    %v948 = vpack.c.b16 %v654, %v648
    %v949 = vpack.c.b16 %v655, %v649
    %v950 = vpack.c.b16 %v656, %v650
    %v951 = vpack.c.b16 %v657, %v651
    %v952 = vpack.c.b16 %v658, %v652
    %v953 = vpack.c.b16 %v659, %v653
    %v954 = vpack.c.b16 %v666, %v660
    %v955 = vpack.c.b16 %v667, %v661
    %v956 = vpack.c.b16 %v668, %v662
    %v957 = vpack.c.b16 %v669, %v663
    %v958 = vpack.c.b16 %v670, %v664
    %v959 = vpack.c.b16 %v671, %v665
    %v960 = vpack.c.b16 %v678, %v672
    %v961 = vpack.c.b16 %v679, %v673
    %v962 = vpack.c.b16 %v680, %v674
    %v963 = vpack.c.b16 %v681, %v675
    %v964 = vpack.c.b16 %v682, %v676
    %v965 = vpack.c.b16 %v683, %v677
    %v966 = vpack.c.b16 %v690, %v684
    %v967 = vpack.c.b16 %v691, %v685
    %v968 = vpack.c.b16 %v692, %v686
    %v969 = vpack.c.b16 %v693, %v687
    %v970 = vpack.c.b16 %v694, %v688
    %v971 = vpack.c.b16 %v695, %v689
    %v972 = vpack.c.b16 %v702, %v696
    %v973 = vpack.c.b16 %v703, %v697
    %v974 = vpack.c.b16 %v704, %v698
    %v975 = vpack.c.b16 %v705, %v699
    %v976 = vpack.c.b16 %v706, %v700
    %v977 = vpack.c.b16 %v707, %v701
    %v978 = vpack.c.b16 %v714, %v708
    %v979 = vpack.c.b16 %v715, %v709
    %v980 = vpack.c.b16 %v716, %v710
    %v981 = vpack.c.b16 %v717, %v711
    %v982 = vpack.c.b16 %v718, %v712
    %v983 = vpack.c.b16 %v719, %v713
    %v984 = vpack.c.b16 %v726, %v720
    %v985 = vpack.c.b16 %v727, %v721
    %v986 = vpack.c.b16 %v728, %v722
    %v987 = vpack.c.b16 %v729, %v723
    %v988 = vpack.c.b16 %v730, %v724
    %v989 = vpack.c.b16 %v731, %v725
    %v990 = vpack.c.b16 %v738, %v732
    %v991 = vpack.c.b16 %v739, %v733
    %v992 = vpack.c.b16 %v740, %v734
    %v993 = vpack.c.b16 %v741, %v735
    %v994 = vpack.c.b16 %v742, %v736
    %v995 = vpack.c.b16 %v743, %v737
    %v996 = vpack.c.b16 %v750, %v744
    %v997 = vpack.c.b16 %v751, %v745
    %v998 = vpack.c.b16 %v752, %v746
    %v999 = vpack.c.b16 %v753, %v747
    %v1000 = vpack.c.b16 %v754, %v748
    %v1001 = vpack.c.b16 %v755, %v749
    %v1002 = vpack.c.b16 %v762, %v756
    %v1003 = vpack.c.b16 %v763, %v757
    %v1004 = vpack.c.b16 %v764, %v758
    %v1005 = vpack.c.b16 %v765, %v759
    %v1006 = vpack.c.b16 %v766, %v760
    %v1007 = vpack.c.b16 %v767, %v761
    %v1008 = vpack.c.b16 %v774, %v768
    %v1009 = vpack.c.b16 %v775, %v769
    %v1010 = vpack.c.b16 %v776, %v770
    %v1011 = vpack.c.b16 %v777, %v771
    %v1012 = vpack.c.b16 %v778, %v772
    %v1013 = vpack.c.b16 %v779, %v773
    %v1014 = vpack.c.b16 %v786, %v780
    %v1015 = vpack.c.b16 %v787, %v781
    %v1016 = vpack.c.b16 %v788, %v782
    %v1017 = vpack.c.b16 %v789, %v783
    %v1018 = vpack.c.b16 %v790, %v784
    %v1019 = vpack.c.b16 %v791, %v785
    %v1020 = vpack.c.b16 %v798, %v792
    %v1021 = vpack.c.b16 %v799, %v793
    %v1022 = vpack.c.b16 %v800, %v794
    %v1023 = vpack.c.b16 %v801, %v795
    %v1024 = vpack.c.b16 %v802, %v796
    %v1025 = vpack.c.b16 %v803, %v797
    %v1026 = vpack.c.b16 %v810, %v804
    %v1027 = vpack.c.b16 %v811, %v805
    %v1028 = vpack.c.b16 %v812, %v806
    %v1029 = vpack.c.b16 %v813, %v807
    %v1030 = vpack.c.b16 %v814, %v808
    %v1031 = vpack.c.b16 %v815, %v809
    %v1032 = vpack.c.b16 %v822, %v816
    %v1033 = vpack.c.b16 %v823, %v817
    %v1034 = vpack.c.b16 %v824, %v818
    %v1035 = vpack.c.b16 %v825, %v819
    %v1036 = vpack.c.b16 %v826, %v820
    %v1037 = vpack.c.b16 %v827, %v821
    %v1038 = vpack.c.b16 %v834, %v828
    %v1039 = vpack.c.b16 %v835, %v829
    %v1040 = vpack.c.b16 %v836, %v830
    %v1041 = vpack.c.b16 %v837, %v831
    %v1042 = vpack.c.b16 %v838, %v832
    %v1043 = vpack.c.b16 %v839, %v833
    %v1044 = vpack.c.b16 %v846, %v840
    %v1045 = vpack.c.b16 %v847, %v841
    %v1046 = vpack.c.b16 %v848, %v842
    %v1047 = vpack.c.b16 %v849, %v843
    %v1048 = vpack.c.b16 %v850, %v844
    %v1049 = vpack.c.b16 %v851, %v845
    %v1050 = vpack.c.b16 %v858, %v852
    %v1051 = vpack.c.b16 %v859, %v853
    %v1052 = vpack.c.b16 %v860, %v854
    %v1053 = vpack.c.b16 %v861, %v855
    %v1054 = vpack.c.b16 %v862, %v856
    %v1055 = vpack.c.b16 %v863, %v857
    %1248 = vmatprep.subr.bf16.mxu0 %v907
    %1249 = vmatpush1.bf16.msra.mxu0 %v906
    %1250 = vmatprep.subr.bf16.mxu0 %v901
    %1251 = vmatpush1.bf16.msra.mxu0 %v900
    %1252 = vmatprep.subr.bf16.mxu0 %v895
    %1253 = vmatpush1.bf16.msra.mxu0 %v894
    %1254 = vmatprep.subr.bf16.mxu0 %v889
    %1255 = vmatpush1.bf16.msra.mxu0 %v888
    %1256 = vmatprep.subr.bf16.mxu0 %v883
    %1257 = vmatpush1.bf16.msra.mxu0 %v882
    %1258 = vmatprep.subr.bf16.mxu0 %v877
    %1259 = vmatpush1.bf16.msra.mxu0 %v876
    %1260 = vmatprep.subr.bf16.mxu0 %v871
    %1261 = vmatpush1.bf16.msra.mxu0 %v870
    %1262 = vmatprep.subr.bf16.mxu0 %v865
    %1263 = vmatpush1.bf16.msra.mxu0 %v864
    %1264 = vmatprep.subr.bf16.mxu0 %v955
    %1265 = vmatpush2.bf16.msra.mxu0 %v954
    %1266 = vmatprep.subr.bf16.mxu0 %v949
    %1267 = vmatpush2.bf16.msra.mxu0 %v948
    %1268 = vmatprep.subr.bf16.mxu0 %v943
    %1269 = vmatpush2.bf16.msra.mxu0 %v942
    %1270 = vmatprep.subr.bf16.mxu0 %v937
    %1271 = vmatpush2.bf16.msra.mxu0 %v936
    %1272 = vmatprep.subr.bf16.mxu0 %v931
    %1273 = vmatpush2.bf16.msra.mxu0 %v930
    %1274 = vmatprep.subr.bf16.mxu0 %v925
    %1275 = vmatpush2.bf16.msra.mxu0 %v924
    %1276 = vmatprep.subr.bf16.mxu0 %v919
    %1277 = vmatpush2.bf16.msra.mxu0 %v918
    %1278 = vmatprep.subr.bf16.mxu0 %v913
    %1279 = vmatpush2.bf16.msra.mxu0 %v912
    %1280 = vmatprep.mubr.bf16.mxu0 %v281
    %1281 = vmatmul.mubr.bf16.gmra.mxu0 %v280
    %v1282 = vpop.f32.mrf.mxu0
    %v1283 = vadd.f32 %v241, %v1282
    %v1284 = vpop.f32.mrf.mxu0
    %v1285 = vadd.f32 %v245, %v1284
    %v1286 = vpop.f32.mrf.mxu0
    %v1287 = vadd.f32 %v241, %v1286
    %v1288 = vpop.f32.mrf.mxu0
    %v1289 = vadd.f32 %v245, %v1288
    %1290 = vdwg.mxu0
    %1291 = vmatprep.subr.bf16.mxu0 %v1003
    %1292 = vmatpush1.bf16.msra.mxu0 %v1002
    %1293 = vmatprep.subr.bf16.mxu0 %v997
    %1294 = vmatpush1.bf16.msra.mxu0 %v996
    %1295 = vmatprep.subr.bf16.mxu0 %v991
    %1296 = vmatpush1.bf16.msra.mxu0 %v990
    %1297 = vmatprep.subr.bf16.mxu0 %v985
    %1298 = vmatpush1.bf16.msra.mxu0 %v984
    %1299 = vmatprep.subr.bf16.mxu0 %v979
    %1300 = vmatpush1.bf16.msra.mxu0 %v978
    %1301 = vmatprep.subr.bf16.mxu0 %v973
    %1302 = vmatpush1.bf16.msra.mxu0 %v972
    %1303 = vmatprep.subr.bf16.mxu0 %v967
    %1304 = vmatpush1.bf16.msra.mxu0 %v966
    %1305 = vmatprep.subr.bf16.mxu0 %v961
    %1306 = vmatpush1.bf16.msra.mxu0 %v960
    %1307 = vmatprep.subr.bf16.mxu0 %v1051
    %1308 = vmatpush2.bf16.msra.mxu0 %v1050
    %1309 = vmatprep.subr.bf16.mxu0 %v1045
    %1310 = vmatpush2.bf16.msra.mxu0 %v1044
    %1311 = vmatprep.subr.bf16.mxu0 %v1039
    %1312 = vmatpush2.bf16.msra.mxu0 %v1038
    %1313 = vmatprep.subr.bf16.mxu0 %v1033
    %1314 = vmatpush2.bf16.msra.mxu0 %v1032
    %1315 = vmatprep.subr.bf16.mxu0 %v1027
    %1316 = vmatpush2.bf16.msra.mxu0 %v1026
    %1317 = vmatprep.subr.bf16.mxu0 %v1021
    %1318 = vmatpush2.bf16.msra.mxu0 %v1020
    %1319 = vmatprep.subr.bf16.mxu0 %v1015
    %1320 = vmatpush2.bf16.msra.mxu0 %v1014
    %1321 = vmatprep.subr.bf16.mxu0 %v1009
    %1322 = vmatpush2.bf16.msra.mxu0 %v1008
    %1323 = vmatprep.mubr.bf16.mxu0 %v283
    %1324 = vmatmul.mubr.bf16.gmra.mxu0 %v282
    %v1325 = vpop.f32.mrf.mxu0
    %v1326 = vadd.f32 %v1283, %v1325
    %v1327 = vpop.f32.mrf.mxu0
    %v1328 = vadd.f32 %v1285, %v1327
    %v1329 = vpop.f32.mrf.mxu0
    %v1330 = vadd.f32 %v1287, %v1329
    %v1331 = vpop.f32.mrf.mxu0
    %v1332 = vadd.f32 %v1289, %v1331
    %1333 = vdwg.mxu0
    %1334 = vmatprep.subr.bf16.mxu0 %v909
    %1335 = vmatpush1.bf16.msra.mxu0 %v908
    %1336 = vmatprep.subr.bf16.mxu0 %v903
    %1337 = vmatpush1.bf16.msra.mxu0 %v902
    %1338 = vmatprep.subr.bf16.mxu0 %v897
    %1339 = vmatpush1.bf16.msra.mxu0 %v896
    %1340 = vmatprep.subr.bf16.mxu0 %v891
    %1341 = vmatpush1.bf16.msra.mxu0 %v890
    %1342 = vmatprep.subr.bf16.mxu0 %v885
    %1343 = vmatpush1.bf16.msra.mxu0 %v884
    %1344 = vmatprep.subr.bf16.mxu0 %v879
    %1345 = vmatpush1.bf16.msra.mxu0 %v878
    %1346 = vmatprep.subr.bf16.mxu0 %v873
    %1347 = vmatpush1.bf16.msra.mxu0 %v872
    %1348 = vmatprep.subr.bf16.mxu0 %v867
    %1349 = vmatpush1.bf16.msra.mxu0 %v866
    %1350 = vmatprep.subr.bf16.mxu0 %v957
    %1351 = vmatpush2.bf16.msra.mxu0 %v956
    %1352 = vmatprep.subr.bf16.mxu0 %v951
    %1353 = vmatpush2.bf16.msra.mxu0 %v950
    %1354 = vmatprep.subr.bf16.mxu0 %v945
    %1355 = vmatpush2.bf16.msra.mxu0 %v944
    %1356 = vmatprep.subr.bf16.mxu0 %v939
    %1357 = vmatpush2.bf16.msra.mxu0 %v938
    %1358 = vmatprep.subr.bf16.mxu0 %v933
    %1359 = vmatpush2.bf16.msra.mxu0 %v932
    %1360 = vmatprep.subr.bf16.mxu0 %v927
    %1361 = vmatpush2.bf16.msra.mxu0 %v926
    %1362 = vmatprep.subr.bf16.mxu0 %v921
    %1363 = vmatpush2.bf16.msra.mxu0 %v920
    %1364 = vmatprep.subr.bf16.mxu0 %v915
    %1365 = vmatpush2.bf16.msra.mxu0 %v914
    %1366 = vmatprep.mubr.bf16.mxu0 %v281
    %1367 = vmatmul.mubr.bf16.gmra.mxu0 %v280
    %v1368 = vpop.f32.mrf.mxu0
    %v1369 = vadd.f32 %v249, %v1368
    %v1370 = vpop.f32.mrf.mxu0
    %v1371 = vadd.f32 %v253, %v1370
    %v1372 = vpop.f32.mrf.mxu0
    %v1373 = vadd.f32 %v249, %v1372
    %v1374 = vpop.f32.mrf.mxu0
    %v1375 = vadd.f32 %v253, %v1374
    %1376 = vdwg.mxu0
    %1377 = vmatprep.subr.bf16.mxu0 %v1005
    %1378 = vmatpush1.bf16.msra.mxu0 %v1004
    %1379 = vmatprep.subr.bf16.mxu0 %v999
    %1380 = vmatpush1.bf16.msra.mxu0 %v998
    %1381 = vmatprep.subr.bf16.mxu0 %v993
    %1382 = vmatpush1.bf16.msra.mxu0 %v992
    %1383 = vmatprep.subr.bf16.mxu0 %v987
    %1384 = vmatpush1.bf16.msra.mxu0 %v986
    %1385 = vmatprep.subr.bf16.mxu0 %v981
    %1386 = vmatpush1.bf16.msra.mxu0 %v980
    %1387 = vmatprep.subr.bf16.mxu0 %v975
    %1388 = vmatpush1.bf16.msra.mxu0 %v974
    %1389 = vmatprep.subr.bf16.mxu0 %v969
    %1390 = vmatpush1.bf16.msra.mxu0 %v968
    %1391 = vmatprep.subr.bf16.mxu0 %v963
    %1392 = vmatpush1.bf16.msra.mxu0 %v962
    %1393 = vmatprep.subr.bf16.mxu0 %v1053
    %1394 = vmatpush2.bf16.msra.mxu0 %v1052
    %1395 = vmatprep.subr.bf16.mxu0 %v1047
    %1396 = vmatpush2.bf16.msra.mxu0 %v1046
    %1397 = vmatprep.subr.bf16.mxu0 %v1041
    %1398 = vmatpush2.bf16.msra.mxu0 %v1040
    %1399 = vmatprep.subr.bf16.mxu0 %v1035
    %1400 = vmatpush2.bf16.msra.mxu0 %v1034
    %1401 = vmatprep.subr.bf16.mxu0 %v1029
    %1402 = vmatpush2.bf16.msra.mxu0 %v1028
    %1403 = vmatprep.subr.bf16.mxu0 %v1023
    %1404 = vmatpush2.bf16.msra.mxu0 %v1022
    %1405 = vmatprep.subr.bf16.mxu0 %v1017
    %1406 = vmatpush2.bf16.msra.mxu0 %v1016
    %1407 = vmatprep.subr.bf16.mxu0 %v1011
    %1408 = vmatpush2.bf16.msra.mxu0 %v1010
    %1409 = vmatprep.mubr.bf16.mxu0 %v283
    %1410 = vmatmul.mubr.bf16.gmra.mxu0 %v282
    %v1411 = vpop.f32.mrf.mxu0
    %v1412 = vadd.f32 %v1369, %v1411
    %v1413 = vpop.f32.mrf.mxu0
    %v1414 = vadd.f32 %v1371, %v1413
    %v1415 = vpop.f32.mrf.mxu0
    %v1416 = vadd.f32 %v1373, %v1415
    %v1417 = vpop.f32.mrf.mxu0
    %v1418 = vadd.f32 %v1375, %v1417
    %1419 = vdwg.mxu0
    %1420 = vmatprep.subr.bf16.mxu0 %v911
    %1421 = vmatpush1.bf16.msra.mxu0 %v910
    %1422 = vmatprep.subr.bf16.mxu0 %v905
    %1423 = vmatpush1.bf16.msra.mxu0 %v904
    %1424 = vmatprep.subr.bf16.mxu0 %v899
    %1425 = vmatpush1.bf16.msra.mxu0 %v898
    %1426 = vmatprep.subr.bf16.mxu0 %v893
    %1427 = vmatpush1.bf16.msra.mxu0 %v892
    %1428 = vmatprep.subr.bf16.mxu0 %v887
    %1429 = vmatpush1.bf16.msra.mxu0 %v886
    %1430 = vmatprep.subr.bf16.mxu0 %v881
    %1431 = vmatpush1.bf16.msra.mxu0 %v880
    %1432 = vmatprep.subr.bf16.mxu0 %v875
    %1433 = vmatpush1.bf16.msra.mxu0 %v874
    %1434 = vmatprep.subr.bf16.mxu0 %v869
    %1435 = vmatpush1.bf16.msra.mxu0 %v868
    %1436 = vmatprep.subr.bf16.mxu0 %v959
    %1437 = vmatpush2.bf16.msra.mxu0 %v958
    %1438 = vmatprep.subr.bf16.mxu0 %v953
    %1439 = vmatpush2.bf16.msra.mxu0 %v952
    %1440 = vmatprep.subr.bf16.mxu0 %v947
    %1441 = vmatpush2.bf16.msra.mxu0 %v946
    %1442 = vmatprep.subr.bf16.mxu0 %v941
    %1443 = vmatpush2.bf16.msra.mxu0 %v940
    %1444 = vmatprep.subr.bf16.mxu0 %v935
    %1445 = vmatpush2.bf16.msra.mxu0 %v934
    %1446 = vmatprep.subr.bf16.mxu0 %v929
    %1447 = vmatpush2.bf16.msra.mxu0 %v928
    %1448 = vmatprep.subr.bf16.mxu0 %v923
    %1449 = vmatpush2.bf16.msra.mxu0 %v922
    %1450 = vmatprep.subr.bf16.mxu0 %v917
    %1451 = vmatpush2.bf16.msra.mxu0 %v916
    %1452 = vmatprep.mubr.bf16.mxu0 %v281
    %1453 = vmatmul.mubr.bf16.gmra.mxu0 %v280
    %v1454 = vpop.f32.mrf.mxu0
    %v1455 = vadd.f32 %v257, %v1454
    %v1456 = vpop.f32.mrf.mxu0
    %v1457 = vadd.f32 %v261, %v1456
    %v1458 = vpop.f32.mrf.mxu0
    %v1459 = vadd.f32 %v257, %v1458
    %v1460 = vpop.f32.mrf.mxu0
    %v1461 = vadd.f32 %v261, %v1460
    %1462 = vdwg.mxu0
    %1463 = vmatprep.subr.bf16.mxu0 %v1007
    %1464 = vmatpush1.bf16.msra.mxu0 %v1006
    %1465 = vmatprep.subr.bf16.mxu0 %v1001
    %1466 = vmatpush1.bf16.msra.mxu0 %v1000
    %1467 = vmatprep.subr.bf16.mxu0 %v995
    %1468 = vmatpush1.bf16.msra.mxu0 %v994
    %1469 = vmatprep.subr.bf16.mxu0 %v989
    %1470 = vmatpush1.bf16.msra.mxu0 %v988
    %1471 = vmatprep.subr.bf16.mxu0 %v983
    %1472 = vmatpush1.bf16.msra.mxu0 %v982
    %1473 = vmatprep.subr.bf16.mxu0 %v977
    %1474 = vmatpush1.bf16.msra.mxu0 %v976
    %1475 = vmatprep.subr.bf16.mxu0 %v971
    %1476 = vmatpush1.bf16.msra.mxu0 %v970
    %1477 = vmatprep.subr.bf16.mxu0 %v965
    %1478 = vmatpush1.bf16.msra.mxu0 %v964
    %1479 = vmatprep.subr.bf16.mxu0 %v1055
    %1480 = vmatpush2.bf16.msra.mxu0 %v1054
    %1481 = vmatprep.subr.bf16.mxu0 %v1049
    %1482 = vmatpush2.bf16.msra.mxu0 %v1048
    %1483 = vmatprep.subr.bf16.mxu0 %v1043
    %1484 = vmatpush2.bf16.msra.mxu0 %v1042
    %1485 = vmatprep.subr.bf16.mxu0 %v1037
    %1486 = vmatpush2.bf16.msra.mxu0 %v1036
    %1487 = vmatprep.subr.bf16.mxu0 %v1031
    %1488 = vmatpush2.bf16.msra.mxu0 %v1030
    %1489 = vmatprep.subr.bf16.mxu0 %v1025
    %1490 = vmatpush2.bf16.msra.mxu0 %v1024
    %1491 = vmatprep.subr.bf16.mxu0 %v1019
    %1492 = vmatpush2.bf16.msra.mxu0 %v1018
    %1493 = vmatprep.subr.bf16.mxu0 %v1013
    %1494 = vmatpush2.bf16.msra.mxu0 %v1012
    %1495 = vmatprep.mubr.bf16.mxu0 %v283
    %1496 = vmatmul.mubr.bf16.gmra.mxu0 %v282
    %v1497 = vpop.f32.mrf.mxu0
    %v1498 = vadd.f32 %v1455, %v1497
    %v1499 = vpop.f32.mrf.mxu0
    %v1500 = vadd.f32 %v1457, %v1499
    %v1501 = vpop.f32.mrf.mxu0
    %v1502 = vadd.f32 %v1459, %v1501
    %v1503 = vpop.f32.mrf.mxu0
    %v1504 = vadd.f32 %v1461, %v1503
    %1505 = vdwg.mxu0
    %v1506 = vpack.c.bf16 %v1330, %v1326
    %v1507 = vpack.c.bf16 %v1332, %v1328
    %v1508 = vpack.c.bf16 %v1416, %v1412
    %v1509 = vpack.c.bf16 %v1418, %v1414
    %v1510 = vpack.c.bf16 %v1502, %v1498
    %v1511 = vpack.c.bf16 %v1504, %v1500
    %v1518 = vunpack.c.l.b16 %v1506
    %v1519 = vunpack.c.l.b16 %v1507
    %v1520 = vunpack.c.l.b16 %v1508
    %v1521 = vunpack.c.l.b16 %v1509
    %v1522 = vunpack.c.l.b16 %v1510
    %v1523 = vunpack.c.l.b16 %v1511
    %v1524 = vunpack.c.h.b16 %v1506
    %v1525 = vunpack.c.h.b16 %v1507
    %v1526 = vunpack.c.h.b16 %v1508
    %v1527 = vunpack.c.h.b16 %v1509
    %v1528 = vunpack.c.h.b16 %v1510
    %v1529 = vunpack.c.h.b16 %v1511
    %v1530 = vpack.c.b16 %v1519, %v1518
    %v1531 = vpack.c.b16 %v1521, %v1520
    %v1532 = vpack.c.b16 %v1523, %v1522
    %v1533 = vpack.c.b16 %v1525, %v1524
    %v1534 = vpack.c.b16 %v1527, %v1526
    %v1535 = vpack.c.b16 %v1529, %v1528
    %1542 = vst [vmem:[%s3] sm:$0xff] %v1530
    %1543 = vst [vmem:[%s3 + $0x8] sm:$0xff] %v1531
    %1544 = vst [vmem:[%s3 + $0x10] sm:$0xff] %v1532
    %1545 = vst [vmem:[%s3 + $0x18] sm:$0xff] %v1533
    %1546 = vst [vmem:[%s3 + $0x20] sm:$0xff] %v1534
    %1547 = vst [vmem:[%s3 + $0x28] sm:$0xff] %v1535
    // Predicated region
    $region22: #{decoder_forward.4} parent=1 // pred_check
      _
    $region23: #{decoder_forward.4} parent=1 // pred_check_branch
      %1549 = sbr.rel (0) target = $region25
    $region24: #{decoder_forward.4} parent=1 // pred_region
      _
    $region25: #{decoder_forward.4} parent=1 // pred_fallthru
      _
    // Predicated region
    $region26: #{decoder_forward.4} parent=1 // pred_check
      _
    $region27: #{decoder_forward.4} parent=1 // pred_check_branch
      %1551 = sbr.rel (0) target = $region29
    $region28: #{decoder_forward.4} parent=1 // pred_region
      _
    $region29: #{decoder_forward.4} parent=1 // pred_fallthru
      _
    %1552 = vsyncpa [#allocation3], 1
    %1553 = vsyncpa [#allocation5], 1

// kernel: decoder_forward.5
$region0: #{decoder_forward.5}
  #allocation0 [shape = 'u32[]', space=smem, size = 0x4, offset = 0x4, fixed_abs, tag = 'smem constant byte address 0x4 - core index']
  #allocation1 [shape = 'u32[144,128]{1,0:T(1,128)}', space=vmem, size = 0x12000, scoped, tag = 'internal scratch']
  %s0 = inlined_call_operand.vmem [shape: bf16[64,48], index: 0, kind: input, shape index: {}]
  %s1 = inlined_call_operand.vmem [shape: bf16[64,48], index: 1, kind: input, shape index: {}]
  %s2 = inlined_call_operand.vmem [shape: bf16[64,48], index: 2, kind: input, shape index: {}]
  %s3 = inlined_call_operand.vmem [shape: bf16[64,48], index: 3, kind: input, shape index: {}]
  %s4 = inlined_call_operand.vmem [shape: bf16[4,48,128], index: 4, kind: input, shape index: {}]
  %s5 = inlined_call_operand.vmem [shape: f32[1,128], index: 5, kind: input, shape index: {}]
  %s6 = inlined_call_operand.vmem [shape: bf16[64,128], index: 6, kind: output, shape index: {}]
  %s7 = sld [smem:[#allocation0]]
  $region34: #{decoder_forward.5} parent=0
    _
  %s9 = ssub.s32 1, %s7
  %s10 = scalar_select 0, %s9, %s7
  // Predicated region
  $region2: #{decoder_forward.5} parent=0 // pred_check
    _
  $region3: #{decoder_forward.5} parent=0 // pred_check_branch
    %12 = sbr.rel (0) target = $region5
  $region4: #{decoder_forward.5} parent=0 // pred_region
    _
  $region5: #{decoder_forward.5} parent=0 // pred_fallthru
    _
  // Predicated region
  $region6: #{decoder_forward.5} parent=0 // pred_check
    _
  $region7: #{decoder_forward.5} parent=0 // pred_check_branch
    %14 = sbr.rel (0) target = $region9
  $region8: #{decoder_forward.5} parent=0 // pred_region
    _
  $region9: #{decoder_forward.5} parent=0 // pred_fallthru
    _
  // Predicated region
  $region10: #{decoder_forward.5} parent=0 // pred_check
    _
  $region11: #{decoder_forward.5} parent=0 // pred_check_branch
    %16 = sbr.rel (0) target = $region13
  $region12: #{decoder_forward.5} parent=0 // pred_region
    _
  $region13: #{decoder_forward.5} parent=0 // pred_fallthru
    _
  // Predicated region
  $region14: #{decoder_forward.5} parent=0 // pred_check
    _
  $region15: #{decoder_forward.5} parent=0 // pred_check_branch
    %18 = sbr.rel (0) target = $region17
  $region16: #{decoder_forward.5} parent=0 // pred_region
    _
  $region17: #{decoder_forward.5} parent=0 // pred_fallthru
    _
  // Predicated region
  $region18: #{decoder_forward.5} parent=0 // pred_check
    _
  $region19: #{decoder_forward.5} parent=0 // pred_check_branch
    %20 = sbr.rel (0) target = $region21
  $region20: #{decoder_forward.5} parent=0 // pred_region
    _
  $region21: #{decoder_forward.5} parent=0 // pred_fallthru
    _
  // Predicated region
  $region22: #{decoder_forward.5} parent=0 // pred_check
    _
  $region23: #{decoder_forward.5} parent=0 // pred_check_branch
    %22 = sbr.rel (0) target = $region25
  $region24: #{decoder_forward.5} parent=0 // pred_region
    _
  $region25: #{decoder_forward.5} parent=0 // pred_fallthru
    _
  %v24 = vld [vmem:[%s0] sm:$0xf]
  %v25 = vld [vmem:[%s0 + $0x4] sm:$0xf]
  %v26 = vld [vmem:[%s0 + $0x8] sm:$0xf]
  %v27 = vld [vmem:[%s0 + $0xc] sm:$0xf]
  %v28 = vld [vmem:[%s0 + $0x10] sm:$0xf]
  %v29 = vld [vmem:[%s0 + $0x14] sm:$0xf]
  %v30 = vld [vmem:[%s0 + $0x18] sm:$0xf]
  %v31 = vld [vmem:[%s0 + $0x1c] sm:$0xf]
  %v32 = vld [vmem:[%s4] sm:$0xf]
  %v33 = vld [vmem:[%s4 + $0x4] sm:$0xf]
  %v34 = vld [vmem:[%s4 + $0x8] sm:$0xf]
  %v35 = vld [vmem:[%s4 + $0xc] sm:$0xf]
  %v36 = vld [vmem:[%s4 + $0x10] sm:$0xf]
  %v37 = vld [vmem:[%s4 + $0x14] sm:$0xf]
  %v38 = vld [vmem:[%s1] sm:$0xf]
  %v39 = vld [vmem:[%s1 + $0x4] sm:$0xf]
  %v40 = vld [vmem:[%s1 + $0x8] sm:$0xf]
  %v41 = vld [vmem:[%s1 + $0xc] sm:$0xf]
  %v42 = vld [vmem:[%s1 + $0x10] sm:$0xf]
  %v43 = vld [vmem:[%s1 + $0x14] sm:$0xf]
  %v44 = vld [vmem:[%s1 + $0x18] sm:$0xf]
  %v45 = vld [vmem:[%s1 + $0x1c] sm:$0xf]
  %s46 = scalar_lea.vmem %s4, 24
  %v47 = vld [vmem:[%s46] sm:$0xf]
  %v48 = vld [vmem:[%s46 + $0x4] sm:$0xf]
  %v49 = vld [vmem:[%s46 + $0x8] sm:$0xf]
  %v50 = vld [vmem:[%s46 + $0xc] sm:$0xf]
  %v51 = vld [vmem:[%s46 + $0x10] sm:$0xf]
  %v52 = vld [vmem:[%s46 + $0x14] sm:$0xf]
  %v61 = vunpack.c.l.b16 %v38
  %v62 = vunpack.c.l.b16 %v39
  %v63 = vunpack.c.l.b16 %v40
  %v64 = vunpack.c.l.b16 %v41
  %v65 = vunpack.c.l.b16 %v42
  %v66 = vunpack.c.l.b16 %v43
  %v67 = vunpack.c.l.b16 %v44
  %v68 = vunpack.c.l.b16 %v45
  %v69 = vpack.c.b16 %v62, %v61
  %v70 = vpack.c.b16 %v64, %v63
  %v71 = vpack.c.b16 %v66, %v65
  %v72 = vpack.c.b16 %v68, %v67
  %v79 = vunpack.c.l.b16 %v47
  %v80 = vunpack.c.l.b16 %v48
  %v81 = vunpack.c.l.b16 %v49
  %v82 = vunpack.c.l.b16 %v50
  %v83 = vunpack.c.l.b16 %v51
  %v84 = vunpack.c.l.b16 %v52
  %v85 = vpack.c.b16 %v80, %v79
  %v86 = vpack.c.b16 %v82, %v81
  %v87 = vpack.c.b16 %v84, %v83
  %vm91 = vcmask 392192
  %v93 = vsel %vm91, %v69, 0
  %v96 = vsel %vm91, %v70, 0
  %v99 = vsel %vm91, %v71, 0
  %v102 = vsel %vm91, %v72, 0
  %104 = vmatprep.subr.bf16.mxu0 0
  %105 = vmatpush1.bf16.msra.mxu0 0
  %106 = vmatprep.subr.bf16.mxu0 0
  %107 = vmatpush1.bf16.msra.mxu0 0
  %108 = vmatprep.subr.bf16.mxu0 0
  %109 = vmatpush1.bf16.msra.mxu0 0
  %110 = vmatprep.subr.bf16.mxu0 0
  %111 = vmatpush1.bf16.msra.mxu0 0
  %112 = vmatprep.subr.bf16.mxu0 0
  %113 = vmatpush1.bf16.msra.mxu0 0
  %114 = vmatprep.subr.bf16.mxu0 0
  %115 = vmatpush1.bf16.msra.mxu0 %v87
  %116 = vmatprep.subr.bf16.mxu0 0
  %117 = vmatpush1.bf16.msra.mxu0 %v86
  %118 = vmatprep.subr.bf16.mxu0 0
  %119 = vmatpush1.bf16.msra.mxu0 %v85
  %120 = vmatprep.subr.bf16.mxu0 0
  %121 = vmatpush2.bf16.msra.mxu0 0
  %122 = vmatprep.subr.bf16.mxu0 0
  %123 = vmatpush2.bf16.msra.mxu0 0
  %124 = vmatprep.subr.bf16.mxu0 0
  %125 = vmatpush2.bf16.msra.mxu0 0
  %126 = vmatprep.subr.bf16.mxu0 0
  %127 = vmatpush2.bf16.msra.mxu0 0
  %128 = vmatprep.subr.bf16.mxu0 0
  %129 = vmatpush2.bf16.msra.mxu0 0
  %130 = vmatprep.subr.bf16.mxu0 0
  %131 = vmatpush2.bf16.msra.mxu0 0
  %132 = vmatprep.subr.bf16.mxu0 0
  %133 = vmatpush2.bf16.msra.mxu0 0
  %134 = vmatprep.subr.bf16.mxu0 0
  %135 = vmatpush2.bf16.msra.mxu0 0
  %136 = vmatprep.mubr.bf16.mxu0 0
  %137 = vmatmul.mubr.bf16.gmra.mxu0 %v93
  %v138 = vpop.f32.mrf.mxu0
  %v139 = vadd.f32 0.0, %v138
  %v140 = vpop.f32.mrf.mxu0
  %v141 = vpop.f32.mrf.mxu0
  %v142 = vadd.f32 0.0, %v141
  %v143 = vpop.f32.mrf.mxu0
  %144 = vmatprep.mubr.bf16.mxu0 0
  %145 = vmatmul.mubr.bf16.gmra.mxu0 %v96
  %v146 = vpop.f32.mrf.mxu0
  %v147 = vadd.f32 0.0, %v146
  %v148 = vpop.f32.mrf.mxu0
  %v149 = vpop.f32.mrf.mxu0
  %v150 = vadd.f32 0.0, %v149
  %v151 = vpop.f32.mrf.mxu0
  %152 = vmatprep.mubr.bf16.mxu0 0
  %153 = vmatmul.mubr.bf16.gmra.mxu0 %v99
  %v154 = vpop.f32.mrf.mxu0
  %v155 = vadd.f32 0.0, %v154
  %v156 = vpop.f32.mrf.mxu0
  %v157 = vpop.f32.mrf.mxu0
  %v158 = vadd.f32 0.0, %v157
  %v159 = vpop.f32.mrf.mxu0
  %160 = vmatprep.mubr.bf16.mxu0 0
  %161 = vmatmul.mubr.bf16.gmra.mxu0 %v102
  %v162 = vpop.f32.mrf.mxu0
  %v163 = vadd.f32 0.0, %v162
  %v164 = vpop.f32.mrf.mxu0
  %v165 = vpop.f32.mrf.mxu0
  %v166 = vadd.f32 0.0, %v165
  %v167 = vpop.f32.mrf.mxu0
  %168 = vdwg.mxu0
  %v177 = vunpack.c.l.b16 %v24
  %v178 = vunpack.c.l.b16 %v25
  %v179 = vunpack.c.l.b16 %v26
  %v180 = vunpack.c.l.b16 %v27
  %v181 = vunpack.c.l.b16 %v28
  %v182 = vunpack.c.l.b16 %v29
  %v183 = vunpack.c.l.b16 %v30
  %v184 = vunpack.c.l.b16 %v31
  %v185 = vpack.c.b16 %v178, %v177
  %v186 = vpack.c.b16 %v180, %v179
  %v187 = vpack.c.b16 %v182, %v181
  %v188 = vpack.c.b16 %v184, %v183
  %v195 = vunpack.c.l.b16 %v32
  %v196 = vunpack.c.l.b16 %v33
  %v197 = vunpack.c.l.b16 %v34
  %v198 = vunpack.c.l.b16 %v35
  %v199 = vunpack.c.l.b16 %v36
  %v200 = vunpack.c.l.b16 %v37
  %v201 = vpack.c.b16 %v196, %v195
  %v202 = vpack.c.b16 %v198, %v197
  %v203 = vpack.c.b16 %v200, %v199
  %v208 = vsel %vm91, %v185, 0
  %v211 = vsel %vm91, %v186, 0
  %v214 = vsel %vm91, %v187, 0
  %v217 = vsel %vm91, %v188, 0
  %219 = vmatprep.subr.bf16.mxu0 0
  %220 = vmatpush1.bf16.msra.mxu0 0
  %221 = vmatprep.subr.bf16.mxu0 0
  %222 = vmatpush1.bf16.msra.mxu0 0
  %223 = vmatprep.subr.bf16.mxu0 0
  %224 = vmatpush1.bf16.msra.mxu0 0
  %225 = vmatprep.subr.bf16.mxu0 0
  %226 = vmatpush1.bf16.msra.mxu0 0
  %227 = vmatprep.subr.bf16.mxu0 0
  %228 = vmatpush1.bf16.msra.mxu0 0
  %229 = vmatprep.subr.bf16.mxu0 0
  %230 = vmatpush1.bf16.msra.mxu0 %v203
  %231 = vmatprep.subr.bf16.mxu0 0
  %232 = vmatpush1.bf16.msra.mxu0 %v202
  %233 = vmatprep.subr.bf16.mxu0 0
  %234 = vmatpush1.bf16.msra.mxu0 %v201
  %235 = vmatprep.subr.bf16.mxu0 0
  %236 = vmatpush2.bf16.msra.mxu0 0
  %237 = vmatprep.subr.bf16.mxu0 0
  %238 = vmatpush2.bf16.msra.mxu0 0
  %239 = vmatprep.subr.bf16.mxu0 0
  %240 = vmatpush2.bf16.msra.mxu0 0
  %241 = vmatprep.subr.bf16.mxu0 0
  %242 = vmatpush2.bf16.msra.mxu0 0
  %243 = vmatprep.subr.bf16.mxu0 0
  %244 = vmatpush2.bf16.msra.mxu0 0
  %245 = vmatprep.subr.bf16.mxu0 0
  %246 = vmatpush2.bf16.msra.mxu0 0
  %247 = vmatprep.subr.bf16.mxu0 0
  %248 = vmatpush2.bf16.msra.mxu0 0
  %249 = vmatprep.subr.bf16.mxu0 0
  %250 = vmatpush2.bf16.msra.mxu0 0
  %251 = vmatprep.mubr.bf16.mxu0 0
  %252 = vmatmul.mubr.bf16.gmra.mxu0 %v208
  %v253 = vpop.f32.mrf.mxu0
  %v254 = vadd.f32 %v139, %v253
  %v255 = vpop.f32.mrf.mxu0
  %v256 = vpop.f32.mrf.mxu0
  %v257 = vadd.f32 %v142, %v256
  %v258 = vpop.f32.mrf.mxu0
  %259 = vmatprep.mubr.bf16.mxu0 0
  %260 = vmatmul.mubr.bf16.gmra.mxu0 %v211
  %v261 = vpop.f32.mrf.mxu0
  %v262 = vadd.f32 %v147, %v261
  %v263 = vpop.f32.mrf.mxu0
  %v264 = vpop.f32.mrf.mxu0
  %v265 = vadd.f32 %v150, %v264
  %v266 = vpop.f32.mrf.mxu0
  %267 = vmatprep.mubr.bf16.mxu0 0
  %268 = vmatmul.mubr.bf16.gmra.mxu0 %v214
  %v269 = vpop.f32.mrf.mxu0
  %v270 = vadd.f32 %v155, %v269
  %v271 = vpop.f32.mrf.mxu0
  %v272 = vpop.f32.mrf.mxu0
  %v273 = vadd.f32 %v158, %v272
  %v274 = vpop.f32.mrf.mxu0
  %275 = vmatprep.mubr.bf16.mxu0 0
  %276 = vmatmul.mubr.bf16.gmra.mxu0 %v217
  %v277 = vpop.f32.mrf.mxu0
  %v278 = vadd.f32 %v163, %v277
  %v279 = vpop.f32.mrf.mxu0
  %v280 = vpop.f32.mrf.mxu0
  %v281 = vadd.f32 %v166, %v280
  %v282 = vpop.f32.mrf.mxu0
  %283 = vdwg.mxu0
  %v284 = vld [vmem:[%s2] sm:$0xf]
  %v285 = vld [vmem:[%s2 + $0x4] sm:$0xf]
  %v286 = vld [vmem:[%s2 + $0x8] sm:$0xf]
  %v287 = vld [vmem:[%s2 + $0xc] sm:$0xf]
  %v288 = vld [vmem:[%s2 + $0x10] sm:$0xf]
  %v289 = vld [vmem:[%s2 + $0x14] sm:$0xf]
  %v290 = vld [vmem:[%s2 + $0x18] sm:$0xf]
  %v291 = vld [vmem:[%s2 + $0x1c] sm:$0xf]
  %s292 = scalar_lea.vmem %s4, 48
  %v293 = vld [vmem:[%s292] sm:$0xf]
  %v294 = vld [vmem:[%s292 + $0x4] sm:$0xf]
  %v295 = vld [vmem:[%s292 + $0x8] sm:$0xf]
  %v296 = vld [vmem:[%s292 + $0xc] sm:$0xf]
  %v297 = vld [vmem:[%s292 + $0x10] sm:$0xf]
  %v298 = vld [vmem:[%s292 + $0x14] sm:$0xf]
  %v307 = vunpack.c.l.b16 %v284
  %v308 = vunpack.c.l.b16 %v285
  %v309 = vunpack.c.l.b16 %v286
  %v310 = vunpack.c.l.b16 %v287
  %v311 = vunpack.c.l.b16 %v288
  %v312 = vunpack.c.l.b16 %v289
  %v313 = vunpack.c.l.b16 %v290
  %v314 = vunpack.c.l.b16 %v291
  %v315 = vpack.c.b16 %v308, %v307
  %v316 = vpack.c.b16 %v310, %v309
  %v317 = vpack.c.b16 %v312, %v311
  %v318 = vpack.c.b16 %v314, %v313
  %v325 = vunpack.c.l.b16 %v293
  %v326 = vunpack.c.l.b16 %v294
  %v327 = vunpack.c.l.b16 %v295
  %v328 = vunpack.c.l.b16 %v296
  %v329 = vunpack.c.l.b16 %v297
  %v330 = vunpack.c.l.b16 %v298
  %v331 = vpack.c.b16 %v326, %v325
  %v332 = vpack.c.b16 %v328, %v327
  %v333 = vpack.c.b16 %v330, %v329
  %v338 = vsel %vm91, %v315, 0
  %v341 = vsel %vm91, %v316, 0
  %v344 = vsel %vm91, %v317, 0
  %v347 = vsel %vm91, %v318, 0
  %349 = vmatprep.subr.bf16.mxu0 0
  %350 = vmatpush1.bf16.msra.mxu0 0
  %351 = vmatprep.subr.bf16.mxu0 0
  %352 = vmatpush1.bf16.msra.mxu0 0
  %353 = vmatprep.subr.bf16.mxu0 0
  %354 = vmatpush1.bf16.msra.mxu0 0
  %355 = vmatprep.subr.bf16.mxu0 0
  %356 = vmatpush1.bf16.msra.mxu0 0
  %357 = vmatprep.subr.bf16.mxu0 0
  %358 = vmatpush1.bf16.msra.mxu0 0
  %359 = vmatprep.subr.bf16.mxu0 0
  %360 = vmatpush1.bf16.msra.mxu0 %v333
  %361 = vmatprep.subr.bf16.mxu0 0
  %362 = vmatpush1.bf16.msra.mxu0 %v332
  %363 = vmatprep.subr.bf16.mxu0 0
  %364 = vmatpush1.bf16.msra.mxu0 %v331
  %365 = vmatprep.subr.bf16.mxu0 0
  %366 = vmatpush2.bf16.msra.mxu0 0
  %367 = vmatprep.subr.bf16.mxu0 0
  %368 = vmatpush2.bf16.msra.mxu0 0
  %369 = vmatprep.subr.bf16.mxu0 0
  %370 = vmatpush2.bf16.msra.mxu0 0
  %371 = vmatprep.subr.bf16.mxu0 0
  %372 = vmatpush2.bf16.msra.mxu0 0
  %373 = vmatprep.subr.bf16.mxu0 0
  %374 = vmatpush2.bf16.msra.mxu0 0
  %375 = vmatprep.subr.bf16.mxu0 0
  %376 = vmatpush2.bf16.msra.mxu0 0
  %377 = vmatprep.subr.bf16.mxu0 0
  %378 = vmatpush2.bf16.msra.mxu0 0
  %379 = vmatprep.subr.bf16.mxu0 0
  %380 = vmatpush2.bf16.msra.mxu0 0
  %381 = vmatprep.mubr.bf16.mxu0 0
  %382 = vmatmul.mubr.bf16.gmra.mxu0 %v338
  %v383 = vpop.f32.mrf.mxu0
  %v384 = vadd.f32 0.0, %v383
  %v385 = vpop.f32.mrf.mxu0
  %v386 = vpop.f32.mrf.mxu0
  %v387 = vadd.f32 0.0, %v386
  %v388 = vpop.f32.mrf.mxu0
  %389 = vmatprep.mubr.bf16.mxu0 0
  %390 = vmatmul.mubr.bf16.gmra.mxu0 %v341
  %v391 = vpop.f32.mrf.mxu0
  %v392 = vadd.f32 0.0, %v391
  %v393 = vpop.f32.mrf.mxu0
  %v394 = vpop.f32.mrf.mxu0
  %v395 = vadd.f32 0.0, %v394
  %v396 = vpop.f32.mrf.mxu0
  %397 = vmatprep.mubr.bf16.mxu0 0
  %398 = vmatmul.mubr.bf16.gmra.mxu0 %v344
  %v399 = vpop.f32.mrf.mxu0
  %v400 = vadd.f32 0.0, %v399
  %v401 = vpop.f32.mrf.mxu0
  %v402 = vpop.f32.mrf.mxu0
  %v403 = vadd.f32 0.0, %v402
  %v404 = vpop.f32.mrf.mxu0
  %405 = vmatprep.mubr.bf16.mxu0 0
  %406 = vmatmul.mubr.bf16.gmra.mxu0 %v347
  %v407 = vpop.f32.mrf.mxu0
  %v408 = vadd.f32 0.0, %v407
  %v409 = vpop.f32.mrf.mxu0
  %v410 = vpop.f32.mrf.mxu0
  %v411 = vadd.f32 0.0, %v410
  %v412 = vpop.f32.mrf.mxu0
  %413 = vdwg.mxu0
  %v414 = vadd.f32 %v254, %v384
  %v415 = vadd.f32 %v257, %v387
  %v416 = vadd.f32 %v262, %v392
  %v417 = vadd.f32 %v265, %v395
  %v418 = vadd.f32 %v270, %v400
  %v419 = vadd.f32 %v273, %v403
  %v420 = vadd.f32 %v278, %v408
  %v421 = vadd.f32 %v281, %v411
  %v422 = vld [vmem:[%s3] sm:$0xf]
  %v423 = vld [vmem:[%s3 + $0x4] sm:$0xf]
  %v424 = vld [vmem:[%s3 + $0x8] sm:$0xf]
  %v425 = vld [vmem:[%s3 + $0xc] sm:$0xf]
  %v426 = vld [vmem:[%s3 + $0x10] sm:$0xf]
  %v427 = vld [vmem:[%s3 + $0x14] sm:$0xf]
  %v428 = vld [vmem:[%s3 + $0x18] sm:$0xf]
  %v429 = vld [vmem:[%s3 + $0x1c] sm:$0xf]
  %s430 = scalar_lea.vmem %s4, 72
  %v431 = vld [vmem:[%s430] sm:$0xf]
  %v432 = vld [vmem:[%s430 + $0x4] sm:$0xf]
  %v433 = vld [vmem:[%s430 + $0x8] sm:$0xf]
  %v434 = vld [vmem:[%s430 + $0xc] sm:$0xf]
  %v435 = vld [vmem:[%s430 + $0x10] sm:$0xf]
  %v436 = vld [vmem:[%s430 + $0x14] sm:$0xf]
  %v445 = vunpack.c.l.b16 %v422
  %v446 = vunpack.c.l.b16 %v423
  %v447 = vunpack.c.l.b16 %v424
  %v448 = vunpack.c.l.b16 %v425
  %v449 = vunpack.c.l.b16 %v426
  %v450 = vunpack.c.l.b16 %v427
  %v451 = vunpack.c.l.b16 %v428
  %v452 = vunpack.c.l.b16 %v429
  %v453 = vpack.c.b16 %v446, %v445
  %v454 = vpack.c.b16 %v448, %v447
  %v455 = vpack.c.b16 %v450, %v449
  %v456 = vpack.c.b16 %v452, %v451
  %v463 = vunpack.c.l.b16 %v431
  %v464 = vunpack.c.l.b16 %v432
  %v465 = vunpack.c.l.b16 %v433
  %v466 = vunpack.c.l.b16 %v434
  %v467 = vunpack.c.l.b16 %v435
  %v468 = vunpack.c.l.b16 %v436
  %v469 = vpack.c.b16 %v464, %v463
  %v470 = vpack.c.b16 %v466, %v465
  %v471 = vpack.c.b16 %v468, %v467
  %v476 = vsel %vm91, %v453, 0
  %v479 = vsel %vm91, %v454, 0
  %v482 = vsel %vm91, %v455, 0
  %v485 = vsel %vm91, %v456, 0
  %487 = vmatprep.subr.bf16.mxu0 0
  %488 = vmatpush1.bf16.msra.mxu0 0
  %489 = vmatprep.subr.bf16.mxu0 0
  %490 = vmatpush1.bf16.msra.mxu0 0
  %491 = vmatprep.subr.bf16.mxu0 0
  %492 = vmatpush1.bf16.msra.mxu0 0
  %493 = vmatprep.subr.bf16.mxu0 0
  %494 = vmatpush1.bf16.msra.mxu0 0
  %495 = vmatprep.subr.bf16.mxu0 0
  %496 = vmatpush1.bf16.msra.mxu0 0
  %497 = vmatprep.subr.bf16.mxu0 0
  %498 = vmatpush1.bf16.msra.mxu0 %v471
  %499 = vmatprep.subr.bf16.mxu0 0
  %500 = vmatpush1.bf16.msra.mxu0 %v470
  %501 = vmatprep.subr.bf16.mxu0 0
  %502 = vmatpush1.bf16.msra.mxu0 %v469
  %503 = vmatprep.subr.bf16.mxu0 0
  %504 = vmatpush2.bf16.msra.mxu0 0
  %505 = vmatprep.subr.bf16.mxu0 0
  %506 = vmatpush2.bf16.msra.mxu0 0
  %507 = vmatprep.subr.bf16.mxu0 0
  %508 = vmatpush2.bf16.msra.mxu0 0
  %509 = vmatprep.subr.bf16.mxu0 0
  %510 = vmatpush2.bf16.msra.mxu0 0
  %511 = vmatprep.subr.bf16.mxu0 0
  %512 = vmatpush2.bf16.msra.mxu0 0
  %513 = vmatprep.subr.bf16.mxu0 0
  %514 = vmatpush2.bf16.msra.mxu0 0
  %515 = vmatprep.subr.bf16.mxu0 0
  %516 = vmatpush2.bf16.msra.mxu0 0
  %517 = vmatprep.subr.bf16.mxu0 0
  %518 = vmatpush2.bf16.msra.mxu0 0
  %519 = vmatprep.mubr.bf16.mxu0 0
  %520 = vmatmul.mubr.bf16.gmra.mxu0 %v476
  %v521 = vpop.f32.mrf.mxu0
  %v522 = vadd.f32 0.0, %v521
  %v523 = vpop.f32.mrf.mxu0
  %v524 = vpop.f32.mrf.mxu0
  %v525 = vadd.f32 0.0, %v524
  %v526 = vpop.f32.mrf.mxu0
  %527 = vmatprep.mubr.bf16.mxu0 0
  %528 = vmatmul.mubr.bf16.gmra.mxu0 %v479
  %v529 = vpop.f32.mrf.mxu0
  %v530 = vadd.f32 0.0, %v529
  %v531 = vpop.f32.mrf.mxu0
  %v532 = vpop.f32.mrf.mxu0
  %v533 = vadd.f32 0.0, %v532
  %v534 = vpop.f32.mrf.mxu0
  %535 = vmatprep.mubr.bf16.mxu0 0
  %536 = vmatmul.mubr.bf16.gmra.mxu0 %v482
  %v537 = vpop.f32.mrf.mxu0
  %v538 = vadd.f32 0.0, %v537
  %v539 = vpop.f32.mrf.mxu0
  %v540 = vpop.f32.mrf.mxu0
  %v541 = vadd.f32 0.0, %v540
  %v542 = vpop.f32.mrf.mxu0
  %543 = vmatprep.mubr.bf16.mxu0 0
  %544 = vmatmul.mubr.bf16.gmra.mxu0 %v485
  %v545 = vpop.f32.mrf.mxu0
  %v546 = vadd.f32 0.0, %v545
  %v547 = vpop.f32.mrf.mxu0
  %v548 = vpop.f32.mrf.mxu0
  %v549 = vadd.f32 0.0, %v548
  %v550 = vpop.f32.mrf.mxu0
  %551 = vdwg.mxu0
  %v552 = vadd.f32 %v414, %v522
  %v553 = vadd.f32 %v415, %v525
  %v554 = vadd.f32 %v416, %v530
  %v555 = vadd.f32 %v417, %v533
  %v556 = vadd.f32 %v418, %v538
  %v557 = vadd.f32 %v419, %v541
  %v558 = vadd.f32 %v420, %v546
  %v559 = vadd.f32 %v421, %v549
  %v560 = vld [vmem:[%s5] sm:$0x1]
  %v562 = vlaneseq
  %v563 = vshrl.u32 %v562, 7
  %v564 = vsub.s32 0, %v563
  %v565 = vrot.slane %v560, %v564
  %v567 = vadd.f32 %v552, %v565
  %v568 = vadd.f32 %v553, %v565
  %v569 = vadd.f32 %v554, %v565
  %v570 = vadd.f32 %v555, %v565
  %v571 = vadd.f32 %v556, %v565
  %v572 = vadd.f32 %v557, %v565
  %v573 = vadd.f32 %v558, %v565
  %v574 = vadd.f32 %v559, %v565
  %v575 = vmul.f32 %v567, 0.01
  %v576 = vmul.f32 %v568, 0.01
  %v577 = vmul.f32 %v569, 0.01
  %v578 = vmul.f32 %v570, 0.01
  %v579 = vmul.f32 %v571, 0.01
  %v580 = vmul.f32 %v572, 0.01
  %v581 = vmul.f32 %v573, 0.01
  %v582 = vmul.f32 %v574, 0.01
  %v583 = vmax.f32 %v567, %v575
  %v584 = vmax.f32 %v568, %v576
  %v585 = vmax.f32 %v569, %v577
  %v586 = vmax.f32 %v570, %v578
  %v587 = vmax.f32 %v571, %v579
  %v588 = vmax.f32 %v572, %v580
  %v589 = vmax.f32 %v573, %v581
  %v590 = vmax.f32 %v574, %v582
  %v591 = vpack.c.bf16 %v584, %v583
  %v592 = vpack.c.bf16 %v586, %v585
  %v593 = vpack.c.bf16 %v588, %v587
  %v594 = vpack.c.bf16 %v590, %v589
  %v599 = vunpack.c.l.b16 %v591
  %v600 = vunpack.c.h.b16 %v591
  %v601 = vunpack.c.l.b16 %v592
  %v602 = vunpack.c.h.b16 %v592
  %v603 = vunpack.c.l.b16 %v593
  %v604 = vunpack.c.h.b16 %v593
  %v605 = vunpack.c.l.b16 %v594
  %v606 = vunpack.c.h.b16 %v594
  %v607 = vpack.c.b16 %v599, %v599
  %v608 = vpack.c.b16 %v600, %v600
  %v609 = vpack.c.b16 %v601, %v601
  %v610 = vpack.c.b16 %v602, %v602
  %v611 = vpack.c.b16 %v603, %v603
  %v612 = vpack.c.b16 %v604, %v604
  %v613 = vpack.c.b16 %v605, %v605
  %v614 = vpack.c.b16 %v606, %v606
  %623 = vst [vmem:[%s6] sm:$0xf] %v607
  %624 = vst [vmem:[%s6 + $0x4] sm:$0xf] %v608
  %625 = vst [vmem:[%s6 + $0x8] sm:$0xf] %v609
  %626 = vst [vmem:[%s6 + $0xc] sm:$0xf] %v610
  %627 = vst [vmem:[%s6 + $0x10] sm:$0xf] %v611
  %628 = vst [vmem:[%s6 + $0x14] sm:$0xf] %v612
  %629 = vst [vmem:[%s6 + $0x18] sm:$0xf] %v613
  %630 = vst [vmem:[%s6 + $0x1c] sm:$0xf] %v614
  // Predicated region
  $region26: #{decoder_forward.5} parent=0 // pred_check
    _
  $region27: #{decoder_forward.5} parent=0 // pred_check_branch
    %632 = sbr.rel (0) target = $region29
  $region28: #{decoder_forward.5} parent=0 // pred_region
    _
  $region29: #{decoder_forward.5} parent=0 // pred_fallthru
    _
  // Predicated region
  $region30: #{decoder_forward.5} parent=0 // pred_check
    _
  $region31: #{decoder_forward.5} parent=0 // pred_check_branch
    %634 = sbr.rel (0) target = $region33
  $region32: #{decoder_forward.5} parent=0 // pred_region
    _
  $region33: #{decoder_forward.5} parent=0 // pred_fallthru
    _

// kernel: decoder_forward.6
$region0: #{decoder_forward.6}
  #allocation0 [shape = 'u32[]', space=smem, size = 0x4, offset = 0x4, fixed_abs, tag = 'smem constant byte address 0x4 - core index']
  #allocation1 [shape = 'u32[144,128]{1,0:T(1,128)}', space=vmem, size = 0x12000, scoped, tag = 'internal scratch']
  %s0 = inlined_call_operand.vmem [shape: bf16[176,24], index: 0, kind: input, shape index: {}]
  %s1 = inlined_call_operand.vmem [shape: bf16[176,24], index: 1, kind: input, shape index: {}]
  %s2 = inlined_call_operand.vmem [shape: bf16[176,24], index: 2, kind: input, shape index: {}]
  %s3 = inlined_call_operand.vmem [shape: bf16[176,24], index: 3, kind: input, shape index: {}]
  %s4 = inlined_call_operand.vmem [shape: bf16[4,24,128], index: 4, kind: input, shape index: {}]
  %s5 = inlined_call_operand.vmem [shape: f32[1,128], index: 5, kind: input, shape index: {}]
  %s6 = inlined_call_operand.vmem [shape: bf16[176,128], index: 6, kind: output, shape index: {}]
  %s7 = sld [smem:[#allocation0]]
  $region34: #{decoder_forward.6} parent=0
    _
  %s9 = ssub.s32 1, %s7
  %s10 = scalar_select 0, %s9, %s7
  // Predicated region
  $region2: #{decoder_forward.6} parent=0 // pred_check
    _
  $region3: #{decoder_forward.6} parent=0 // pred_check_branch
    %12 = sbr.rel (0) target = $region5
  $region4: #{decoder_forward.6} parent=0 // pred_region
    _
  $region5: #{decoder_forward.6} parent=0 // pred_fallthru
    _
  // Predicated region
  $region6: #{decoder_forward.6} parent=0 // pred_check
    _
  $region7: #{decoder_forward.6} parent=0 // pred_check_branch
    %14 = sbr.rel (0) target = $region9
  $region8: #{decoder_forward.6} parent=0 // pred_region
    _
  $region9: #{decoder_forward.6} parent=0 // pred_fallthru
    _
  // Predicated region
  $region10: #{decoder_forward.6} parent=0 // pred_check
    _
  $region11: #{decoder_forward.6} parent=0 // pred_check_branch
    %16 = sbr.rel (0) target = $region13
  $region12: #{decoder_forward.6} parent=0 // pred_region
    _
  $region13: #{decoder_forward.6} parent=0 // pred_fallthru
    _
  // Predicated region
  $region14: #{decoder_forward.6} parent=0 // pred_check
    _
  $region15: #{decoder_forward.6} parent=0 // pred_check_branch
    %18 = sbr.rel (0) target = $region17
  $region16: #{decoder_forward.6} parent=0 // pred_region
    _
  $region17: #{decoder_forward.6} parent=0 // pred_fallthru
    _
  // Predicated region
  $region18: #{decoder_forward.6} parent=0 // pred_check
    _
  $region19: #{decoder_forward.6} parent=0 // pred_check_branch
    %20 = sbr.rel (0) target = $region21
  $region20: #{decoder_forward.6} parent=0 // pred_region
    _
  $region21: #{decoder_forward.6} parent=0 // pred_fallthru
    _
  // Predicated region
  $region22: #{decoder_forward.6} parent=0 // pred_check
    _
  $region23: #{decoder_forward.6} parent=0 // pred_check_branch
    %22 = sbr.rel (0) target = $region25
  $region24: #{decoder_forward.6} parent=0 // pred_region
    _
  $region25: #{decoder_forward.6} parent=0 // pred_fallthru
    _
  %v24 = vld [vmem:[%s0] sm:$0xf]
  %v25 = vld [vmem:[%s0 + $0x4] sm:$0xf]
  %v26 = vld [vmem:[%s0 + $0x8] sm:$0xf]
  %v27 = vld [vmem:[%s0 + $0xc] sm:$0xf]
  %v28 = vld [vmem:[%s0 + $0x10] sm:$0xf]
  %v29 = vld [vmem:[%s0 + $0x14] sm:$0xf]
  %v30 = vld [vmem:[%s0 + $0x18] sm:$0xf]
  %v31 = vld [vmem:[%s0 + $0x1c] sm:$0xf]
  %v32 = vld [vmem:[%s0 + $0x20] sm:$0xf]
  %v33 = vld [vmem:[%s0 + $0x24] sm:$0xf]
  %v34 = vld [vmem:[%s0 + $0x28] sm:$0xf]
  %v35 = vld [vmem:[%s0 + $0x2c] sm:$0xf]
  %v36 = vld [vmem:[%s0 + $0x30] sm:$0xf]
  %v37 = vld [vmem:[%s0 + $0x34] sm:$0xf]
  %v38 = vld [vmem:[%s0 + $0x38] sm:$0xf]
  %v39 = vld [vmem:[%s0 + $0x3c] sm:$0xf]
  %v40 = vld [vmem:[%s0 + $0x40] sm:$0xf]
  %v41 = vld [vmem:[%s0 + $0x44] sm:$0xf]
  %v42 = vld [vmem:[%s0 + $0x48] sm:$0xf]
  %v43 = vld [vmem:[%s0 + $0x4c] sm:$0xf]
  %v44 = vld [vmem:[%s0 + $0x50] sm:$0xf]
  %v45 = vld [vmem:[%s0 + $0x54] sm:$0xf]
  %v46 = vld [vmem:[%s4] sm:$0xf]
  %v47 = vld [vmem:[%s4 + $0x4] sm:$0xf]
  %v48 = vld [vmem:[%s4 + $0x8] sm:$0xf]
  %v49 = vld [vmem:[%s1] sm:$0xf]
  %v50 = vld [vmem:[%s1 + $0x4] sm:$0xf]
  %v51 = vld [vmem:[%s1 + $0x8] sm:$0xf]
  %v52 = vld [vmem:[%s1 + $0xc] sm:$0xf]
  %v53 = vld [vmem:[%s1 + $0x10] sm:$0xf]
  %v54 = vld [vmem:[%s1 + $0x14] sm:$0xf]
  %v55 = vld [vmem:[%s1 + $0x18] sm:$0xf]
  %v56 = vld [vmem:[%s1 + $0x1c] sm:$0xf]
  %v57 = vld [vmem:[%s1 + $0x20] sm:$0xf]
  %v58 = vld [vmem:[%s1 + $0x24] sm:$0xf]
  %v59 = vld [vmem:[%s1 + $0x28] sm:$0xf]
  %v60 = vld [vmem:[%s1 + $0x2c] sm:$0xf]
  %v61 = vld [vmem:[%s1 + $0x30] sm:$0xf]
  %v62 = vld [vmem:[%s1 + $0x34] sm:$0xf]
  %v63 = vld [vmem:[%s1 + $0x38] sm:$0xf]
  %v64 = vld [vmem:[%s1 + $0x3c] sm:$0xf]
  %v65 = vld [vmem:[%s1 + $0x40] sm:$0xf]
  %v66 = vld [vmem:[%s1 + $0x44] sm:$0xf]
  %v67 = vld [vmem:[%s1 + $0x48] sm:$0xf]
  %v68 = vld [vmem:[%s1 + $0x4c] sm:$0xf]
  %v69 = vld [vmem:[%s1 + $0x50] sm:$0xf]
  %v70 = vld [vmem:[%s1 + $0x54] sm:$0xf]
  %s71 = scalar_lea.vmem %s4, 12
  %v72 = vld [vmem:[%s71] sm:$0xf]
  %v73 = vld [vmem:[%s71 + $0x4] sm:$0xf]
  %v74 = vld [vmem:[%s71 + $0x8] sm:$0xf]
  %v97 = vunpack.c.l.b16 %v49
  %v98 = vunpack.c.l.b16 %v50
  %v99 = vunpack.c.l.b16 %v51
  %v100 = vunpack.c.l.b16 %v52
  %v101 = vunpack.c.l.b16 %v53
  %v102 = vunpack.c.l.b16 %v54
  %v103 = vunpack.c.l.b16 %v55
  %v104 = vunpack.c.l.b16 %v56
  %v105 = vunpack.c.l.b16 %v57
  %v106 = vunpack.c.l.b16 %v58
  %v107 = vunpack.c.l.b16 %v59
  %v108 = vunpack.c.l.b16 %v60
  %v109 = vunpack.c.l.b16 %v61
  %v110 = vunpack.c.l.b16 %v62
  %v111 = vunpack.c.l.b16 %v63
  %v112 = vunpack.c.l.b16 %v64
  %v113 = vunpack.c.l.b16 %v65
  %v114 = vunpack.c.l.b16 %v66
  %v115 = vunpack.c.l.b16 %v67
  %v116 = vunpack.c.l.b16 %v68
  %v117 = vunpack.c.l.b16 %v69
  %v118 = vunpack.c.l.b16 %v70
  %v119 = vpack.c.b16 %v98, %v97
  %v120 = vpack.c.b16 %v100, %v99
  %v121 = vpack.c.b16 %v102, %v101
  %v122 = vpack.c.b16 %v104, %v103
  %v123 = vpack.c.b16 %v106, %v105
  %v124 = vpack.c.b16 %v108, %v107
  %v125 = vpack.c.b16 %v110, %v109
  %v126 = vpack.c.b16 %v112, %v111
  %v127 = vpack.c.b16 %v114, %v113
  %v128 = vpack.c.b16 %v116, %v115
  %v129 = vpack.c.b16 %v118, %v117
  %v133 = vunpack.c.l.b16 %v72
  %v134 = vunpack.c.l.b16 %v73
  %v135 = vunpack.c.l.b16 %v74
  %v136 = vpack.c.b16 %v134, %v133
  %v137 = vpack.c.b16 %v135, %v135
  %vm139 = vcmask 195584
  %v141 = vsel %vm139, %v119, 0
  %v144 = vsel %vm139, %v120, 0
  %v147 = vsel %vm139, %v121, 0
  %v150 = vsel %vm139, %v122, 0
  %v153 = vsel %vm139, %v123, 0
  %v156 = vsel %vm139, %v124, 0
  %v159 = vsel %vm139, %v125, 0
  %v162 = vsel %vm139, %v126, 0
  %v165 = vsel %vm139, %v127, 0
  %v168 = vsel %vm139, %v128, 0
  %v171 = vsel %vm139, %v129, 0
  %vm173 = vcmask 1043456
  %v175 = vsel %vm173, %v137, 0
  %177 = vmatprep.subr.bf16.mxu0 0
  %178 = vmatpush1.bf16.msra.mxu0 0
  %179 = vmatprep.subr.bf16.mxu0 0
  %180 = vmatpush1.bf16.msra.mxu0 0
  %181 = vmatprep.subr.bf16.mxu0 0
  %182 = vmatpush1.bf16.msra.mxu0 0
  %183 = vmatprep.subr.bf16.mxu0 0
  %184 = vmatpush1.bf16.msra.mxu0 0
  %185 = vmatprep.subr.bf16.mxu0 0
  %186 = vmatpush1.bf16.msra.mxu0 0
  %187 = vmatprep.subr.bf16.mxu0 0
  %188 = vmatpush1.bf16.msra.mxu0 0
  %189 = vmatprep.subr.bf16.mxu0 0
  %190 = vmatpush1.bf16.msra.mxu0 %v175
  %191 = vmatprep.subr.bf16.mxu0 0
  %192 = vmatpush1.bf16.msra.mxu0 %v136
  %193 = vmatprep.subr.bf16.mxu0 0
  %194 = vmatpush2.bf16.msra.mxu0 0
  %195 = vmatprep.subr.bf16.mxu0 0
  %196 = vmatpush2.bf16.msra.mxu0 0
  %197 = vmatprep.subr.bf16.mxu0 0
  %198 = vmatpush2.bf16.msra.mxu0 0
  %199 = vmatprep.subr.bf16.mxu0 0
  %200 = vmatpush2.bf16.msra.mxu0 0
  %201 = vmatprep.subr.bf16.mxu0 0
  %202 = vmatpush2.bf16.msra.mxu0 0
  %203 = vmatprep.subr.bf16.mxu0 0
  %204 = vmatpush2.bf16.msra.mxu0 0
  %205 = vmatprep.subr.bf16.mxu0 0
  %206 = vmatpush2.bf16.msra.mxu0 0
  %207 = vmatprep.subr.bf16.mxu0 0
  %208 = vmatpush2.bf16.msra.mxu0 0
  %209 = vmatprep.mubr.bf16.mxu0 0
  %210 = vmatmul.mubr.bf16.gmra.mxu0 %v141
  %v211 = vpop.f32.mrf.mxu0
  %v212 = vadd.f32 0.0, %v211
  %v213 = vpop.f32.mrf.mxu0
  %v214 = vpop.f32.mrf.mxu0
  %v215 = vadd.f32 0.0, %v214
  %v216 = vpop.f32.mrf.mxu0
  %217 = vmatprep.mubr.bf16.mxu0 0
  %218 = vmatmul.mubr.bf16.gmra.mxu0 %v144
  %v219 = vpop.f32.mrf.mxu0
  %v220 = vadd.f32 0.0, %v219
  %v221 = vpop.f32.mrf.mxu0
  %v222 = vpop.f32.mrf.mxu0
  %v223 = vadd.f32 0.0, %v222
  %v224 = vpop.f32.mrf.mxu0
  %225 = vmatprep.mubr.bf16.mxu0 0
  %226 = vmatmul.mubr.bf16.gmra.mxu0 %v147
  %v227 = vpop.f32.mrf.mxu0
  %v228 = vadd.f32 0.0, %v227
  %v229 = vpop.f32.mrf.mxu0
  %v230 = vpop.f32.mrf.mxu0
  %v231 = vadd.f32 0.0, %v230
  %v232 = vpop.f32.mrf.mxu0
  %233 = vmatprep.mubr.bf16.mxu0 0
  %234 = vmatmul.mubr.bf16.gmra.mxu0 %v150
  %v235 = vpop.f32.mrf.mxu0
  %v236 = vadd.f32 0.0, %v235
  %v237 = vpop.f32.mrf.mxu0
  %v238 = vpop.f32.mrf.mxu0
  %v239 = vadd.f32 0.0, %v238
  %v240 = vpop.f32.mrf.mxu0
  %241 = vmatprep.mubr.bf16.mxu0 0
  %242 = vmatmul.mubr.bf16.gmra.mxu0 %v153
  %v243 = vpop.f32.mrf.mxu0
  %v244 = vadd.f32 0.0, %v243
  %v245 = vpop.f32.mrf.mxu0
  %v246 = vpop.f32.mrf.mxu0
  %v247 = vadd.f32 0.0, %v246
  %v248 = vpop.f32.mrf.mxu0
  %249 = vmatprep.mubr.bf16.mxu0 0
  %250 = vmatmul.mubr.bf16.gmra.mxu0 %v156
  %v251 = vpop.f32.mrf.mxu0
  %v252 = vadd.f32 0.0, %v251
  %v253 = vpop.f32.mrf.mxu0
  %v254 = vpop.f32.mrf.mxu0
  %v255 = vadd.f32 0.0, %v254
  %v256 = vpop.f32.mrf.mxu0
  %257 = vmatprep.mubr.bf16.mxu0 0
  %258 = vmatmul.mubr.bf16.gmra.mxu0 %v159
  %v259 = vpop.f32.mrf.mxu0
  %v260 = vadd.f32 0.0, %v259
  %v261 = vpop.f32.mrf.mxu0
  %v262 = vpop.f32.mrf.mxu0
  %v263 = vadd.f32 0.0, %v262
  %v264 = vpop.f32.mrf.mxu0
  %265 = vmatprep.mubr.bf16.mxu0 0
  %266 = vmatmul.mubr.bf16.gmra.mxu0 %v162
  %v267 = vpop.f32.mrf.mxu0
  %v268 = vadd.f32 0.0, %v267
  %v269 = vpop.f32.mrf.mxu0
  %v270 = vpop.f32.mrf.mxu0
  %v271 = vadd.f32 0.0, %v270
  %v272 = vpop.f32.mrf.mxu0
  %273 = vmatprep.mubr.bf16.mxu0 0
  %274 = vmatmul.mubr.bf16.gmra.mxu0 %v165
  %v275 = vpop.f32.mrf.mxu0
  %v276 = vadd.f32 0.0, %v275
  %v277 = vpop.f32.mrf.mxu0
  %v278 = vpop.f32.mrf.mxu0
  %v279 = vadd.f32 0.0, %v278
  %v280 = vpop.f32.mrf.mxu0
  %281 = vmatprep.mubr.bf16.mxu0 0
  %282 = vmatmul.mubr.bf16.gmra.mxu0 %v168
  %v283 = vpop.f32.mrf.mxu0
  %v284 = vadd.f32 0.0, %v283
  %v285 = vpop.f32.mrf.mxu0
  %v286 = vpop.f32.mrf.mxu0
  %v287 = vadd.f32 0.0, %v286
  %v288 = vpop.f32.mrf.mxu0
  %289 = vmatprep.mubr.bf16.mxu0 0
  %290 = vmatmul.mubr.bf16.gmra.mxu0 %v171
  %v291 = vpop.f32.mrf.mxu0
  %v292 = vadd.f32 0.0, %v291
  %v293 = vpop.f32.mrf.mxu0
  %v294 = vpop.f32.mrf.mxu0
  %v295 = vadd.f32 0.0, %v294
  %v296 = vpop.f32.mrf.mxu0
  %297 = vdwg.mxu0
  %v320 = vunpack.c.l.b16 %v24
  %v321 = vunpack.c.l.b16 %v25
  %v322 = vunpack.c.l.b16 %v26
  %v323 = vunpack.c.l.b16 %v27
  %v324 = vunpack.c.l.b16 %v28
  %v325 = vunpack.c.l.b16 %v29
  %v326 = vunpack.c.l.b16 %v30
  %v327 = vunpack.c.l.b16 %v31
  %v328 = vunpack.c.l.b16 %v32
  %v329 = vunpack.c.l.b16 %v33
  %v330 = vunpack.c.l.b16 %v34
  %v331 = vunpack.c.l.b16 %v35
  %v332 = vunpack.c.l.b16 %v36
  %v333 = vunpack.c.l.b16 %v37
  %v334 = vunpack.c.l.b16 %v38
  %v335 = vunpack.c.l.b16 %v39
  %v336 = vunpack.c.l.b16 %v40
  %v337 = vunpack.c.l.b16 %v41
  %v338 = vunpack.c.l.b16 %v42
  %v339 = vunpack.c.l.b16 %v43
  %v340 = vunpack.c.l.b16 %v44
  %v341 = vunpack.c.l.b16 %v45
  %v342 = vpack.c.b16 %v321, %v320
  %v343 = vpack.c.b16 %v323, %v322
  %v344 = vpack.c.b16 %v325, %v324
  %v345 = vpack.c.b16 %v327, %v326
  %v346 = vpack.c.b16 %v329, %v328
  %v347 = vpack.c.b16 %v331, %v330
  %v348 = vpack.c.b16 %v333, %v332
  %v349 = vpack.c.b16 %v335, %v334
  %v350 = vpack.c.b16 %v337, %v336
  %v351 = vpack.c.b16 %v339, %v338
  %v352 = vpack.c.b16 %v341, %v340
  %v356 = vunpack.c.l.b16 %v46
  %v357 = vunpack.c.l.b16 %v47
  %v358 = vunpack.c.l.b16 %v48
  %v359 = vpack.c.b16 %v357, %v356
  %v360 = vpack.c.b16 %v358, %v358
  %v363 = vsel %vm139, %v342, 0
  %v366 = vsel %vm139, %v343, 0
  %v369 = vsel %vm139, %v344, 0
  %v372 = vsel %vm139, %v345, 0
  %v375 = vsel %vm139, %v346, 0
  %v378 = vsel %vm139, %v347, 0
  %v381 = vsel %vm139, %v348, 0
  %v384 = vsel %vm139, %v349, 0
  %v387 = vsel %vm139, %v350, 0
  %v390 = vsel %vm139, %v351, 0
  %v393 = vsel %vm139, %v352, 0
  %v396 = vsel %vm173, %v360, 0
  %398 = vmatprep.subr.bf16.mxu0 0
  %399 = vmatpush1.bf16.msra.mxu0 0
  %400 = vmatprep.subr.bf16.mxu0 0
  %401 = vmatpush1.bf16.msra.mxu0 0
  %402 = vmatprep.subr.bf16.mxu0 0
  %403 = vmatpush1.bf16.msra.mxu0 0
  %404 = vmatprep.subr.bf16.mxu0 0
  %405 = vmatpush1.bf16.msra.mxu0 0
  %406 = vmatprep.subr.bf16.mxu0 0
  %407 = vmatpush1.bf16.msra.mxu0 0
  %408 = vmatprep.subr.bf16.mxu0 0
  %409 = vmatpush1.bf16.msra.mxu0 0
  %410 = vmatprep.subr.bf16.mxu0 0
  %411 = vmatpush1.bf16.msra.mxu0 %v396
  %412 = vmatprep.subr.bf16.mxu0 0
  %413 = vmatpush1.bf16.msra.mxu0 %v359
  %414 = vmatprep.subr.bf16.mxu0 0
  %415 = vmatpush2.bf16.msra.mxu0 0
  %416 = vmatprep.subr.bf16.mxu0 0
  %417 = vmatpush2.bf16.msra.mxu0 0
  %418 = vmatprep.subr.bf16.mxu0 0
  %419 = vmatpush2.bf16.msra.mxu0 0
  %420 = vmatprep.subr.bf16.mxu0 0
  %421 = vmatpush2.bf16.msra.mxu0 0
  %422 = vmatprep.subr.bf16.mxu0 0
  %423 = vmatpush2.bf16.msra.mxu0 0
  %424 = vmatprep.subr.bf16.mxu0 0
  %425 = vmatpush2.bf16.msra.mxu0 0
  %426 = vmatprep.subr.bf16.mxu0 0
  %427 = vmatpush2.bf16.msra.mxu0 0
  %428 = vmatprep.subr.bf16.mxu0 0
  %429 = vmatpush2.bf16.msra.mxu0 0
  %430 = vmatprep.mubr.bf16.mxu0 0
  %431 = vmatmul.mubr.bf16.gmra.mxu0 %v363
  %v432 = vpop.f32.mrf.mxu0
  %v433 = vadd.f32 %v212, %v432
  %v434 = vpop.f32.mrf.mxu0
  %v435 = vpop.f32.mrf.mxu0
  %v436 = vadd.f32 %v215, %v435
  %v437 = vpop.f32.mrf.mxu0
  %438 = vmatprep.mubr.bf16.mxu0 0
  %439 = vmatmul.mubr.bf16.gmra.mxu0 %v366
  %v440 = vpop.f32.mrf.mxu0
  %v441 = vadd.f32 %v220, %v440
  %v442 = vpop.f32.mrf.mxu0
  %v443 = vpop.f32.mrf.mxu0
  %v444 = vadd.f32 %v223, %v443
  %v445 = vpop.f32.mrf.mxu0
  %446 = vmatprep.mubr.bf16.mxu0 0
  %447 = vmatmul.mubr.bf16.gmra.mxu0 %v369
  %v448 = vpop.f32.mrf.mxu0
  %v449 = vadd.f32 %v228, %v448
  %v450 = vpop.f32.mrf.mxu0
  %v451 = vpop.f32.mrf.mxu0
  %v452 = vadd.f32 %v231, %v451
  %v453 = vpop.f32.mrf.mxu0
  %454 = vmatprep.mubr.bf16.mxu0 0
  %455 = vmatmul.mubr.bf16.gmra.mxu0 %v372
  %v456 = vpop.f32.mrf.mxu0
  %v457 = vadd.f32 %v236, %v456
  %v458 = vpop.f32.mrf.mxu0
  %v459 = vpop.f32.mrf.mxu0
  %v460 = vadd.f32 %v239, %v459
  %v461 = vpop.f32.mrf.mxu0
  %462 = vmatprep.mubr.bf16.mxu0 0
  %463 = vmatmul.mubr.bf16.gmra.mxu0 %v375
  %v464 = vpop.f32.mrf.mxu0
  %v465 = vadd.f32 %v244, %v464
  %v466 = vpop.f32.mrf.mxu0
  %v467 = vpop.f32.mrf.mxu0
  %v468 = vadd.f32 %v247, %v467
  %v469 = vpop.f32.mrf.mxu0
  %470 = vmatprep.mubr.bf16.mxu0 0
  %471 = vmatmul.mubr.bf16.gmra.mxu0 %v378
  %v472 = vpop.f32.mrf.mxu0
  %v473 = vadd.f32 %v252, %v472
  %v474 = vpop.f32.mrf.mxu0
  %v475 = vpop.f32.mrf.mxu0
  %v476 = vadd.f32 %v255, %v475
  %v477 = vpop.f32.mrf.mxu0
  %478 = vmatprep.mubr.bf16.mxu0 0
  %479 = vmatmul.mubr.bf16.gmra.mxu0 %v381
  %v480 = vpop.f32.mrf.mxu0
  %v481 = vadd.f32 %v260, %v480
  %v482 = vpop.f32.mrf.mxu0
  %v483 = vpop.f32.mrf.mxu0
  %v484 = vadd.f32 %v263, %v483
  %v485 = vpop.f32.mrf.mxu0
  %486 = vmatprep.mubr.bf16.mxu0 0
  %487 = vmatmul.mubr.bf16.gmra.mxu0 %v384
  %v488 = vpop.f32.mrf.mxu0
  %v489 = vadd.f32 %v268, %v488
  %v490 = vpop.f32.mrf.mxu0
  %v491 = vpop.f32.mrf.mxu0
  %v492 = vadd.f32 %v271, %v491
  %v493 = vpop.f32.mrf.mxu0
  %494 = vmatprep.mubr.bf16.mxu0 0
  %495 = vmatmul.mubr.bf16.gmra.mxu0 %v387
  %v496 = vpop.f32.mrf.mxu0
  %v497 = vadd.f32 %v276, %v496
  %v498 = vpop.f32.mrf.mxu0
  %v499 = vpop.f32.mrf.mxu0
  %v500 = vadd.f32 %v279, %v499
  %v501 = vpop.f32.mrf.mxu0
  %502 = vmatprep.mubr.bf16.mxu0 0
  %503 = vmatmul.mubr.bf16.gmra.mxu0 %v390
  %v504 = vpop.f32.mrf.mxu0
  %v505 = vadd.f32 %v284, %v504
  %v506 = vpop.f32.mrf.mxu0
  %v507 = vpop.f32.mrf.mxu0
  %v508 = vadd.f32 %v287, %v507
  %v509 = vpop.f32.mrf.mxu0
  %510 = vmatprep.mubr.bf16.mxu0 0
  %511 = vmatmul.mubr.bf16.gmra.mxu0 %v393
  %v512 = vpop.f32.mrf.mxu0
  %v513 = vadd.f32 %v292, %v512
  %v514 = vpop.f32.mrf.mxu0
  %v515 = vpop.f32.mrf.mxu0
  %v516 = vadd.f32 %v295, %v515
  %v517 = vpop.f32.mrf.mxu0
  %518 = vdwg.mxu0
  %v519 = vld [vmem:[%s2] sm:$0xf]
  %v520 = vld [vmem:[%s2 + $0x4] sm:$0xf]
  %v521 = vld [vmem:[%s2 + $0x8] sm:$0xf]
  %v522 = vld [vmem:[%s2 + $0xc] sm:$0xf]
  %v523 = vld [vmem:[%s2 + $0x10] sm:$0xf]
  %v524 = vld [vmem:[%s2 + $0x14] sm:$0xf]
  %v525 = vld [vmem:[%s2 + $0x18] sm:$0xf]
  %v526 = vld [vmem:[%s2 + $0x1c] sm:$0xf]
  %v527 = vld [vmem:[%s2 + $0x20] sm:$0xf]
  %v528 = vld [vmem:[%s2 + $0x24] sm:$0xf]
  %v529 = vld [vmem:[%s2 + $0x28] sm:$0xf]
  %v530 = vld [vmem:[%s2 + $0x2c] sm:$0xf]
  %v531 = vld [vmem:[%s2 + $0x30] sm:$0xf]
  %v532 = vld [vmem:[%s2 + $0x34] sm:$0xf]
  %v533 = vld [vmem:[%s2 + $0x38] sm:$0xf]
  %v534 = vld [vmem:[%s2 + $0x3c] sm:$0xf]
  %v535 = vld [vmem:[%s2 + $0x40] sm:$0xf]
  %v536 = vld [vmem:[%s2 + $0x44] sm:$0xf]
  %v537 = vld [vmem:[%s2 + $0x48] sm:$0xf]
  %v538 = vld [vmem:[%s2 + $0x4c] sm:$0xf]
  %v539 = vld [vmem:[%s2 + $0x50] sm:$0xf]
  %v540 = vld [vmem:[%s2 + $0x54] sm:$0xf]
  %s541 = scalar_lea.vmem %s4, 24
  %v542 = vld [vmem:[%s541] sm:$0xf]
  %v543 = vld [vmem:[%s541 + $0x4] sm:$0xf]
  %v544 = vld [vmem:[%s541 + $0x8] sm:$0xf]
  %v567 = vunpack.c.l.b16 %v519
  %v568 = vunpack.c.l.b16 %v520
  %v569 = vunpack.c.l.b16 %v521
  %v570 = vunpack.c.l.b16 %v522
  %v571 = vunpack.c.l.b16 %v523
  %v572 = vunpack.c.l.b16 %v524
  %v573 = vunpack.c.l.b16 %v525
  %v574 = vunpack.c.l.b16 %v526
  %v575 = vunpack.c.l.b16 %v527
  %v576 = vunpack.c.l.b16 %v528
  %v577 = vunpack.c.l.b16 %v529
  %v578 = vunpack.c.l.b16 %v530
  %v579 = vunpack.c.l.b16 %v531
  %v580 = vunpack.c.l.b16 %v532
  %v581 = vunpack.c.l.b16 %v533
  %v582 = vunpack.c.l.b16 %v534
  %v583 = vunpack.c.l.b16 %v535
  %v584 = vunpack.c.l.b16 %v536
  %v585 = vunpack.c.l.b16 %v537
  %v586 = vunpack.c.l.b16 %v538
  %v587 = vunpack.c.l.b16 %v539
  %v588 = vunpack.c.l.b16 %v540
  %v589 = vpack.c.b16 %v568, %v567
  %v590 = vpack.c.b16 %v570, %v569
  %v591 = vpack.c.b16 %v572, %v571
  %v592 = vpack.c.b16 %v574, %v573
  %v593 = vpack.c.b16 %v576, %v575
  %v594 = vpack.c.b16 %v578, %v577
  %v595 = vpack.c.b16 %v580, %v579
  %v596 = vpack.c.b16 %v582, %v581
  %v597 = vpack.c.b16 %v584, %v583
  %v598 = vpack.c.b16 %v586, %v585
  %v599 = vpack.c.b16 %v588, %v587
  %v603 = vunpack.c.l.b16 %v542
  %v604 = vunpack.c.l.b16 %v543
  %v605 = vunpack.c.l.b16 %v544
  %v606 = vpack.c.b16 %v604, %v603
  %v607 = vpack.c.b16 %v605, %v605
  %v610 = vsel %vm139, %v589, 0
  %v613 = vsel %vm139, %v590, 0
  %v616 = vsel %vm139, %v591, 0
  %v619 = vsel %vm139, %v592, 0
  %v622 = vsel %vm139, %v593, 0
  %v625 = vsel %vm139, %v594, 0
  %v628 = vsel %vm139, %v595, 0
  %v631 = vsel %vm139, %v596, 0
  %v634 = vsel %vm139, %v597, 0
  %v637 = vsel %vm139, %v598, 0
  %v640 = vsel %vm139, %v599, 0
  %v643 = vsel %vm173, %v607, 0
  %645 = vmatprep.subr.bf16.mxu0 0
  %646 = vmatpush1.bf16.msra.mxu0 0
  %647 = vmatprep.subr.bf16.mxu0 0
  %648 = vmatpush1.bf16.msra.mxu0 0
  %649 = vmatprep.subr.bf16.mxu0 0
  %650 = vmatpush1.bf16.msra.mxu0 0
  %651 = vmatprep.subr.bf16.mxu0 0
  %652 = vmatpush1.bf16.msra.mxu0 0
  %653 = vmatprep.subr.bf16.mxu0 0
  %654 = vmatpush1.bf16.msra.mxu0 0
  %655 = vmatprep.subr.bf16.mxu0 0
  %656 = vmatpush1.bf16.msra.mxu0 0
  %657 = vmatprep.subr.bf16.mxu0 0
  %658 = vmatpush1.bf16.msra.mxu0 %v643
  %659 = vmatprep.subr.bf16.mxu0 0
  %660 = vmatpush1.bf16.msra.mxu0 %v606
  %661 = vmatprep.subr.bf16.mxu0 0
  %662 = vmatpush2.bf16.msra.mxu0 0
  %663 = vmatprep.subr.bf16.mxu0 0
  %664 = vmatpush2.bf16.msra.mxu0 0
  %665 = vmatprep.subr.bf16.mxu0 0
  %666 = vmatpush2.bf16.msra.mxu0 0
  %667 = vmatprep.subr.bf16.mxu0 0
  %668 = vmatpush2.bf16.msra.mxu0 0
  %669 = vmatprep.subr.bf16.mxu0 0
  %670 = vmatpush2.bf16.msra.mxu0 0
  %671 = vmatprep.subr.bf16.mxu0 0
  %672 = vmatpush2.bf16.msra.mxu0 0
  %673 = vmatprep.subr.bf16.mxu0 0
  %674 = vmatpush2.bf16.msra.mxu0 0
  %675 = vmatprep.subr.bf16.mxu0 0
  %676 = vmatpush2.bf16.msra.mxu0 0
  %677 = vmatprep.mubr.bf16.mxu0 0
  %678 = vmatmul.mubr.bf16.gmra.mxu0 %v610
  %v679 = vpop.f32.mrf.mxu0
  %v680 = vadd.f32 0.0, %v679
  %v681 = vpop.f32.mrf.mxu0
  %v682 = vpop.f32.mrf.mxu0
  %v683 = vadd.f32 0.0, %v682
  %v684 = vpop.f32.mrf.mxu0
  %685 = vmatprep.mubr.bf16.mxu0 0
  %686 = vmatmul.mubr.bf16.gmra.mxu0 %v613
  %v687 = vpop.f32.mrf.mxu0
  %v688 = vadd.f32 0.0, %v687
  %v689 = vpop.f32.mrf.mxu0
  %v690 = vpop.f32.mrf.mxu0
  %v691 = vadd.f32 0.0, %v690
  %v692 = vpop.f32.mrf.mxu0
  %693 = vmatprep.mubr.bf16.mxu0 0
  %694 = vmatmul.mubr.bf16.gmra.mxu0 %v616
  %v695 = vpop.f32.mrf.mxu0
  %v696 = vadd.f32 0.0, %v695
  %v697 = vpop.f32.mrf.mxu0
  %v698 = vpop.f32.mrf.mxu0
  %v699 = vadd.f32 0.0, %v698
  %v700 = vpop.f32.mrf.mxu0
  %701 = vmatprep.mubr.bf16.mxu0 0
  %702 = vmatmul.mubr.bf16.gmra.mxu0 %v619
  %v703 = vpop.f32.mrf.mxu0
  %v704 = vadd.f32 0.0, %v703
  %v705 = vpop.f32.mrf.mxu0
  %v706 = vpop.f32.mrf.mxu0
  %v707 = vadd.f32 0.0, %v706
  %v708 = vpop.f32.mrf.mxu0
  %709 = vmatprep.mubr.bf16.mxu0 0
  %710 = vmatmul.mubr.bf16.gmra.mxu0 %v622
  %v711 = vpop.f32.mrf.mxu0
  %v712 = vadd.f32 0.0, %v711
  %v713 = vpop.f32.mrf.mxu0
  %v714 = vpop.f32.mrf.mxu0
  %v715 = vadd.f32 0.0, %v714
  %v716 = vpop.f32.mrf.mxu0
  %717 = vmatprep.mubr.bf16.mxu0 0
  %718 = vmatmul.mubr.bf16.gmra.mxu0 %v625
  %v719 = vpop.f32.mrf.mxu0
  %v720 = vadd.f32 0.0, %v719
  %v721 = vpop.f32.mrf.mxu0
  %v722 = vpop.f32.mrf.mxu0
  %v723 = vadd.f32 0.0, %v722
  %v724 = vpop.f32.mrf.mxu0
  %725 = vmatprep.mubr.bf16.mxu0 0
  %726 = vmatmul.mubr.bf16.gmra.mxu0 %v628
  %v727 = vpop.f32.mrf.mxu0
  %v728 = vadd.f32 0.0, %v727
  %v729 = vpop.f32.mrf.mxu0
  %v730 = vpop.f32.mrf.mxu0
  %v731 = vadd.f32 0.0, %v730
  %v732 = vpop.f32.mrf.mxu0
  %733 = vmatprep.mubr.bf16.mxu0 0
  %734 = vmatmul.mubr.bf16.gmra.mxu0 %v631
  %v735 = vpop.f32.mrf.mxu0
  %v736 = vadd.f32 0.0, %v735
  %v737 = vpop.f32.mrf.mxu0
  %v738 = vpop.f32.mrf.mxu0
  %v739 = vadd.f32 0.0, %v738
  %v740 = vpop.f32.mrf.mxu0
  %741 = vmatprep.mubr.bf16.mxu0 0
  %742 = vmatmul.mubr.bf16.gmra.mxu0 %v634
  %v743 = vpop.f32.mrf.mxu0
  %v744 = vadd.f32 0.0, %v743
  %v745 = vpop.f32.mrf.mxu0
  %v746 = vpop.f32.mrf.mxu0
  %v747 = vadd.f32 0.0, %v746
  %v748 = vpop.f32.mrf.mxu0
  %749 = vmatprep.mubr.bf16.mxu0 0
  %750 = vmatmul.mubr.bf16.gmra.mxu0 %v637
  %v751 = vpop.f32.mrf.mxu0
  %v752 = vadd.f32 0.0, %v751
  %v753 = vpop.f32.mrf.mxu0
  %v754 = vpop.f32.mrf.mxu0
  %v755 = vadd.f32 0.0, %v754
  %v756 = vpop.f32.mrf.mxu0
  %757 = vmatprep.mubr.bf16.mxu0 0
  %758 = vmatmul.mubr.bf16.gmra.mxu0 %v640
  %v759 = vpop.f32.mrf.mxu0
  %v760 = vadd.f32 0.0, %v759
  %v761 = vpop.f32.mrf.mxu0
  %v762 = vpop.f32.mrf.mxu0
  %v763 = vadd.f32 0.0, %v762
  %v764 = vpop.f32.mrf.mxu0
  %765 = vdwg.mxu0
  %v766 = vadd.f32 %v433, %v680
  %v767 = vadd.f32 %v436, %v683
  %v768 = vadd.f32 %v441, %v688
  %v769 = vadd.f32 %v444, %v691
  %v770 = vadd.f32 %v449, %v696
  %v771 = vadd.f32 %v452, %v699
  %v772 = vadd.f32 %v457, %v704
  %v773 = vadd.f32 %v460, %v707
  %v774 = vadd.f32 %v465, %v712
  %v775 = vadd.f32 %v468, %v715
  %v776 = vadd.f32 %v473, %v720
  %v777 = vadd.f32 %v476, %v723
  %v778 = vadd.f32 %v481, %v728
  %v779 = vadd.f32 %v484, %v731
  %v780 = vadd.f32 %v489, %v736
  %v781 = vadd.f32 %v492, %v739
  %v782 = vadd.f32 %v497, %v744
  %v783 = vadd.f32 %v500, %v747
  %v784 = vadd.f32 %v505, %v752
  %v785 = vadd.f32 %v508, %v755
  %v786 = vadd.f32 %v513, %v760
  %v787 = vadd.f32 %v516, %v763
  %v788 = vld [vmem:[%s3] sm:$0xf]
  %v789 = vld [vmem:[%s3 + $0x4] sm:$0xf]
  %v790 = vld [vmem:[%s3 + $0x8] sm:$0xf]
  %v791 = vld [vmem:[%s3 + $0xc] sm:$0xf]
  %v792 = vld [vmem:[%s3 + $0x10] sm:$0xf]
  %v793 = vld [vmem:[%s3 + $0x14] sm:$0xf]
  %v794 = vld [vmem:[%s3 + $0x18] sm:$0xf]
  %v795 = vld [vmem:[%s3 + $0x1c] sm:$0xf]
  %v796 = vld [vmem:[%s3 + $0x20] sm:$0xf]
  %v797 = vld [vmem:[%s3 + $0x24] sm:$0xf]
  %v798 = vld [vmem:[%s3 + $0x28] sm:$0xf]
  %v799 = vld [vmem:[%s3 + $0x2c] sm:$0xf]
  %v800 = vld [vmem:[%s3 + $0x30] sm:$0xf]
  %v801 = vld [vmem:[%s3 + $0x34] sm:$0xf]
  %v802 = vld [vmem:[%s3 + $0x38] sm:$0xf]
  %v803 = vld [vmem:[%s3 + $0x3c] sm:$0xf]
  %v804 = vld [vmem:[%s3 + $0x40] sm:$0xf]
  %v805 = vld [vmem:[%s3 + $0x44] sm:$0xf]
  %v806 = vld [vmem:[%s3 + $0x48] sm:$0xf]
  %v807 = vld [vmem:[%s3 + $0x4c] sm:$0xf]
  %v808 = vld [vmem:[%s3 + $0x50] sm:$0xf]
  %v809 = vld [vmem:[%s3 + $0x54] sm:$0xf]
  %s810 = scalar_lea.vmem %s4, 36
  %v811 = vld [vmem:[%s810] sm:$0xf]
  %v812 = vld [vmem:[%s810 + $0x4] sm:$0xf]
  %v813 = vld [vmem:[%s810 + $0x8] sm:$0xf]
  %v836 = vunpack.c.l.b16 %v788
  %v837 = vunpack.c.l.b16 %v789
  %v838 = vunpack.c.l.b16 %v790
  %v839 = vunpack.c.l.b16 %v791
  %v840 = vunpack.c.l.b16 %v792
  %v841 = vunpack.c.l.b16 %v793
  %v842 = vunpack.c.l.b16 %v794
  %v843 = vunpack.c.l.b16 %v795
  %v844 = vunpack.c.l.b16 %v796
  %v845 = vunpack.c.l.b16 %v797
  %v846 = vunpack.c.l.b16 %v798
  %v847 = vunpack.c.l.b16 %v799
  %v848 = vunpack.c.l.b16 %v800
  %v849 = vunpack.c.l.b16 %v801
  %v850 = vunpack.c.l.b16 %v802
  %v851 = vunpack.c.l.b16 %v803
  %v852 = vunpack.c.l.b16 %v804
  %v853 = vunpack.c.l.b16 %v805
  %v854 = vunpack.c.l.b16 %v806
  %v855 = vunpack.c.l.b16 %v807
  %v856 = vunpack.c.l.b16 %v808
  %v857 = vunpack.c.l.b16 %v809
  %v858 = vpack.c.b16 %v837, %v836
  %v859 = vpack.c.b16 %v839, %v838
  %v860 = vpack.c.b16 %v841, %v840
  %v861 = vpack.c.b16 %v843, %v842
  %v862 = vpack.c.b16 %v845, %v844
  %v863 = vpack.c.b16 %v847, %v846
  %v864 = vpack.c.b16 %v849, %v848
  %v865 = vpack.c.b16 %v851, %v850
  %v866 = vpack.c.b16 %v853, %v852
  %v867 = vpack.c.b16 %v855, %v854
  %v868 = vpack.c.b16 %v857, %v856
  %v872 = vunpack.c.l.b16 %v811
  %v873 = vunpack.c.l.b16 %v812
  %v874 = vunpack.c.l.b16 %v813
  %v875 = vpack.c.b16 %v873, %v872
  %v876 = vpack.c.b16 %v874, %v874
  %v879 = vsel %vm139, %v858, 0
  %v882 = vsel %vm139, %v859, 0
  %v885 = vsel %vm139, %v860, 0
  %v888 = vsel %vm139, %v861, 0
  %v891 = vsel %vm139, %v862, 0
  %v894 = vsel %vm139, %v863, 0
  %v897 = vsel %vm139, %v864, 0
  %v900 = vsel %vm139, %v865, 0
  %v903 = vsel %vm139, %v866, 0
  %v906 = vsel %vm139, %v867, 0
  %v909 = vsel %vm139, %v868, 0
  %v912 = vsel %vm173, %v876, 0
  %914 = vmatprep.subr.bf16.mxu0 0
  %915 = vmatpush1.bf16.msra.mxu0 0
  %916 = vmatprep.subr.bf16.mxu0 0
  %917 = vmatpush1.bf16.msra.mxu0 0
  %918 = vmatprep.subr.bf16.mxu0 0
  %919 = vmatpush1.bf16.msra.mxu0 0
  %920 = vmatprep.subr.bf16.mxu0 0
  %921 = vmatpush1.bf16.msra.mxu0 0
  %922 = vmatprep.subr.bf16.mxu0 0
  %923 = vmatpush1.bf16.msra.mxu0 0
  %924 = vmatprep.subr.bf16.mxu0 0
  %925 = vmatpush1.bf16.msra.mxu0 0
  %926 = vmatprep.subr.bf16.mxu0 0
  %927 = vmatpush1.bf16.msra.mxu0 %v912
  %928 = vmatprep.subr.bf16.mxu0 0
  %929 = vmatpush1.bf16.msra.mxu0 %v875
  %930 = vmatprep.subr.bf16.mxu0 0
  %931 = vmatpush2.bf16.msra.mxu0 0
  %932 = vmatprep.subr.bf16.mxu0 0
  %933 = vmatpush2.bf16.msra.mxu0 0
  %934 = vmatprep.subr.bf16.mxu0 0
  %935 = vmatpush2.bf16.msra.mxu0 0
  %936 = vmatprep.subr.bf16.mxu0 0
  %937 = vmatpush2.bf16.msra.mxu0 0
  %938 = vmatprep.subr.bf16.mxu0 0
  %939 = vmatpush2.bf16.msra.mxu0 0
  %940 = vmatprep.subr.bf16.mxu0 0
  %941 = vmatpush2.bf16.msra.mxu0 0
  %942 = vmatprep.subr.bf16.mxu0 0
  %943 = vmatpush2.bf16.msra.mxu0 0
  %944 = vmatprep.subr.bf16.mxu0 0
  %945 = vmatpush2.bf16.msra.mxu0 0
  %946 = vmatprep.mubr.bf16.mxu0 0
  %947 = vmatmul.mubr.bf16.gmra.mxu0 %v879
  %v948 = vpop.f32.mrf.mxu0
  %v949 = vadd.f32 0.0, %v948
  %v950 = vpop.f32.mrf.mxu0
  %v951 = vpop.f32.mrf.mxu0
  %v952 = vadd.f32 0.0, %v951
  %v953 = vpop.f32.mrf.mxu0
  %954 = vmatprep.mubr.bf16.mxu0 0
  %955 = vmatmul.mubr.bf16.gmra.mxu0 %v882
  %v956 = vpop.f32.mrf.mxu0
  %v957 = vadd.f32 0.0, %v956
  %v958 = vpop.f32.mrf.mxu0
  %v959 = vpop.f32.mrf.mxu0
  %v960 = vadd.f32 0.0, %v959
  %v961 = vpop.f32.mrf.mxu0
  %962 = vmatprep.mubr.bf16.mxu0 0
  %963 = vmatmul.mubr.bf16.gmra.mxu0 %v885
  %v964 = vpop.f32.mrf.mxu0
  %v965 = vadd.f32 0.0, %v964
  %v966 = vpop.f32.mrf.mxu0
  %v967 = vpop.f32.mrf.mxu0
  %v968 = vadd.f32 0.0, %v967
  %v969 = vpop.f32.mrf.mxu0
  %970 = vmatprep.mubr.bf16.mxu0 0
  %971 = vmatmul.mubr.bf16.gmra.mxu0 %v888
  %v972 = vpop.f32.mrf.mxu0
  %v973 = vadd.f32 0.0, %v972
  %v974 = vpop.f32.mrf.mxu0
  %v975 = vpop.f32.mrf.mxu0
  %v976 = vadd.f32 0.0, %v975
  %v977 = vpop.f32.mrf.mxu0
  %978 = vmatprep.mubr.bf16.mxu0 0
  %979 = vmatmul.mubr.bf16.gmra.mxu0 %v891
  %v980 = vpop.f32.mrf.mxu0
  %v981 = vadd.f32 0.0, %v980
  %v982 = vpop.f32.mrf.mxu0
  %v983 = vpop.f32.mrf.mxu0
  %v984 = vadd.f32 0.0, %v983
  %v985 = vpop.f32.mrf.mxu0
  %986 = vmatprep.mubr.bf16.mxu0 0
  %987 = vmatmul.mubr.bf16.gmra.mxu0 %v894
  %v988 = vpop.f32.mrf.mxu0
  %v989 = vadd.f32 0.0, %v988
  %v990 = vpop.f32.mrf.mxu0
  %v991 = vpop.f32.mrf.mxu0
  %v992 = vadd.f32 0.0, %v991
  %v993 = vpop.f32.mrf.mxu0
  %994 = vmatprep.mubr.bf16.mxu0 0
  %995 = vmatmul.mubr.bf16.gmra.mxu0 %v897
  %v996 = vpop.f32.mrf.mxu0
  %v997 = vadd.f32 0.0, %v996
  %v998 = vpop.f32.mrf.mxu0
  %v999 = vpop.f32.mrf.mxu0
  %v1000 = vadd.f32 0.0, %v999
  %v1001 = vpop.f32.mrf.mxu0
  %1002 = vmatprep.mubr.bf16.mxu0 0
  %1003 = vmatmul.mubr.bf16.gmra.mxu0 %v900
  %v1004 = vpop.f32.mrf.mxu0
  %v1005 = vadd.f32 0.0, %v1004
  %v1006 = vpop.f32.mrf.mxu0
  %v1007 = vpop.f32.mrf.mxu0
  %v1008 = vadd.f32 0.0, %v1007
  %v1009 = vpop.f32.mrf.mxu0
  %1010 = vmatprep.mubr.bf16.mxu0 0
  %1011 = vmatmul.mubr.bf16.gmra.mxu0 %v903
  %v1012 = vpop.f32.mrf.mxu0
  %v1013 = vadd.f32 0.0, %v1012
  %v1014 = vpop.f32.mrf.mxu0
  %v1015 = vpop.f32.mrf.mxu0
  %v1016 = vadd.f32 0.0, %v1015
  %v1017 = vpop.f32.mrf.mxu0
  %1018 = vmatprep.mubr.bf16.mxu0 0
  %1019 = vmatmul.mubr.bf16.gmra.mxu0 %v906
  %v1020 = vpop.f32.mrf.mxu0
  %v1021 = vadd.f32 0.0, %v1020
  %v1022 = vpop.f32.mrf.mxu0
  %v1023 = vpop.f32.mrf.mxu0
  %v1024 = vadd.f32 0.0, %v1023
  %v1025 = vpop.f32.mrf.mxu0
  %1026 = vmatprep.mubr.bf16.mxu0 0
  %1027 = vmatmul.mubr.bf16.gmra.mxu0 %v909
  %v1028 = vpop.f32.mrf.mxu0
  %v1029 = vadd.f32 0.0, %v1028
  %v1030 = vpop.f32.mrf.mxu0
  %v1031 = vpop.f32.mrf.mxu0
  %v1032 = vadd.f32 0.0, %v1031
  %v1033 = vpop.f32.mrf.mxu0
  %1034 = vdwg.mxu0
  %v1035 = vadd.f32 %v766, %v949
  %v1036 = vadd.f32 %v767, %v952
  %v1037 = vadd.f32 %v768, %v957
  %v1038 = vadd.f32 %v769, %v960
  %v1039 = vadd.f32 %v770, %v965
  %v1040 = vadd.f32 %v771, %v968
  %v1041 = vadd.f32 %v772, %v973
  %v1042 = vadd.f32 %v773, %v976
  %v1043 = vadd.f32 %v774, %v981
  %v1044 = vadd.f32 %v775, %v984
  %v1045 = vadd.f32 %v776, %v989
  %v1046 = vadd.f32 %v777, %v992
  %v1047 = vadd.f32 %v778, %v997
  %v1048 = vadd.f32 %v779, %v1000
  %v1049 = vadd.f32 %v780, %v1005
  %v1050 = vadd.f32 %v781, %v1008
  %v1051 = vadd.f32 %v782, %v1013
  %v1052 = vadd.f32 %v783, %v1016
  %v1053 = vadd.f32 %v784, %v1021
  %v1054 = vadd.f32 %v785, %v1024
  %v1055 = vadd.f32 %v786, %v1029
  %v1056 = vadd.f32 %v787, %v1032
  %v1057 = vld [vmem:[%s5] sm:$0x1]
  %v1059 = vlaneseq
  %v1060 = vshrl.u32 %v1059, 7
  %v1061 = vsub.s32 0, %v1060
  %v1062 = vrot.slane %v1057, %v1061
  %v1064 = vadd.f32 %v1035, %v1062
  %v1065 = vadd.f32 %v1036, %v1062
  %v1066 = vadd.f32 %v1037, %v1062
  %v1067 = vadd.f32 %v1038, %v1062
  %v1068 = vadd.f32 %v1039, %v1062
  %v1069 = vadd.f32 %v1040, %v1062
  %v1070 = vadd.f32 %v1041, %v1062
  %v1071 = vadd.f32 %v1042, %v1062
  %v1072 = vadd.f32 %v1043, %v1062
  %v1073 = vadd.f32 %v1044, %v1062
  %v1074 = vadd.f32 %v1045, %v1062
  %v1075 = vadd.f32 %v1046, %v1062
  %v1076 = vadd.f32 %v1047, %v1062
  %v1077 = vadd.f32 %v1048, %v1062
  %v1078 = vadd.f32 %v1049, %v1062
  %v1079 = vadd.f32 %v1050, %v1062
  %v1080 = vadd.f32 %v1051, %v1062
  %v1081 = vadd.f32 %v1052, %v1062
  %v1082 = vadd.f32 %v1053, %v1062
  %v1083 = vadd.f32 %v1054, %v1062
  %v1084 = vadd.f32 %v1055, %v1062
  %v1085 = vadd.f32 %v1056, %v1062
  %v1086 = vmul.f32 %v1064, 0.01
  %v1087 = vmul.f32 %v1065, 0.01
  %v1088 = vmul.f32 %v1066, 0.01
  %v1089 = vmul.f32 %v1067, 0.01
  %v1090 = vmul.f32 %v1068, 0.01
  %v1091 = vmul.f32 %v1069, 0.01
  %v1092 = vmul.f32 %v1070, 0.01
  %v1093 = vmul.f32 %v1071, 0.01
  %v1094 = vmul.f32 %v1072, 0.01
  %v1095 = vmul.f32 %v1073, 0.01
  %v1096 = vmul.f32 %v1074, 0.01
  %v1097 = vmul.f32 %v1075, 0.01
  %v1098 = vmul.f32 %v1076, 0.01
  %v1099 = vmul.f32 %v1077, 0.01
  %v1100 = vmul.f32 %v1078, 0.01
  %v1101 = vmul.f32 %v1079, 0.01
  %v1102 = vmul.f32 %v1080, 0.01
  %v1103 = vmul.f32 %v1081, 0.01
  %v1104 = vmul.f32 %v1082, 0.01
  %v1105 = vmul.f32 %v1083, 0.01
  %v1106 = vmul.f32 %v1084, 0.01
  %v1107 = vmul.f32 %v1085, 0.01
  %v1108 = vmax.f32 %v1064, %v1086
  %v1109 = vmax.f32 %v1065, %v1087
  %v1110 = vmax.f32 %v1066, %v1088
  %v1111 = vmax.f32 %v1067, %v1089
  %v1112 = vmax.f32 %v1068, %v1090
  %v1113 = vmax.f32 %v1069, %v1091
  %v1114 = vmax.f32 %v1070, %v1092
  %v1115 = vmax.f32 %v1071, %v1093
  %v1116 = vmax.f32 %v1072, %v1094
  %v1117 = vmax.f32 %v1073, %v1095
  %v1118 = vmax.f32 %v1074, %v1096
  %v1119 = vmax.f32 %v1075, %v1097
  %v1120 = vmax.f32 %v1076, %v1098
  %v1121 = vmax.f32 %v1077, %v1099
  %v1122 = vmax.f32 %v1078, %v1100
  %v1123 = vmax.f32 %v1079, %v1101
  %v1124 = vmax.f32 %v1080, %v1102
  %v1125 = vmax.f32 %v1081, %v1103
  %v1126 = vmax.f32 %v1082, %v1104
  %v1127 = vmax.f32 %v1083, %v1105
  %v1128 = vmax.f32 %v1084, %v1106
  %v1129 = vmax.f32 %v1085, %v1107
  %v1130 = vpack.c.bf16 %v1109, %v1108
  %v1131 = vpack.c.bf16 %v1111, %v1110
  %v1132 = vpack.c.bf16 %v1113, %v1112
  %v1133 = vpack.c.bf16 %v1115, %v1114
  %v1134 = vpack.c.bf16 %v1117, %v1116
  %v1135 = vpack.c.bf16 %v1119, %v1118
  %v1136 = vpack.c.bf16 %v1121, %v1120
  %v1137 = vpack.c.bf16 %v1123, %v1122
  %v1138 = vpack.c.bf16 %v1125, %v1124
  %v1139 = vpack.c.bf16 %v1127, %v1126
  %v1140 = vpack.c.bf16 %v1129, %v1128
  %v1152 = vunpack.c.l.b16 %v1130
  %v1153 = vunpack.c.h.b16 %v1130
  %v1154 = vunpack.c.l.b16 %v1131
  %v1155 = vunpack.c.h.b16 %v1131
  %v1156 = vunpack.c.l.b16 %v1132
  %v1157 = vunpack.c.h.b16 %v1132
  %v1158 = vunpack.c.l.b16 %v1133
  %v1159 = vunpack.c.h.b16 %v1133
  %v1160 = vunpack.c.l.b16 %v1134
  %v1161 = vunpack.c.h.b16 %v1134
  %v1162 = vunpack.c.l.b16 %v1135
  %v1163 = vunpack.c.h.b16 %v1135
  %v1164 = vunpack.c.l.b16 %v1136
  %v1165 = vunpack.c.h.b16 %v1136
  %v1166 = vunpack.c.l.b16 %v1137
  %v1167 = vunpack.c.h.b16 %v1137
  %v1168 = vunpack.c.l.b16 %v1138
  %v1169 = vunpack.c.h.b16 %v1138
  %v1170 = vunpack.c.l.b16 %v1139
  %v1171 = vunpack.c.h.b16 %v1139
  %v1172 = vunpack.c.l.b16 %v1140
  %v1173 = vunpack.c.h.b16 %v1140
  %v1174 = vpack.c.b16 %v1152, %v1152
  %v1175 = vpack.c.b16 %v1153, %v1153
  %v1176 = vpack.c.b16 %v1154, %v1154
  %v1177 = vpack.c.b16 %v1155, %v1155
  %v1178 = vpack.c.b16 %v1156, %v1156
  %v1179 = vpack.c.b16 %v1157, %v1157
  %v1180 = vpack.c.b16 %v1158, %v1158
  %v1181 = vpack.c.b16 %v1159, %v1159
  %v1182 = vpack.c.b16 %v1160, %v1160
  %v1183 = vpack.c.b16 %v1161, %v1161
  %v1184 = vpack.c.b16 %v1162, %v1162
  %v1185 = vpack.c.b16 %v1163, %v1163
  %v1186 = vpack.c.b16 %v1164, %v1164
  %v1187 = vpack.c.b16 %v1165, %v1165
  %v1188 = vpack.c.b16 %v1166, %v1166
  %v1189 = vpack.c.b16 %v1167, %v1167
  %v1190 = vpack.c.b16 %v1168, %v1168
  %v1191 = vpack.c.b16 %v1169, %v1169
  %v1192 = vpack.c.b16 %v1170, %v1170
  %v1193 = vpack.c.b16 %v1171, %v1171
  %v1194 = vpack.c.b16 %v1172, %v1172
  %v1195 = vpack.c.b16 %v1173, %v1173
  %1218 = vst [vmem:[%s6] sm:$0xf] %v1174
  %1219 = vst [vmem:[%s6 + $0x4] sm:$0xf] %v1175
  %1220 = vst [vmem:[%s6 + $0x8] sm:$0xf] %v1176
  %1221 = vst [vmem:[%s6 + $0xc] sm:$0xf] %v1177
  %1222 = vst [vmem:[%s6 + $0x10] sm:$0xf] %v1178
  %1223 = vst [vmem:[%s6 + $0x14] sm:$0xf] %v1179
  %1224 = vst [vmem:[%s6 + $0x18] sm:$0xf] %v1180
  %1225 = vst [vmem:[%s6 + $0x1c] sm:$0xf] %v1181
  %1226 = vst [vmem:[%s6 + $0x20] sm:$0xf] %v1182
  %1227 = vst [vmem:[%s6 + $0x24] sm:$0xf] %v1183
  %1228 = vst [vmem:[%s6 + $0x28] sm:$0xf] %v1184
  %1229 = vst [vmem:[%s6 + $0x2c] sm:$0xf] %v1185
  %1230 = vst [vmem:[%s6 + $0x30] sm:$0xf] %v1186
  %1231 = vst [vmem:[%s6 + $0x34] sm:$0xf] %v1187
  %1232 = vst [vmem:[%s6 + $0x38] sm:$0xf] %v1188
  %1233 = vst [vmem:[%s6 + $0x3c] sm:$0xf] %v1189
  %1234 = vst [vmem:[%s6 + $0x40] sm:$0xf] %v1190
  %1235 = vst [vmem:[%s6 + $0x44] sm:$0xf] %v1191
  %1236 = vst [vmem:[%s6 + $0x48] sm:$0xf] %v1192
  %1237 = vst [vmem:[%s6 + $0x4c] sm:$0xf] %v1193
  %1238 = vst [vmem:[%s6 + $0x50] sm:$0xf] %v1194
  %1239 = vst [vmem:[%s6 + $0x54] sm:$0xf] %v1195
  // Predicated region
  $region26: #{decoder_forward.6} parent=0 // pred_check
    _
  $region27: #{decoder_forward.6} parent=0 // pred_check_branch
    %1241 = sbr.rel (0) target = $region29
  $region28: #{decoder_forward.6} parent=0 // pred_region
    _
  $region29: #{decoder_forward.6} parent=0 // pred_fallthru
    _
  // Predicated region
  $region30: #{decoder_forward.6} parent=0 // pred_check
    _
  $region31: #{decoder_forward.6} parent=0 // pred_check_branch
    %1243 = sbr.rel (0) target = $region33
  $region32: #{decoder_forward.6} parent=0 // pred_region
    _
  $region33: #{decoder_forward.6} parent=0 // pred_fallthru
    _

// kernel: decoder_forward.7
$region0: #{decoder_forward.7}
  #allocation0 [shape = 'u32[]', space=smem, size = 0x4, offset = 0x4, fixed_abs, tag = 'smem constant byte address 0x4 - core index']
  #allocation1 [shape = 'u32[144,128]{1,0:T(1,128)}', space=vmem, size = 0x12000, scoped, tag = 'internal scratch']
  %s0 = inlined_call_operand.vmem [shape: bf16[608,12], index: 0, kind: input, shape index: {}]
  %s1 = inlined_call_operand.vmem [shape: bf16[608,12], index: 1, kind: input, shape index: {}]
  %s2 = inlined_call_operand.vmem [shape: bf16[608,12], index: 2, kind: input, shape index: {}]
  %s3 = inlined_call_operand.vmem [shape: bf16[608,12], index: 3, kind: input, shape index: {}]
  %s4 = inlined_call_operand.vmem [shape: bf16[4,12,128], index: 4, kind: input, shape index: {}]
  %s5 = inlined_call_operand.vmem [shape: f32[1,128], index: 5, kind: input, shape index: {}]
  %s6 = inlined_call_operand.vmem [shape: f32[608,128], index: 6, kind: output, shape index: {}]
  %s7 = sld [smem:[#allocation0]]
  $region57: #{decoder_forward.7} parent=0
    _
  %s9 = ssub.s32 1, %s7
  %s10 = scalar_select 0, %s9, %s7
  loop: start=0, step=1, limit=4
  $region2: #{decoder_forward.7} parent=0 // loop_pre_header
    _
  $region3: #{decoder_forward.7} parent=0 // loop_header
    %s12 = sphi 0, %s16
    %p13 = scmp.ge.s32.totalorder %s12, 4
    %s22 = sphi 0, %s24
    %s25 = sphi 0, %s22
    %s26 = sphi 0, %s25
    %s42 = sphi 0, %s26
    %s48 = sphi 0, %s50
    %s51 = sphi 0, %s48
    %s52 = sphi 0, %s51
    %s68 = sphi 0, %s52
    %s74 = sphi 0, %s76
    %s77 = sphi 0, %s74
    %s78 = sphi 0, %s77
    %s94 = sphi 0, %s78
    %s100 = sphi 0, %s102
    %s103 = sphi 0, %s100
    %s104 = sphi 0, %s103
    %s120 = sphi 0, %s104
    %s124 = sphi 0, %s124
    %s126 = sphi 0, %s124
    %s127 = sphi 0, %s126
    %s141 = sphi 0, %s127
    %s145 = sphi 0, %s145
    %s147 = sphi 0, %s145
    %s148 = sphi 0, %s147
    %s162 = sphi 0, %s148
    %s168 = sphi 0, %s170
    %s171 = sphi 0, %s168
    %s172 = sphi 0, %s171
    %s188 = sphi 0, %s172
  $region4: #{decoder_forward.7} parent=0 // loop_header_branch
    %15 = sbr.rel (%p13) target = $region8
  $region5: #{decoder_forward.7} parent=0 // loop_body
    %s17 = ssub.s32 %s12, 1
    %s18 = ssub.s32 %s12, 2
    %s19 = sadd.s32 %s12, 1
    %s20 = ssub.s32 %s12, %s19
    %p21 = scmp.eq.s32.totalorder %s20, 0
    %s23 = sadd.s32 %s22, 1
    %s24 = scalar_select %p21, %s22, %s23
    %p27 = pneg %p21
    %p28 = scmp.eq.s32.totalorder %s12, 1
    %p29 = por %p27, %p28
    %p30 = scmp.ne.s32.totalorder %s22, %s25
    %p31 = scmp.eq.s32.totalorder %s12, 0
    %p32 = por %p30, %p31
    %p33 = scmp.ne.s32.totalorder %s22, %s25
    %p34 = scmp.eq.s32.totalorder %s17, 1
    %p35 = por %p33, %p34
    %p36 = scmp.ne.s32.totalorder %s25, %s26
    %p37 = scmp.eq.s32.totalorder %s17, 0
    %p38 = por %p36, %p37
    %p39 = scmp.ne.s32.totalorder %s25, %s26
    %p40 = scmp.eq.s32.totalorder %s18, 1
    %p41 = por %p39, %p40
    %p43 = scmp.ne.s32.totalorder %s26, %s42
    %p44 = scmp.eq.s32.totalorder %s18, 0
    %p45 = por %p43, %p44
    %s46 = ssub.s32 %s12, %s19
    %p47 = scmp.eq.s32.totalorder %s46, 0
    %s49 = sadd.s32 %s48, 1
    %s50 = scalar_select %p47, %s48, %s49
    %p53 = pneg %p47
    %p54 = scmp.eq.s32.totalorder %s12, 1
    %p55 = por %p53, %p54
    %p56 = scmp.ne.s32.totalorder %s48, %s51
    %p57 = scmp.eq.s32.totalorder %s12, 0
    %p58 = por %p56, %p57
    %p59 = scmp.ne.s32.totalorder %s48, %s51
    %p60 = scmp.eq.s32.totalorder %s17, 1
    %p61 = por %p59, %p60
    %p62 = scmp.ne.s32.totalorder %s51, %s52
    %p63 = scmp.eq.s32.totalorder %s17, 0
    %p64 = por %p62, %p63
    %p65 = scmp.ne.s32.totalorder %s51, %s52
    %p66 = scmp.eq.s32.totalorder %s18, 1
    %p67 = por %p65, %p66
    %p69 = scmp.ne.s32.totalorder %s52, %s68
    %p70 = scmp.eq.s32.totalorder %s18, 0
    %p71 = por %p69, %p70
    %s72 = ssub.s32 %s12, %s19
    %p73 = scmp.eq.s32.totalorder %s72, 0
    %s75 = sadd.s32 %s74, 1
    %s76 = scalar_select %p73, %s74, %s75
    %p79 = pneg %p73
    %p80 = scmp.eq.s32.totalorder %s12, 1
    %p81 = por %p79, %p80
    %p82 = scmp.ne.s32.totalorder %s74, %s77
    %p83 = scmp.eq.s32.totalorder %s12, 0
    %p84 = por %p82, %p83
    %p85 = scmp.ne.s32.totalorder %s74, %s77
    %p86 = scmp.eq.s32.totalorder %s17, 1
    %p87 = por %p85, %p86
    %p88 = scmp.ne.s32.totalorder %s77, %s78
    %p89 = scmp.eq.s32.totalorder %s17, 0
    %p90 = por %p88, %p89
    %p91 = scmp.ne.s32.totalorder %s77, %s78
    %p92 = scmp.eq.s32.totalorder %s18, 1
    %p93 = por %p91, %p92
    %p95 = scmp.ne.s32.totalorder %s78, %s94
    %p96 = scmp.eq.s32.totalorder %s18, 0
    %p97 = por %p95, %p96
    %s98 = ssub.s32 %s12, %s19
    %p99 = scmp.eq.s32.totalorder %s98, 0
    %s101 = sadd.s32 %s100, 1
    %s102 = scalar_select %p99, %s100, %s101
    %p105 = pneg %p99
    %p106 = scmp.eq.s32.totalorder %s12, 1
    %p107 = por %p105, %p106
    %p108 = scmp.ne.s32.totalorder %s100, %s103
    %p109 = scmp.eq.s32.totalorder %s12, 0
    %p110 = por %p108, %p109
    %p111 = scmp.ne.s32.totalorder %s100, %s103
    %p112 = scmp.eq.s32.totalorder %s17, 1
    %p113 = por %p111, %p112
    %p114 = scmp.ne.s32.totalorder %s103, %s104
    %p115 = scmp.eq.s32.totalorder %s17, 0
    %p116 = por %p114, %p115
    %p117 = scmp.ne.s32.totalorder %s103, %s104
    %p118 = scmp.eq.s32.totalorder %s18, 1
    %p119 = por %p117, %p118
    %p121 = scmp.ne.s32.totalorder %s104, %s120
    %p122 = scmp.eq.s32.totalorder %s18, 0
    %p123 = por %p121, %p122
    %s125 = sadd.s32 %s124, 1
    %p128 = scmp.eq.s32.totalorder %s12, 1
    %p129 = scmp.ne.s32.totalorder %s124, %s126
    %p130 = scmp.eq.s32.totalorder %s12, 0
    %p131 = por %p129, %p130
    %p132 = scmp.ne.s32.totalorder %s124, %s126
    %p133 = scmp.eq.s32.totalorder %s17, 1
    %p134 = por %p132, %p133
    %p135 = scmp.ne.s32.totalorder %s126, %s127
    %p136 = scmp.eq.s32.totalorder %s17, 0
    %p137 = por %p135, %p136
    %p138 = scmp.ne.s32.totalorder %s126, %s127
    %p139 = scmp.eq.s32.totalorder %s18, 1
    %p140 = por %p138, %p139
    %p142 = scmp.ne.s32.totalorder %s127, %s141
    %p143 = scmp.eq.s32.totalorder %s18, 0
    %p144 = por %p142, %p143
    %s146 = sadd.s32 %s145, 1
    %p149 = scmp.eq.s32.totalorder %s12, 1
    %p150 = scmp.ne.s32.totalorder %s145, %s147
    %p151 = scmp.eq.s32.totalorder %s12, 0
    %p152 = por %p150, %p151
    %p153 = scmp.ne.s32.totalorder %s145, %s147
    %p154 = scmp.eq.s32.totalorder %s17, 1
    %p155 = por %p153, %p154
    %p156 = scmp.ne.s32.totalorder %s147, %s148
    %p157 = scmp.eq.s32.totalorder %s17, 0
    %p158 = por %p156, %p157
    %p159 = scmp.ne.s32.totalorder %s147, %s148
    %p160 = scmp.eq.s32.totalorder %s18, 1
    %p161 = por %p159, %p160
    %p163 = scmp.ne.s32.totalorder %s148, %s162
    %p164 = scmp.eq.s32.totalorder %s18, 0
    %p165 = por %p163, %p164
    %s166 = ssub.s32 %s12, %s19
    %p167 = scmp.eq.s32.totalorder %s166, 0
    %s169 = sadd.s32 %s168, 1
    %s170 = scalar_select %p167, %s168, %s169
    %p173 = pneg %p167
    %p174 = scmp.eq.s32.totalorder %s12, 1
    %p175 = por %p173, %p174
    %p176 = scmp.ne.s32.totalorder %s168, %s171
    %p177 = scmp.eq.s32.totalorder %s12, 0
    %p178 = por %p176, %p177
    %p179 = scmp.ne.s32.totalorder %s168, %s171
    %p180 = scmp.eq.s32.totalorder %s17, 1
    %p181 = por %p179, %p180
    %p182 = scmp.ne.s32.totalorder %s171, %s172
    %p183 = scmp.eq.s32.totalorder %s17, 0
    %p184 = por %p182, %p183
    %p185 = scmp.ne.s32.totalorder %s171, %s172
    %p186 = scmp.eq.s32.totalorder %s18, 1
    %p187 = por %p185, %p186
    %p189 = scmp.ne.s32.totalorder %s172, %s188
    %p190 = scmp.eq.s32.totalorder %s18, 0
    %p191 = por %p189, %p190
    %p192 = scmp.le.s32.totalorder 1, %s12
    %p193 = scmp.lt.s32.totalorder %s12, 3
    %p194 = pnand %p192, %p193
    %p195 = pneg %p194
    // Predicated region
    $region9: #{decoder_forward.7} parent=5 // pred_check
      _
    $region10: #{decoder_forward.7} parent=5 // pred_check_branch
      %197 = sbr.rel (%p194) target = $region12
    $region11: #{decoder_forward.7} parent=5 // pred_region
      %s198 = ssub.s32 %s12, 1
      // Predicated region
      $region13: #{decoder_forward.7} parent=11 // pred_check
        %p199 = pneg %p137
      $region14: #{decoder_forward.7} parent=11 // pred_check_branch
        %201 = sbr.rel (%p199) target = $region16
      $region15: #{decoder_forward.7} parent=11 // pred_region
        _
      $region16: #{decoder_forward.7} parent=11 // pred_fallthru
        _
      // Predicated region
      $region17: #{decoder_forward.7} parent=11 // pred_check
        %p202 = pneg %p158
      $region18: #{decoder_forward.7} parent=11 // pred_check_branch
        %204 = sbr.rel (%p202) target = $region20
      $region19: #{decoder_forward.7} parent=11 // pred_region
        _
      $region20: #{decoder_forward.7} parent=11 // pred_fallthru
        _
    $region12: #{decoder_forward.7} parent=5 // pred_fallthru
      _
    %p205 = scmp.lt.s32.totalorder %s12, 2
    // Predicated region
    $region21: #{decoder_forward.7} parent=5 // pred_check
      %p206 = pneg %p205
    $region22: #{decoder_forward.7} parent=5 // pred_check_branch
      %208 = sbr.rel (%p206) target = $region24
    $region23: #{decoder_forward.7} parent=5 // pred_region
      // Predicated region
      $region25: #{decoder_forward.7} parent=23 // pred_check
        %p209 = pneg %p32
      $region26: #{decoder_forward.7} parent=23 // pred_check_branch
        %211 = sbr.rel (%p209) target = $region28
      $region27: #{decoder_forward.7} parent=23 // pred_region
        %s212 = smul.u32 38, %s12
        %p213 = scmp.lt.s32.totalorder %s212, 75
        %s214 = scalar_select %p213, %s212, 75
        %s215 = smul.addr %s214, 4
        %s216 = scalar_lea.vmem %s0, %s215
        %s217 = smul.u32 38, %s12
      $region28: #{decoder_forward.7} parent=23 // pred_fallthru
        _
      // Predicated region
      $region29: #{decoder_forward.7} parent=23 // pred_check
        %p218 = pneg %p58
      $region30: #{decoder_forward.7} parent=23 // pred_check_branch
        %220 = sbr.rel (%p218) target = $region32
      $region31: #{decoder_forward.7} parent=23 // pred_region
        %s221 = smul.u32 38, %s12
        %p222 = scmp.lt.s32.totalorder %s221, 75
        %s223 = scalar_select %p222, %s221, 75
        %s224 = smul.addr %s223, 4
        %s225 = scalar_lea.vmem %s1, %s224
        %s226 = smul.u32 38, %s12
      $region32: #{decoder_forward.7} parent=23 // pred_fallthru
        _
      // Predicated region
      $region33: #{decoder_forward.7} parent=23 // pred_check
        %p227 = pneg %p84
      $region34: #{decoder_forward.7} parent=23 // pred_check_branch
        %229 = sbr.rel (%p227) target = $region36
      $region35: #{decoder_forward.7} parent=23 // pred_region
        %s230 = smul.u32 38, %s12
        %p231 = scmp.lt.s32.totalorder %s230, 75
        %s232 = scalar_select %p231, %s230, 75
        %s233 = smul.addr %s232, 4
        %s234 = scalar_lea.vmem %s2, %s233
        %s235 = smul.u32 38, %s12
      $region36: #{decoder_forward.7} parent=23 // pred_fallthru
        _
      // Predicated region
      $region37: #{decoder_forward.7} parent=23 // pred_check
        %p236 = pneg %p110
      $region38: #{decoder_forward.7} parent=23 // pred_check_branch
        %238 = sbr.rel (%p236) target = $region40
      $region39: #{decoder_forward.7} parent=23 // pred_region
        %s239 = smul.u32 38, %s12
        %p240 = scmp.lt.s32.totalorder %s239, 75
        %s241 = scalar_select %p240, %s239, 75
        %s242 = smul.addr %s241, 4
        %s243 = scalar_lea.vmem %s3, %s242
        %s244 = smul.u32 38, %s12
      $region40: #{decoder_forward.7} parent=23 // pred_fallthru
        _
    $region24: #{decoder_forward.7} parent=5 // pred_fallthru
      _
    %p245 = scmp.le.s32.totalorder 1, %s12
    %p246 = scmp.lt.s32.totalorder %s12, 3
    %p247 = pnand %p245, %p246
    %p248 = pneg %p247
    // Predicated region
    $region41: #{decoder_forward.7} parent=5 // pred_check
      _
    $region42: #{decoder_forward.7} parent=5 // pred_check_branch
      %250 = sbr.rel (%p247) target = $region44
    $region43: #{decoder_forward.7} parent=5 // pred_region
      %s251 = ssub.s32 %s12, 1
      %s252 = smul.u32 38, %s17
      %p253 = scmp.lt.s32.totalorder %s252, 75
      %s254 = scalar_select %p253, %s252, 75
      %s255 = smul.addr %s254, 4
      %s256 = scalar_lea.vmem %s0, %s255
      %p257 = pneg %p38
      %p258 = pneg %p35
      %s259 = smul.u32 38, %s17
      %p260 = scmp.lt.s32.totalorder %s259, 75
      %s261 = scalar_select %p260, %s259, 75
      %s262 = smul.addr %s261, 4
      %s263 = scalar_lea.vmem %s1, %s262
      %p264 = pneg %p64
      %p265 = pneg %p61
      %s266 = smul.u32 38, %s17
      %p267 = scmp.lt.s32.totalorder %s266, 75
      %s268 = scalar_select %p267, %s266, 75
      %s269 = smul.addr %s268, 4
      %s270 = scalar_lea.vmem %s2, %s269
      %p271 = pneg %p90
      %p272 = pneg %p87
      %s273 = smul.u32 38, %s17
      %p274 = scmp.lt.s32.totalorder %s273, 75
      %s275 = scalar_select %p274, %s273, 75
      %s276 = smul.addr %s275, 4
      %s277 = scalar_lea.vmem %s3, %s276
      %p278 = pneg %p116
      %p279 = pneg %p113
      %p280 = pneg %p137
      %p281 = pneg %p134
      %p282 = pneg %p158
      %p283 = pneg %p155
      %p284 = pneg %p184
      %p285 = pneg %p181
      %s286 = smul.u32 38, %s17
      %p287 = scmp.lt.s32.totalorder %s286, 75
      %s288 = scalar_select %p287, %s286, 75
      %s289 = smul.addr %s288, 8
      %s290 = scalar_lea.vmem %s6, %s289
      %s291 = smul.u32 38, %s17
      %p292 = scmp.lt.s32.totalorder %s291, 75
      %s293 = scalar_select %p292, %s291, 75
      %s294 = smul.addr %s293, 4
      %s295 = scalar_lea.vmem %s0, %s294
      %s296 = smul.u32 38, %s17
      %s297 = smul.u32 38, %s17
      %p298 = scmp.lt.s32.totalorder %s297, 75
      %s299 = scalar_select %p298, %s297, 75
      %s300 = smul.addr %s299, 4
      %s301 = scalar_lea.vmem %s1, %s300
      %s302 = smul.u32 38, %s17
      %s303 = smul.u32 38, %s17
      %p304 = scmp.lt.s32.totalorder %s303, 75
      %s305 = scalar_select %p304, %s303, 75
      %s306 = smul.addr %s305, 4
      %s307 = scalar_lea.vmem %s2, %s306
      %s308 = smul.u32 38, %s17
      %s309 = smul.u32 38, %s17
      %p310 = scmp.lt.s32.totalorder %s309, 75
      %s311 = scalar_select %p310, %s309, 75
      %s312 = smul.addr %s311, 4
      %s313 = scalar_lea.vmem %s3, %s312
      %s314 = smul.u32 38, %s17
      %s315 = smul.u32 38, %s17
      %p316 = scmp.lt.s32.totalorder %s315, 75
      %s317 = scalar_select %p316, %s315, 75
      %s318 = smul.addr %s317, 8
      %s319 = scalar_lea.vmem %s6, %s318
      %s320 = smul.u32 38, %s17
      %v322 = vld [vmem:[%s295] sm:$0xf]
      %v323 = vld [vmem:[%s295 + $0x4] sm:$0xf]
      %v324 = vld [vmem:[%s295 + $0x8] sm:$0xf]
      %v325 = vld [vmem:[%s295 + $0xc] sm:$0xf]
      %v326 = vld [vmem:[%s295 + $0x10] sm:$0xf]
      %v327 = vld [vmem:[%s295 + $0x14] sm:$0xf]
      %v328 = vld [vmem:[%s295 + $0x18] sm:$0xf]
      %v329 = vld [vmem:[%s295 + $0x1c] sm:$0xf]
      %v330 = vld [vmem:[%s295 + $0x20] sm:$0xf]
      %v331 = vld [vmem:[%s295 + $0x24] sm:$0xf]
      %v332 = vld [vmem:[%s295 + $0x28] sm:$0xf]
      %v333 = vld [vmem:[%s295 + $0x2c] sm:$0xf]
      %v334 = vld [vmem:[%s295 + $0x30] sm:$0xf]
      %v335 = vld [vmem:[%s295 + $0x34] sm:$0xf]
      %v336 = vld [vmem:[%s295 + $0x38] sm:$0xf]
      %v337 = vld [vmem:[%s295 + $0x3c] sm:$0xf]
      %v338 = vld [vmem:[%s295 + $0x40] sm:$0xf]
      %v339 = vld [vmem:[%s295 + $0x44] sm:$0xf]
      %v340 = vld [vmem:[%s295 + $0x48] sm:$0xf]
      %v341 = vld [vmem:[%s295 + $0x4c] sm:$0xf]
      %v342 = vld [vmem:[%s295 + $0x50] sm:$0xf]
      %v343 = vld [vmem:[%s295 + $0x54] sm:$0xf]
      %v344 = vld [vmem:[%s295 + $0x58] sm:$0xf]
      %v345 = vld [vmem:[%s295 + $0x5c] sm:$0xf]
      %v346 = vld [vmem:[%s295 + $0x60] sm:$0xf]
      %v347 = vld [vmem:[%s295 + $0x64] sm:$0xf]
      %v348 = vld [vmem:[%s295 + $0x68] sm:$0xf]
      %v349 = vld [vmem:[%s295 + $0x6c] sm:$0xf]
      %v350 = vld [vmem:[%s295 + $0x70] sm:$0xf]
      %v351 = vld [vmem:[%s295 + $0x74] sm:$0xf]
      %v352 = vld [vmem:[%s295 + $0x78] sm:$0xf]
      %v353 = vld [vmem:[%s295 + $0x7c] sm:$0xf]
      %v354 = vld [vmem:[%s295 + $0x80] sm:$0xf]
      %v355 = vld [vmem:[%s295 + $0x84] sm:$0xf]
      %v356 = vld [vmem:[%s295 + $0x88] sm:$0xf]
      %v357 = vld [vmem:[%s295 + $0x8c] sm:$0xf]
      %v358 = vld [vmem:[%s295 + $0x90] sm:$0xf]
      %v359 = vld [vmem:[%s295 + $0x94] sm:$0xf]
      %v360 = vld [vmem:[%s4] sm:$0xf]
      %v361 = vld [vmem:[%s4 + $0x4] sm:$0x3]
      %v362 = vld [vmem:[%s301] sm:$0xf]
      %v363 = vld [vmem:[%s301 + $0x4] sm:$0xf]
      %v364 = vld [vmem:[%s301 + $0x8] sm:$0xf]
      %v365 = vld [vmem:[%s301 + $0xc] sm:$0xf]
      %v366 = vld [vmem:[%s301 + $0x10] sm:$0xf]
      %v367 = vld [vmem:[%s301 + $0x14] sm:$0xf]
      %v368 = vld [vmem:[%s301 + $0x18] sm:$0xf]
      %v369 = vld [vmem:[%s301 + $0x1c] sm:$0xf]
      %v370 = vld [vmem:[%s301 + $0x20] sm:$0xf]
      %v371 = vld [vmem:[%s301 + $0x24] sm:$0xf]
      %v372 = vld [vmem:[%s301 + $0x28] sm:$0xf]
      %v373 = vld [vmem:[%s301 + $0x2c] sm:$0xf]
      %v374 = vld [vmem:[%s301 + $0x30] sm:$0xf]
      %v375 = vld [vmem:[%s301 + $0x34] sm:$0xf]
      %v376 = vld [vmem:[%s301 + $0x38] sm:$0xf]
      %v377 = vld [vmem:[%s301 + $0x3c] sm:$0xf]
      %v378 = vld [vmem:[%s301 + $0x40] sm:$0xf]
      %v379 = vld [vmem:[%s301 + $0x44] sm:$0xf]
      %v380 = vld [vmem:[%s301 + $0x48] sm:$0xf]
      %v381 = vld [vmem:[%s301 + $0x4c] sm:$0xf]
      %v382 = vld [vmem:[%s301 + $0x50] sm:$0xf]
      %v383 = vld [vmem:[%s301 + $0x54] sm:$0xf]
      %v384 = vld [vmem:[%s301 + $0x58] sm:$0xf]
      %v385 = vld [vmem:[%s301 + $0x5c] sm:$0xf]
      %v386 = vld [vmem:[%s301 + $0x60] sm:$0xf]
      %v387 = vld [vmem:[%s301 + $0x64] sm:$0xf]
      %v388 = vld [vmem:[%s301 + $0x68] sm:$0xf]
      %v389 = vld [vmem:[%s301 + $0x6c] sm:$0xf]
      %v390 = vld [vmem:[%s301 + $0x70] sm:$0xf]
      %v391 = vld [vmem:[%s301 + $0x74] sm:$0xf]
      %v392 = vld [vmem:[%s301 + $0x78] sm:$0xf]
      %v393 = vld [vmem:[%s301 + $0x7c] sm:$0xf]
      %v394 = vld [vmem:[%s301 + $0x80] sm:$0xf]
      %v395 = vld [vmem:[%s301 + $0x84] sm:$0xf]
      %v396 = vld [vmem:[%s301 + $0x88] sm:$0xf]
      %v397 = vld [vmem:[%s301 + $0x8c] sm:$0xf]
      %v398 = vld [vmem:[%s301 + $0x90] sm:$0xf]
      %v399 = vld [vmem:[%s301 + $0x94] sm:$0xf]
      %s400 = scalar_lea.vmem %s4, 8
      %v401 = vld [vmem:[%s400] sm:$0xf]
      %v402 = vld [vmem:[%s400 + $0x4] sm:$0x3]
      %v441 = vunpack.c.l.b16 %v362
      %v442 = vunpack.c.l.b16 %v363
      %v443 = vunpack.c.l.b16 %v364
      %v444 = vunpack.c.l.b16 %v365
      %v445 = vunpack.c.l.b16 %v366
      %v446 = vunpack.c.l.b16 %v367
      %v447 = vunpack.c.l.b16 %v368
      %v448 = vunpack.c.l.b16 %v369
      %v449 = vunpack.c.l.b16 %v370
      %v450 = vunpack.c.l.b16 %v371
      %v451 = vunpack.c.l.b16 %v372
      %v452 = vunpack.c.l.b16 %v373
      %v453 = vunpack.c.l.b16 %v374
      %v454 = vunpack.c.l.b16 %v375
      %v455 = vunpack.c.l.b16 %v376
      %v456 = vunpack.c.l.b16 %v377
      %v457 = vunpack.c.l.b16 %v378
      %v458 = vunpack.c.l.b16 %v379
      %v459 = vunpack.c.l.b16 %v380
      %v460 = vunpack.c.l.b16 %v381
      %v461 = vunpack.c.l.b16 %v382
      %v462 = vunpack.c.l.b16 %v383
      %v463 = vunpack.c.l.b16 %v384
      %v464 = vunpack.c.l.b16 %v385
      %v465 = vunpack.c.l.b16 %v386
      %v466 = vunpack.c.l.b16 %v387
      %v467 = vunpack.c.l.b16 %v388
      %v468 = vunpack.c.l.b16 %v389
      %v469 = vunpack.c.l.b16 %v390
      %v470 = vunpack.c.l.b16 %v391
      %v471 = vunpack.c.l.b16 %v392
      %v472 = vunpack.c.l.b16 %v393
      %v473 = vunpack.c.l.b16 %v394
      %v474 = vunpack.c.l.b16 %v395
      %v475 = vunpack.c.l.b16 %v396
      %v476 = vunpack.c.l.b16 %v397
      %v477 = vunpack.c.l.b16 %v398
      %v478 = vunpack.c.l.b16 %v399
      %v479 = vpack.c.b16 %v442, %v441
      %v480 = vpack.c.b16 %v444, %v443
      %v481 = vpack.c.b16 %v446, %v445
      %v482 = vpack.c.b16 %v448, %v447
      %v483 = vpack.c.b16 %v450, %v449
      %v484 = vpack.c.b16 %v452, %v451
      %v485 = vpack.c.b16 %v454, %v453
      %v486 = vpack.c.b16 %v456, %v455
      %v487 = vpack.c.b16 %v458, %v457
      %v488 = vpack.c.b16 %v460, %v459
      %v489 = vpack.c.b16 %v462, %v461
      %v490 = vpack.c.b16 %v464, %v463
      %v491 = vpack.c.b16 %v466, %v465
      %v492 = vpack.c.b16 %v468, %v467
      %v493 = vpack.c.b16 %v470, %v469
      %v494 = vpack.c.b16 %v472, %v471
      %v495 = vpack.c.b16 %v474, %v473
      %v496 = vpack.c.b16 %v476, %v475
      %v497 = vpack.c.b16 %v478, %v477
      %v500 = vunpack.c.l.b16 %v401
      %v501 = vunpack.c.l.b16 %v402
      %v502 = vpack.c.b16 %v501, %v500
      %vm503 = vcmask 97280
      %v505 = vsel %vm503, %v479, 0
      %v508 = vsel %vm503, %v480, 0
      %v511 = vsel %vm503, %v481, 0
      %v514 = vsel %vm503, %v482, 0
      %v517 = vsel %vm503, %v483, 0
      %v520 = vsel %vm503, %v484, 0
      %v523 = vsel %vm503, %v485, 0
      %v526 = vsel %vm503, %v486, 0
      %v529 = vsel %vm503, %v487, 0
      %v532 = vsel %vm503, %v488, 0
      %v535 = vsel %vm503, %v489, 0
      %v538 = vsel %vm503, %v490, 0
      %v541 = vsel %vm503, %v491, 0
      %v544 = vsel %vm503, %v492, 0
      %v547 = vsel %vm503, %v493, 0
      %v550 = vsel %vm503, %v494, 0
      %v553 = vsel %vm503, %v495, 0
      %v556 = vsel %vm503, %v496, 0
      %v559 = vsel %vm503, %v497, 0
      %vm561 = vcmask 1045504
      %v563 = vsel %vm561, %v502, 0
      %565 = vmatprep.subr.bf16.mxu0 0
      %566 = vmatpush1.bf16.msra.mxu0 0
      %567 = vmatprep.subr.bf16.mxu0 0
      %568 = vmatpush1.bf16.msra.mxu0 0
      %569 = vmatprep.subr.bf16.mxu0 0
      %570 = vmatpush1.bf16.msra.mxu0 0
      %571 = vmatprep.subr.bf16.mxu0 0
      %572 = vmatpush1.bf16.msra.mxu0 0
      %573 = vmatprep.subr.bf16.mxu0 0
      %574 = vmatpush1.bf16.msra.mxu0 0
      %575 = vmatprep.subr.bf16.mxu0 0
      %576 = vmatpush1.bf16.msra.mxu0 0
      %577 = vmatprep.subr.bf16.mxu0 0
      %578 = vmatpush1.bf16.msra.mxu0 0
      %579 = vmatprep.subr.bf16.mxu0 0
      %580 = vmatpush1.bf16.msra.mxu0 %v563
      %581 = vmatprep.subr.bf16.mxu0 0
      %582 = vmatpush2.bf16.msra.mxu0 0
      %583 = vmatprep.subr.bf16.mxu0 0
      %584 = vmatpush2.bf16.msra.mxu0 0
      %585 = vmatprep.subr.bf16.mxu0 0
      %586 = vmatpush2.bf16.msra.mxu0 0
      %587 = vmatprep.subr.bf16.mxu0 0
      %588 = vmatpush2.bf16.msra.mxu0 0
      %589 = vmatprep.subr.bf16.mxu0 0
      %590 = vmatpush2.bf16.msra.mxu0 0
      %591 = vmatprep.subr.bf16.mxu0 0
      %592 = vmatpush2.bf16.msra.mxu0 0
      %593 = vmatprep.subr.bf16.mxu0 0
      %594 = vmatpush2.bf16.msra.mxu0 0
      %595 = vmatprep.subr.bf16.mxu0 0
      %596 = vmatpush2.bf16.msra.mxu0 0
      %597 = vmatprep.mubr.bf16.mxu0 0
      %598 = vmatmul.mubr.bf16.gmra.mxu0 %v505
      %v599 = vpop.f32.mrf.mxu0
      %v600 = vadd.f32 0.0, %v599
      %v601 = vpop.f32.mrf.mxu0
      %v602 = vpop.f32.mrf.mxu0
      %v603 = vadd.f32 0.0, %v602
      %v604 = vpop.f32.mrf.mxu0
      %605 = vmatprep.mubr.bf16.mxu0 0
      %606 = vmatmul.mubr.bf16.gmra.mxu0 %v508
      %v607 = vpop.f32.mrf.mxu0
      %v608 = vadd.f32 0.0, %v607
      %v609 = vpop.f32.mrf.mxu0
      %v610 = vpop.f32.mrf.mxu0
      %v611 = vadd.f32 0.0, %v610
      %v612 = vpop.f32.mrf.mxu0
      %613 = vmatprep.mubr.bf16.mxu0 0
      %614 = vmatmul.mubr.bf16.gmra.mxu0 %v511
      %v615 = vpop.f32.mrf.mxu0
      %v616 = vadd.f32 0.0, %v615
      %v617 = vpop.f32.mrf.mxu0
      %v618 = vpop.f32.mrf.mxu0
      %v619 = vadd.f32 0.0, %v618
      %v620 = vpop.f32.mrf.mxu0
      %621 = vmatprep.mubr.bf16.mxu0 0
      %622 = vmatmul.mubr.bf16.gmra.mxu0 %v514
      %v623 = vpop.f32.mrf.mxu0
      %v624 = vadd.f32 0.0, %v623
      %v625 = vpop.f32.mrf.mxu0
      %v626 = vpop.f32.mrf.mxu0
      %v627 = vadd.f32 0.0, %v626
      %v628 = vpop.f32.mrf.mxu0
      %629 = vmatprep.mubr.bf16.mxu0 0
      %630 = vmatmul.mubr.bf16.gmra.mxu0 %v517
      %v631 = vpop.f32.mrf.mxu0
      %v632 = vadd.f32 0.0, %v631
      %v633 = vpop.f32.mrf.mxu0
      %v634 = vpop.f32.mrf.mxu0
      %v635 = vadd.f32 0.0, %v634
      %v636 = vpop.f32.mrf.mxu0
      %637 = vmatprep.mubr.bf16.mxu0 0
      %638 = vmatmul.mubr.bf16.gmra.mxu0 %v520
      %v639 = vpop.f32.mrf.mxu0
      %v640 = vadd.f32 0.0, %v639
      %v641 = vpop.f32.mrf.mxu0
      %v642 = vpop.f32.mrf.mxu0
      %v643 = vadd.f32 0.0, %v642
      %v644 = vpop.f32.mrf.mxu0
      %645 = vmatprep.mubr.bf16.mxu0 0
      %646 = vmatmul.mubr.bf16.gmra.mxu0 %v523
      %v647 = vpop.f32.mrf.mxu0
      %v648 = vadd.f32 0.0, %v647
      %v649 = vpop.f32.mrf.mxu0
      %v650 = vpop.f32.mrf.mxu0
      %v651 = vadd.f32 0.0, %v650
      %v652 = vpop.f32.mrf.mxu0
      %653 = vmatprep.mubr.bf16.mxu0 0
      %654 = vmatmul.mubr.bf16.gmra.mxu0 %v526
      %v655 = vpop.f32.mrf.mxu0
      %v656 = vadd.f32 0.0, %v655
      %v657 = vpop.f32.mrf.mxu0
      %v658 = vpop.f32.mrf.mxu0
      %v659 = vadd.f32 0.0, %v658
      %v660 = vpop.f32.mrf.mxu0
      %661 = vmatprep.mubr.bf16.mxu0 0
      %662 = vmatmul.mubr.bf16.gmra.mxu0 %v529
      %v663 = vpop.f32.mrf.mxu0
      %v664 = vadd.f32 0.0, %v663
      %v665 = vpop.f32.mrf.mxu0
      %v666 = vpop.f32.mrf.mxu0
      %v667 = vadd.f32 0.0, %v666
      %v668 = vpop.f32.mrf.mxu0
      %669 = vmatprep.mubr.bf16.mxu0 0
      %670 = vmatmul.mubr.bf16.gmra.mxu0 %v532
      %v671 = vpop.f32.mrf.mxu0
      %v672 = vadd.f32 0.0, %v671
      %v673 = vpop.f32.mrf.mxu0
      %v674 = vpop.f32.mrf.mxu0
      %v675 = vadd.f32 0.0, %v674
      %v676 = vpop.f32.mrf.mxu0
      %677 = vmatprep.mubr.bf16.mxu0 0
      %678 = vmatmul.mubr.bf16.gmra.mxu0 %v535
      %v679 = vpop.f32.mrf.mxu0
      %v680 = vadd.f32 0.0, %v679
      %v681 = vpop.f32.mrf.mxu0
      %v682 = vpop.f32.mrf.mxu0
      %v683 = vadd.f32 0.0, %v682
      %v684 = vpop.f32.mrf.mxu0
      %685 = vmatprep.mubr.bf16.mxu0 0
      %686 = vmatmul.mubr.bf16.gmra.mxu0 %v538
      %v687 = vpop.f32.mrf.mxu0
      %v688 = vadd.f32 0.0, %v687
      %v689 = vpop.f32.mrf.mxu0
      %v690 = vpop.f32.mrf.mxu0
      %v691 = vadd.f32 0.0, %v690
      %v692 = vpop.f32.mrf.mxu0
      %693 = vmatprep.mubr.bf16.mxu0 0
      %694 = vmatmul.mubr.bf16.gmra.mxu0 %v541
      %v695 = vpop.f32.mrf.mxu0
      %v696 = vadd.f32 0.0, %v695
      %v697 = vpop.f32.mrf.mxu0
      %v698 = vpop.f32.mrf.mxu0
      %v699 = vadd.f32 0.0, %v698
      %v700 = vpop.f32.mrf.mxu0
      %701 = vmatprep.mubr.bf16.mxu0 0
      %702 = vmatmul.mubr.bf16.gmra.mxu0 %v544
      %v703 = vpop.f32.mrf.mxu0
      %v704 = vadd.f32 0.0, %v703
      %v705 = vpop.f32.mrf.mxu0
      %v706 = vpop.f32.mrf.mxu0
      %v707 = vadd.f32 0.0, %v706
      %v708 = vpop.f32.mrf.mxu0
      %709 = vmatprep.mubr.bf16.mxu0 0
      %710 = vmatmul.mubr.bf16.gmra.mxu0 %v547
      %v711 = vpop.f32.mrf.mxu0
      %v712 = vadd.f32 0.0, %v711
      %v713 = vpop.f32.mrf.mxu0
      %v714 = vpop.f32.mrf.mxu0
      %v715 = vadd.f32 0.0, %v714
      %v716 = vpop.f32.mrf.mxu0
      %717 = vmatprep.mubr.bf16.mxu0 0
      %718 = vmatmul.mubr.bf16.gmra.mxu0 %v550
      %v719 = vpop.f32.mrf.mxu0
      %v720 = vadd.f32 0.0, %v719
      %v721 = vpop.f32.mrf.mxu0
      %v722 = vpop.f32.mrf.mxu0
      %v723 = vadd.f32 0.0, %v722
      %v724 = vpop.f32.mrf.mxu0
      %725 = vmatprep.mubr.bf16.mxu0 0
      %726 = vmatmul.mubr.bf16.gmra.mxu0 %v553
      %v727 = vpop.f32.mrf.mxu0
      %v728 = vadd.f32 0.0, %v727
      %v729 = vpop.f32.mrf.mxu0
      %v730 = vpop.f32.mrf.mxu0
      %v731 = vadd.f32 0.0, %v730
      %v732 = vpop.f32.mrf.mxu0
      %733 = vmatprep.mubr.bf16.mxu0 0
      %734 = vmatmul.mubr.bf16.gmra.mxu0 %v556
      %v735 = vpop.f32.mrf.mxu0
      %v736 = vadd.f32 0.0, %v735
      %v737 = vpop.f32.mrf.mxu0
      %v738 = vpop.f32.mrf.mxu0
      %v739 = vadd.f32 0.0, %v738
      %v740 = vpop.f32.mrf.mxu0
      %741 = vmatprep.mubr.bf16.mxu0 0
      %742 = vmatmul.mubr.bf16.gmra.mxu0 %v559
      %v743 = vpop.f32.mrf.mxu0
      %v744 = vadd.f32 0.0, %v743
      %v745 = vpop.f32.mrf.mxu0
      %v746 = vpop.f32.mrf.mxu0
      %v747 = vadd.f32 0.0, %v746
      %v748 = vpop.f32.mrf.mxu0
      %749 = vdwg.mxu0
      %v788 = vunpack.c.l.b16 %v322
      %v789 = vunpack.c.l.b16 %v323
      %v790 = vunpack.c.l.b16 %v324
      %v791 = vunpack.c.l.b16 %v325
      %v792 = vunpack.c.l.b16 %v326
      %v793 = vunpack.c.l.b16 %v327
      %v794 = vunpack.c.l.b16 %v328
      %v795 = vunpack.c.l.b16 %v329
      %v796 = vunpack.c.l.b16 %v330
      %v797 = vunpack.c.l.b16 %v331
      %v798 = vunpack.c.l.b16 %v332
      %v799 = vunpack.c.l.b16 %v333
      %v800 = vunpack.c.l.b16 %v334
      %v801 = vunpack.c.l.b16 %v335
      %v802 = vunpack.c.l.b16 %v336
      %v803 = vunpack.c.l.b16 %v337
      %v804 = vunpack.c.l.b16 %v338
      %v805 = vunpack.c.l.b16 %v339
      %v806 = vunpack.c.l.b16 %v340
      %v807 = vunpack.c.l.b16 %v341
      %v808 = vunpack.c.l.b16 %v342
      %v809 = vunpack.c.l.b16 %v343
      %v810 = vunpack.c.l.b16 %v344
      %v811 = vunpack.c.l.b16 %v345
      %v812 = vunpack.c.l.b16 %v346
      %v813 = vunpack.c.l.b16 %v347
      %v814 = vunpack.c.l.b16 %v348
      %v815 = vunpack.c.l.b16 %v349
      %v816 = vunpack.c.l.b16 %v350
      %v817 = vunpack.c.l.b16 %v351
      %v818 = vunpack.c.l.b16 %v352
      %v819 = vunpack.c.l.b16 %v353
      %v820 = vunpack.c.l.b16 %v354
      %v821 = vunpack.c.l.b16 %v355
      %v822 = vunpack.c.l.b16 %v356
      %v823 = vunpack.c.l.b16 %v357
      %v824 = vunpack.c.l.b16 %v358
      %v825 = vunpack.c.l.b16 %v359
      %v826 = vpack.c.b16 %v789, %v788
      %v827 = vpack.c.b16 %v791, %v790
      %v828 = vpack.c.b16 %v793, %v792
      %v829 = vpack.c.b16 %v795, %v794
      %v830 = vpack.c.b16 %v797, %v796
      %v831 = vpack.c.b16 %v799, %v798
      %v832 = vpack.c.b16 %v801, %v800
      %v833 = vpack.c.b16 %v803, %v802
      %v834 = vpack.c.b16 %v805, %v804
      %v835 = vpack.c.b16 %v807, %v806
      %v836 = vpack.c.b16 %v809, %v808
      %v837 = vpack.c.b16 %v811, %v810
      %v838 = vpack.c.b16 %v813, %v812
      %v839 = vpack.c.b16 %v815, %v814
      %v840 = vpack.c.b16 %v817, %v816
      %v841 = vpack.c.b16 %v819, %v818
      %v842 = vpack.c.b16 %v821, %v820
      %v843 = vpack.c.b16 %v823, %v822
      %v844 = vpack.c.b16 %v825, %v824
      %v847 = vunpack.c.l.b16 %v360
      %v848 = vunpack.c.l.b16 %v361
      %v849 = vpack.c.b16 %v848, %v847
      %v851 = vsel %vm503, %v826, 0
      %v854 = vsel %vm503, %v827, 0
      %v857 = vsel %vm503, %v828, 0
      %v860 = vsel %vm503, %v829, 0
      %v863 = vsel %vm503, %v830, 0
      %v866 = vsel %vm503, %v831, 0
      %v869 = vsel %vm503, %v832, 0
      %v872 = vsel %vm503, %v833, 0
      %v875 = vsel %vm503, %v834, 0
      %v878 = vsel %vm503, %v835, 0
      %v881 = vsel %vm503, %v836, 0
      %v884 = vsel %vm503, %v837, 0
      %v887 = vsel %vm503, %v838, 0
      %v890 = vsel %vm503, %v839, 0
      %v893 = vsel %vm503, %v840, 0
      %v896 = vsel %vm503, %v841, 0
      %v899 = vsel %vm503, %v842, 0
      %v902 = vsel %vm503, %v843, 0
      %v905 = vsel %vm503, %v844, 0
      %v908 = vsel %vm561, %v849, 0
      %910 = vmatprep.subr.bf16.mxu0 0
      %911 = vmatpush1.bf16.msra.mxu0 0
      %912 = vmatprep.subr.bf16.mxu0 0
      %913 = vmatpush1.bf16.msra.mxu0 0
      %914 = vmatprep.subr.bf16.mxu0 0
      %915 = vmatpush1.bf16.msra.mxu0 0
      %916 = vmatprep.subr.bf16.mxu0 0
      %917 = vmatpush1.bf16.msra.mxu0 0
      %918 = vmatprep.subr.bf16.mxu0 0
      %919 = vmatpush1.bf16.msra.mxu0 0
      %920 = vmatprep.subr.bf16.mxu0 0
      %921 = vmatpush1.bf16.msra.mxu0 0
      %922 = vmatprep.subr.bf16.mxu0 0
      %923 = vmatpush1.bf16.msra.mxu0 0
      %924 = vmatprep.subr.bf16.mxu0 0
      %925 = vmatpush1.bf16.msra.mxu0 %v908
      %926 = vmatprep.subr.bf16.mxu0 0
      %927 = vmatpush2.bf16.msra.mxu0 0
      %928 = vmatprep.subr.bf16.mxu0 0
      %929 = vmatpush2.bf16.msra.mxu0 0
      %930 = vmatprep.subr.bf16.mxu0 0
      %931 = vmatpush2.bf16.msra.mxu0 0
      %932 = vmatprep.subr.bf16.mxu0 0
      %933 = vmatpush2.bf16.msra.mxu0 0
      %934 = vmatprep.subr.bf16.mxu0 0
      %935 = vmatpush2.bf16.msra.mxu0 0
      %936 = vmatprep.subr.bf16.mxu0 0
      %937 = vmatpush2.bf16.msra.mxu0 0
      %938 = vmatprep.subr.bf16.mxu0 0
      %939 = vmatpush2.bf16.msra.mxu0 0
      %940 = vmatprep.subr.bf16.mxu0 0
      %941 = vmatpush2.bf16.msra.mxu0 0
      %942 = vmatprep.mubr.bf16.mxu0 0
      %943 = vmatmul.mubr.bf16.gmra.mxu0 %v851
      %v944 = vpop.f32.mrf.mxu0
      %v945 = vadd.f32 %v600, %v944
      %v946 = vpop.f32.mrf.mxu0
      %v947 = vpop.f32.mrf.mxu0
      %v948 = vadd.f32 %v603, %v947
      %v949 = vpop.f32.mrf.mxu0
      %950 = vmatprep.mubr.bf16.mxu0 0
      %951 = vmatmul.mubr.bf16.gmra.mxu0 %v854
      %v952 = vpop.f32.mrf.mxu0
      %v953 = vadd.f32 %v608, %v952
      %v954 = vpop.f32.mrf.mxu0
      %v955 = vpop.f32.mrf.mxu0
      %v956 = vadd.f32 %v611, %v955
      %v957 = vpop.f32.mrf.mxu0
      %958 = vmatprep.mubr.bf16.mxu0 0
      %959 = vmatmul.mubr.bf16.gmra.mxu0 %v857
      %v960 = vpop.f32.mrf.mxu0
      %v961 = vadd.f32 %v616, %v960
      %v962 = vpop.f32.mrf.mxu0
      %v963 = vpop.f32.mrf.mxu0
      %v964 = vadd.f32 %v619, %v963
      %v965 = vpop.f32.mrf.mxu0
      %966 = vmatprep.mubr.bf16.mxu0 0
      %967 = vmatmul.mubr.bf16.gmra.mxu0 %v860
      %v968 = vpop.f32.mrf.mxu0
      %v969 = vadd.f32 %v624, %v968
      %v970 = vpop.f32.mrf.mxu0
      %v971 = vpop.f32.mrf.mxu0
      %v972 = vadd.f32 %v627, %v971
      %v973 = vpop.f32.mrf.mxu0
      %974 = vmatprep.mubr.bf16.mxu0 0
      %975 = vmatmul.mubr.bf16.gmra.mxu0 %v863
      %v976 = vpop.f32.mrf.mxu0
      %v977 = vadd.f32 %v632, %v976
      %v978 = vpop.f32.mrf.mxu0
      %v979 = vpop.f32.mrf.mxu0
      %v980 = vadd.f32 %v635, %v979
      %v981 = vpop.f32.mrf.mxu0
      %982 = vmatprep.mubr.bf16.mxu0 0
      %983 = vmatmul.mubr.bf16.gmra.mxu0 %v866
      %v984 = vpop.f32.mrf.mxu0
      %v985 = vadd.f32 %v640, %v984
      %v986 = vpop.f32.mrf.mxu0
      %v987 = vpop.f32.mrf.mxu0
      %v988 = vadd.f32 %v643, %v987
      %v989 = vpop.f32.mrf.mxu0
      %990 = vmatprep.mubr.bf16.mxu0 0
      %991 = vmatmul.mubr.bf16.gmra.mxu0 %v869
      %v992 = vpop.f32.mrf.mxu0
      %v993 = vadd.f32 %v648, %v992
      %v994 = vpop.f32.mrf.mxu0
      %v995 = vpop.f32.mrf.mxu0
      %v996 = vadd.f32 %v651, %v995
      %v997 = vpop.f32.mrf.mxu0
      %998 = vmatprep.mubr.bf16.mxu0 0
      %999 = vmatmul.mubr.bf16.gmra.mxu0 %v872
      %v1000 = vpop.f32.mrf.mxu0
      %v1001 = vadd.f32 %v656, %v1000
      %v1002 = vpop.f32.mrf.mxu0
      %v1003 = vpop.f32.mrf.mxu0
      %v1004 = vadd.f32 %v659, %v1003
      %v1005 = vpop.f32.mrf.mxu0
      %1006 = vmatprep.mubr.bf16.mxu0 0
      %1007 = vmatmul.mubr.bf16.gmra.mxu0 %v875
      %v1008 = vpop.f32.mrf.mxu0
      %v1009 = vadd.f32 %v664, %v1008
      %v1010 = vpop.f32.mrf.mxu0
      %v1011 = vpop.f32.mrf.mxu0
      %v1012 = vadd.f32 %v667, %v1011
      %v1013 = vpop.f32.mrf.mxu0
      %1014 = vmatprep.mubr.bf16.mxu0 0
      %1015 = vmatmul.mubr.bf16.gmra.mxu0 %v878
      %v1016 = vpop.f32.mrf.mxu0
      %v1017 = vadd.f32 %v672, %v1016
      %v1018 = vpop.f32.mrf.mxu0
      %v1019 = vpop.f32.mrf.mxu0
      %v1020 = vadd.f32 %v675, %v1019
      %v1021 = vpop.f32.mrf.mxu0
      %1022 = vmatprep.mubr.bf16.mxu0 0
      %1023 = vmatmul.mubr.bf16.gmra.mxu0 %v881
      %v1024 = vpop.f32.mrf.mxu0
      %v1025 = vadd.f32 %v680, %v1024
      %v1026 = vpop.f32.mrf.mxu0
      %v1027 = vpop.f32.mrf.mxu0
      %v1028 = vadd.f32 %v683, %v1027
      %v1029 = vpop.f32.mrf.mxu0
      %1030 = vmatprep.mubr.bf16.mxu0 0
      %1031 = vmatmul.mubr.bf16.gmra.mxu0 %v884
      %v1032 = vpop.f32.mrf.mxu0
      %v1033 = vadd.f32 %v688, %v1032
      %v1034 = vpop.f32.mrf.mxu0
      %v1035 = vpop.f32.mrf.mxu0
      %v1036 = vadd.f32 %v691, %v1035
      %v1037 = vpop.f32.mrf.mxu0
      %1038 = vmatprep.mubr.bf16.mxu0 0
      %1039 = vmatmul.mubr.bf16.gmra.mxu0 %v887
      %v1040 = vpop.f32.mrf.mxu0
      %v1041 = vadd.f32 %v696, %v1040
      %v1042 = vpop.f32.mrf.mxu0
      %v1043 = vpop.f32.mrf.mxu0
      %v1044 = vadd.f32 %v699, %v1043
      %v1045 = vpop.f32.mrf.mxu0
      %1046 = vmatprep.mubr.bf16.mxu0 0
      %1047 = vmatmul.mubr.bf16.gmra.mxu0 %v890
      %v1048 = vpop.f32.mrf.mxu0
      %v1049 = vadd.f32 %v704, %v1048
      %v1050 = vpop.f32.mrf.mxu0
      %v1051 = vpop.f32.mrf.mxu0
      %v1052 = vadd.f32 %v707, %v1051
      %v1053 = vpop.f32.mrf.mxu0
      %1054 = vmatprep.mubr.bf16.mxu0 0
      %1055 = vmatmul.mubr.bf16.gmra.mxu0 %v893
      %v1056 = vpop.f32.mrf.mxu0
      %v1057 = vadd.f32 %v712, %v1056
      %v1058 = vpop.f32.mrf.mxu0
      %v1059 = vpop.f32.mrf.mxu0
      %v1060 = vadd.f32 %v715, %v1059
      %v1061 = vpop.f32.mrf.mxu0
      %1062 = vmatprep.mubr.bf16.mxu0 0
      %1063 = vmatmul.mubr.bf16.gmra.mxu0 %v896
      %v1064 = vpop.f32.mrf.mxu0
      %v1065 = vadd.f32 %v720, %v1064
      %v1066 = vpop.f32.mrf.mxu0
      %v1067 = vpop.f32.mrf.mxu0
      %v1068 = vadd.f32 %v723, %v1067
      %v1069 = vpop.f32.mrf.mxu0
      %1070 = vmatprep.mubr.bf16.mxu0 0
      %1071 = vmatmul.mubr.bf16.gmra.mxu0 %v899
      %v1072 = vpop.f32.mrf.mxu0
      %v1073 = vadd.f32 %v728, %v1072
      %v1074 = vpop.f32.mrf.mxu0
      %v1075 = vpop.f32.mrf.mxu0
      %v1076 = vadd.f32 %v731, %v1075
      %v1077 = vpop.f32.mrf.mxu0
      %1078 = vmatprep.mubr.bf16.mxu0 0
      %1079 = vmatmul.mubr.bf16.gmra.mxu0 %v902
      %v1080 = vpop.f32.mrf.mxu0
      %v1081 = vadd.f32 %v736, %v1080
      %v1082 = vpop.f32.mrf.mxu0
      %v1083 = vpop.f32.mrf.mxu0
      %v1084 = vadd.f32 %v739, %v1083
      %v1085 = vpop.f32.mrf.mxu0
      %1086 = vmatprep.mubr.bf16.mxu0 0
      %1087 = vmatmul.mubr.bf16.gmra.mxu0 %v905
      %v1088 = vpop.f32.mrf.mxu0
      %v1089 = vadd.f32 %v744, %v1088
      %v1090 = vpop.f32.mrf.mxu0
      %v1091 = vpop.f32.mrf.mxu0
      %v1092 = vadd.f32 %v747, %v1091
      %v1093 = vpop.f32.mrf.mxu0
      %1094 = vdwg.mxu0
      %v1095 = vld [vmem:[%s307] sm:$0xf]
      %v1096 = vld [vmem:[%s307 + $0x4] sm:$0xf]
      %v1097 = vld [vmem:[%s307 + $0x8] sm:$0xf]
      %v1098 = vld [vmem:[%s307 + $0xc] sm:$0xf]
      %v1099 = vld [vmem:[%s307 + $0x10] sm:$0xf]
      %v1100 = vld [vmem:[%s307 + $0x14] sm:$0xf]
      %v1101 = vld [vmem:[%s307 + $0x18] sm:$0xf]
      %v1102 = vld [vmem:[%s307 + $0x1c] sm:$0xf]
      %v1103 = vld [vmem:[%s307 + $0x20] sm:$0xf]
      %v1104 = vld [vmem:[%s307 + $0x24] sm:$0xf]
      %v1105 = vld [vmem:[%s307 + $0x28] sm:$0xf]
      %v1106 = vld [vmem:[%s307 + $0x2c] sm:$0xf]
      %v1107 = vld [vmem:[%s307 + $0x30] sm:$0xf]
      %v1108 = vld [vmem:[%s307 + $0x34] sm:$0xf]
      %v1109 = vld [vmem:[%s307 + $0x38] sm:$0xf]
      %v1110 = vld [vmem:[%s307 + $0x3c] sm:$0xf]
      %v1111 = vld [vmem:[%s307 + $0x40] sm:$0xf]
      %v1112 = vld [vmem:[%s307 + $0x44] sm:$0xf]
      %v1113 = vld [vmem:[%s307 + $0x48] sm:$0xf]
      %v1114 = vld [vmem:[%s307 + $0x4c] sm:$0xf]
      %v1115 = vld [vmem:[%s307 + $0x50] sm:$0xf]
      %v1116 = vld [vmem:[%s307 + $0x54] sm:$0xf]
      %v1117 = vld [vmem:[%s307 + $0x58] sm:$0xf]
      %v1118 = vld [vmem:[%s307 + $0x5c] sm:$0xf]
      %v1119 = vld [vmem:[%s307 + $0x60] sm:$0xf]
      %v1120 = vld [vmem:[%s307 + $0x64] sm:$0xf]
      %v1121 = vld [vmem:[%s307 + $0x68] sm:$0xf]
      %v1122 = vld [vmem:[%s307 + $0x6c] sm:$0xf]
      %v1123 = vld [vmem:[%s307 + $0x70] sm:$0xf]
      %v1124 = vld [vmem:[%s307 + $0x74] sm:$0xf]
      %v1125 = vld [vmem:[%s307 + $0x78] sm:$0xf]
      %v1126 = vld [vmem:[%s307 + $0x7c] sm:$0xf]
      %v1127 = vld [vmem:[%s307 + $0x80] sm:$0xf]
      %v1128 = vld [vmem:[%s307 + $0x84] sm:$0xf]
      %v1129 = vld [vmem:[%s307 + $0x88] sm:$0xf]
      %v1130 = vld [vmem:[%s307 + $0x8c] sm:$0xf]
      %v1131 = vld [vmem:[%s307 + $0x90] sm:$0xf]
      %v1132 = vld [vmem:[%s307 + $0x94] sm:$0xf]
      %s1133 = scalar_lea.vmem %s4, 16
      %v1134 = vld [vmem:[%s1133] sm:$0xf]
      %v1135 = vld [vmem:[%s1133 + $0x4] sm:$0x3]
      %v1174 = vunpack.c.l.b16 %v1095
      %v1175 = vunpack.c.l.b16 %v1096
      %v1176 = vunpack.c.l.b16 %v1097
      %v1177 = vunpack.c.l.b16 %v1098
      %v1178 = vunpack.c.l.b16 %v1099
      %v1179 = vunpack.c.l.b16 %v1100
      %v1180 = vunpack.c.l.b16 %v1101
      %v1181 = vunpack.c.l.b16 %v1102
      %v1182 = vunpack.c.l.b16 %v1103
      %v1183 = vunpack.c.l.b16 %v1104
      %v1184 = vunpack.c.l.b16 %v1105
      %v1185 = vunpack.c.l.b16 %v1106
      %v1186 = vunpack.c.l.b16 %v1107
      %v1187 = vunpack.c.l.b16 %v1108
      %v1188 = vunpack.c.l.b16 %v1109
      %v1189 = vunpack.c.l.b16 %v1110
      %v1190 = vunpack.c.l.b16 %v1111
      %v1191 = vunpack.c.l.b16 %v1112
      %v1192 = vunpack.c.l.b16 %v1113
      %v1193 = vunpack.c.l.b16 %v1114
      %v1194 = vunpack.c.l.b16 %v1115
      %v1195 = vunpack.c.l.b16 %v1116
      %v1196 = vunpack.c.l.b16 %v1117
      %v1197 = vunpack.c.l.b16 %v1118
      %v1198 = vunpack.c.l.b16 %v1119
      %v1199 = vunpack.c.l.b16 %v1120
      %v1200 = vunpack.c.l.b16 %v1121
      %v1201 = vunpack.c.l.b16 %v1122
      %v1202 = vunpack.c.l.b16 %v1123
      %v1203 = vunpack.c.l.b16 %v1124
      %v1204 = vunpack.c.l.b16 %v1125
      %v1205 = vunpack.c.l.b16 %v1126
      %v1206 = vunpack.c.l.b16 %v1127
      %v1207 = vunpack.c.l.b16 %v1128
      %v1208 = vunpack.c.l.b16 %v1129
      %v1209 = vunpack.c.l.b16 %v1130
      %v1210 = vunpack.c.l.b16 %v1131
      %v1211 = vunpack.c.l.b16 %v1132
      %v1212 = vpack.c.b16 %v1175, %v1174
      %v1213 = vpack.c.b16 %v1177, %v1176
      %v1214 = vpack.c.b16 %v1179, %v1178
      %v1215 = vpack.c.b16 %v1181, %v1180
      %v1216 = vpack.c.b16 %v1183, %v1182
      %v1217 = vpack.c.b16 %v1185, %v1184
      %v1218 = vpack.c.b16 %v1187, %v1186
      %v1219 = vpack.c.b16 %v1189, %v1188
      %v1220 = vpack.c.b16 %v1191, %v1190
      %v1221 = vpack.c.b16 %v1193, %v1192
      %v1222 = vpack.c.b16 %v1195, %v1194
      %v1223 = vpack.c.b16 %v1197, %v1196
      %v1224 = vpack.c.b16 %v1199, %v1198
      %v1225 = vpack.c.b16 %v1201, %v1200
      %v1226 = vpack.c.b16 %v1203, %v1202
      %v1227 = vpack.c.b16 %v1205, %v1204
      %v1228 = vpack.c.b16 %v1207, %v1206
      %v1229 = vpack.c.b16 %v1209, %v1208
      %v1230 = vpack.c.b16 %v1211, %v1210
      %v1233 = vunpack.c.l.b16 %v1134
      %v1234 = vunpack.c.l.b16 %v1135
      %v1235 = vpack.c.b16 %v1234, %v1233
      %v1237 = vsel %vm503, %v1212, 0
      %v1240 = vsel %vm503, %v1213, 0
      %v1243 = vsel %vm503, %v1214, 0
      %v1246 = vsel %vm503, %v1215, 0
      %v1249 = vsel %vm503, %v1216, 0
      %v1252 = vsel %vm503, %v1217, 0
      %v1255 = vsel %vm503, %v1218, 0
      %v1258 = vsel %vm503, %v1219, 0
      %v1261 = vsel %vm503, %v1220, 0
      %v1264 = vsel %vm503, %v1221, 0
      %v1267 = vsel %vm503, %v1222, 0
      %v1270 = vsel %vm503, %v1223, 0
      %v1273 = vsel %vm503, %v1224, 0
      %v1276 = vsel %vm503, %v1225, 0
      %v1279 = vsel %vm503, %v1226, 0
      %v1282 = vsel %vm503, %v1227, 0
      %v1285 = vsel %vm503, %v1228, 0
      %v1288 = vsel %vm503, %v1229, 0
      %v1291 = vsel %vm503, %v1230, 0
      %v1294 = vsel %vm561, %v1235, 0
      %1296 = vmatprep.subr.bf16.mxu0 0
      %1297 = vmatpush1.bf16.msra.mxu0 0
      %1298 = vmatprep.subr.bf16.mxu0 0
      %1299 = vmatpush1.bf16.msra.mxu0 0
      %1300 = vmatprep.subr.bf16.mxu0 0
      %1301 = vmatpush1.bf16.msra.mxu0 0
      %1302 = vmatprep.subr.bf16.mxu0 0
      %1303 = vmatpush1.bf16.msra.mxu0 0
      %1304 = vmatprep.subr.bf16.mxu0 0
      %1305 = vmatpush1.bf16.msra.mxu0 0
      %1306 = vmatprep.subr.bf16.mxu0 0
      %1307 = vmatpush1.bf16.msra.mxu0 0
      %1308 = vmatprep.subr.bf16.mxu0 0
      %1309 = vmatpush1.bf16.msra.mxu0 0
      %1310 = vmatprep.subr.bf16.mxu0 0
      %1311 = vmatpush1.bf16.msra.mxu0 %v1294
      %1312 = vmatprep.subr.bf16.mxu0 0
      %1313 = vmatpush2.bf16.msra.mxu0 0
      %1314 = vmatprep.subr.bf16.mxu0 0
      %1315 = vmatpush2.bf16.msra.mxu0 0
      %1316 = vmatprep.subr.bf16.mxu0 0
      %1317 = vmatpush2.bf16.msra.mxu0 0
      %1318 = vmatprep.subr.bf16.mxu0 0
      %1319 = vmatpush2.bf16.msra.mxu0 0
      %1320 = vmatprep.subr.bf16.mxu0 0
      %1321 = vmatpush2.bf16.msra.mxu0 0
      %1322 = vmatprep.subr.bf16.mxu0 0
      %1323 = vmatpush2.bf16.msra.mxu0 0
      %1324 = vmatprep.subr.bf16.mxu0 0
      %1325 = vmatpush2.bf16.msra.mxu0 0
      %1326 = vmatprep.subr.bf16.mxu0 0
      %1327 = vmatpush2.bf16.msra.mxu0 0
      %1328 = vmatprep.mubr.bf16.mxu0 0
      %1329 = vmatmul.mubr.bf16.gmra.mxu0 %v1237
      %v1330 = vpop.f32.mrf.mxu0
      %v1331 = vadd.f32 0.0, %v1330
      %v1332 = vpop.f32.mrf.mxu0
      %v1333 = vpop.f32.mrf.mxu0
      %v1334 = vadd.f32 0.0, %v1333
      %v1335 = vpop.f32.mrf.mxu0
      %1336 = vmatprep.mubr.bf16.mxu0 0
      %1337 = vmatmul.mubr.bf16.gmra.mxu0 %v1240
      %v1338 = vpop.f32.mrf.mxu0
      %v1339 = vadd.f32 0.0, %v1338
      %v1340 = vpop.f32.mrf.mxu0
      %v1341 = vpop.f32.mrf.mxu0
      %v1342 = vadd.f32 0.0, %v1341
      %v1343 = vpop.f32.mrf.mxu0
      %1344 = vmatprep.mubr.bf16.mxu0 0
      %1345 = vmatmul.mubr.bf16.gmra.mxu0 %v1243
      %v1346 = vpop.f32.mrf.mxu0
      %v1347 = vadd.f32 0.0, %v1346
      %v1348 = vpop.f32.mrf.mxu0
      %v1349 = vpop.f32.mrf.mxu0
      %v1350 = vadd.f32 0.0, %v1349
      %v1351 = vpop.f32.mrf.mxu0
      %1352 = vmatprep.mubr.bf16.mxu0 0
      %1353 = vmatmul.mubr.bf16.gmra.mxu0 %v1246
      %v1354 = vpop.f32.mrf.mxu0
      %v1355 = vadd.f32 0.0, %v1354
      %v1356 = vpop.f32.mrf.mxu0
      %v1357 = vpop.f32.mrf.mxu0
      %v1358 = vadd.f32 0.0, %v1357
      %v1359 = vpop.f32.mrf.mxu0
      %1360 = vmatprep.mubr.bf16.mxu0 0
      %1361 = vmatmul.mubr.bf16.gmra.mxu0 %v1249
      %v1362 = vpop.f32.mrf.mxu0
      %v1363 = vadd.f32 0.0, %v1362
      %v1364 = vpop.f32.mrf.mxu0
      %v1365 = vpop.f32.mrf.mxu0
      %v1366 = vadd.f32 0.0, %v1365
      %v1367 = vpop.f32.mrf.mxu0
      %1368 = vmatprep.mubr.bf16.mxu0 0
      %1369 = vmatmul.mubr.bf16.gmra.mxu0 %v1252
      %v1370 = vpop.f32.mrf.mxu0
      %v1371 = vadd.f32 0.0, %v1370
      %v1372 = vpop.f32.mrf.mxu0
      %v1373 = vpop.f32.mrf.mxu0
      %v1374 = vadd.f32 0.0, %v1373
      %v1375 = vpop.f32.mrf.mxu0
      %1376 = vmatprep.mubr.bf16.mxu0 0
      %1377 = vmatmul.mubr.bf16.gmra.mxu0 %v1255
      %v1378 = vpop.f32.mrf.mxu0
      %v1379 = vadd.f32 0.0, %v1378
      %v1380 = vpop.f32.mrf.mxu0
      %v1381 = vpop.f32.mrf.mxu0
      %v1382 = vadd.f32 0.0, %v1381
      %v1383 = vpop.f32.mrf.mxu0
      %1384 = vmatprep.mubr.bf16.mxu0 0
      %1385 = vmatmul.mubr.bf16.gmra.mxu0 %v1258
      %v1386 = vpop.f32.mrf.mxu0
      %v1387 = vadd.f32 0.0, %v1386
      %v1388 = vpop.f32.mrf.mxu0
      %v1389 = vpop.f32.mrf.mxu0
      %v1390 = vadd.f32 0.0, %v1389
      %v1391 = vpop.f32.mrf.mxu0
      %1392 = vmatprep.mubr.bf16.mxu0 0
      %1393 = vmatmul.mubr.bf16.gmra.mxu0 %v1261
      %v1394 = vpop.f32.mrf.mxu0
      %v1395 = vadd.f32 0.0, %v1394
      %v1396 = vpop.f32.mrf.mxu0
      %v1397 = vpop.f32.mrf.mxu0
      %v1398 = vadd.f32 0.0, %v1397
      %v1399 = vpop.f32.mrf.mxu0
      %1400 = vmatprep.mubr.bf16.mxu0 0
      %1401 = vmatmul.mubr.bf16.gmra.mxu0 %v1264
      %v1402 = vpop.f32.mrf.mxu0
      %v1403 = vadd.f32 0.0, %v1402
      %v1404 = vpop.f32.mrf.mxu0
      %v1405 = vpop.f32.mrf.mxu0
      %v1406 = vadd.f32 0.0, %v1405
      %v1407 = vpop.f32.mrf.mxu0
      %1408 = vmatprep.mubr.bf16.mxu0 0
      %1409 = vmatmul.mubr.bf16.gmra.mxu0 %v1267
      %v1410 = vpop.f32.mrf.mxu0
      %v1411 = vadd.f32 0.0, %v1410
      %v1412 = vpop.f32.mrf.mxu0
      %v1413 = vpop.f32.mrf.mxu0
      %v1414 = vadd.f32 0.0, %v1413
      %v1415 = vpop.f32.mrf.mxu0
      %1416 = vmatprep.mubr.bf16.mxu0 0
      %1417 = vmatmul.mubr.bf16.gmra.mxu0 %v1270
      %v1418 = vpop.f32.mrf.mxu0
      %v1419 = vadd.f32 0.0, %v1418
      %v1420 = vpop.f32.mrf.mxu0
      %v1421 = vpop.f32.mrf.mxu0
      %v1422 = vadd.f32 0.0, %v1421
      %v1423 = vpop.f32.mrf.mxu0
      %1424 = vmatprep.mubr.bf16.mxu0 0
      %1425 = vmatmul.mubr.bf16.gmra.mxu0 %v1273
      %v1426 = vpop.f32.mrf.mxu0
      %v1427 = vadd.f32 0.0, %v1426
      %v1428 = vpop.f32.mrf.mxu0
      %v1429 = vpop.f32.mrf.mxu0
      %v1430 = vadd.f32 0.0, %v1429
      %v1431 = vpop.f32.mrf.mxu0
      %1432 = vmatprep.mubr.bf16.mxu0 0
      %1433 = vmatmul.mubr.bf16.gmra.mxu0 %v1276
      %v1434 = vpop.f32.mrf.mxu0
      %v1435 = vadd.f32 0.0, %v1434
      %v1436 = vpop.f32.mrf.mxu0
      %v1437 = vpop.f32.mrf.mxu0
      %v1438 = vadd.f32 0.0, %v1437
      %v1439 = vpop.f32.mrf.mxu0
      %1440 = vmatprep.mubr.bf16.mxu0 0
      %1441 = vmatmul.mubr.bf16.gmra.mxu0 %v1279
      %v1442 = vpop.f32.mrf.mxu0
      %v1443 = vadd.f32 0.0, %v1442
      %v1444 = vpop.f32.mrf.mxu0
      %v1445 = vpop.f32.mrf.mxu0
      %v1446 = vadd.f32 0.0, %v1445
      %v1447 = vpop.f32.mrf.mxu0
      %1448 = vmatprep.mubr.bf16.mxu0 0
      %1449 = vmatmul.mubr.bf16.gmra.mxu0 %v1282
      %v1450 = vpop.f32.mrf.mxu0
      %v1451 = vadd.f32 0.0, %v1450
      %v1452 = vpop.f32.mrf.mxu0
      %v1453 = vpop.f32.mrf.mxu0
      %v1454 = vadd.f32 0.0, %v1453
      %v1455 = vpop.f32.mrf.mxu0
      %1456 = vmatprep.mubr.bf16.mxu0 0
      %1457 = vmatmul.mubr.bf16.gmra.mxu0 %v1285
      %v1458 = vpop.f32.mrf.mxu0
      %v1459 = vadd.f32 0.0, %v1458
      %v1460 = vpop.f32.mrf.mxu0
      %v1461 = vpop.f32.mrf.mxu0
      %v1462 = vadd.f32 0.0, %v1461
      %v1463 = vpop.f32.mrf.mxu0
      %1464 = vmatprep.mubr.bf16.mxu0 0
      %1465 = vmatmul.mubr.bf16.gmra.mxu0 %v1288
      %v1466 = vpop.f32.mrf.mxu0
      %v1467 = vadd.f32 0.0, %v1466
      %v1468 = vpop.f32.mrf.mxu0
      %v1469 = vpop.f32.mrf.mxu0
      %v1470 = vadd.f32 0.0, %v1469
      %v1471 = vpop.f32.mrf.mxu0
      %1472 = vmatprep.mubr.bf16.mxu0 0
      %1473 = vmatmul.mubr.bf16.gmra.mxu0 %v1291
      %v1474 = vpop.f32.mrf.mxu0
      %v1475 = vadd.f32 0.0, %v1474
      %v1476 = vpop.f32.mrf.mxu0
      %v1477 = vpop.f32.mrf.mxu0
      %v1478 = vadd.f32 0.0, %v1477
      %v1479 = vpop.f32.mrf.mxu0
      %1480 = vdwg.mxu0
      %v1481 = vadd.f32 %v945, %v1331
      %v1482 = vadd.f32 %v948, %v1334
      %v1483 = vadd.f32 %v953, %v1339
      %v1484 = vadd.f32 %v956, %v1342
      %v1485 = vadd.f32 %v961, %v1347
      %v1486 = vadd.f32 %v964, %v1350
      %v1487 = vadd.f32 %v969, %v1355
      %v1488 = vadd.f32 %v972, %v1358
      %v1489 = vadd.f32 %v977, %v1363
      %v1490 = vadd.f32 %v980, %v1366
      %v1491 = vadd.f32 %v985, %v1371
      %v1492 = vadd.f32 %v988, %v1374
      %v1493 = vadd.f32 %v993, %v1379
      %v1494 = vadd.f32 %v996, %v1382
      %v1495 = vadd.f32 %v1001, %v1387
      %v1496 = vadd.f32 %v1004, %v1390
      %v1497 = vadd.f32 %v1009, %v1395
      %v1498 = vadd.f32 %v1012, %v1398
      %v1499 = vadd.f32 %v1017, %v1403
      %v1500 = vadd.f32 %v1020, %v1406
      %v1501 = vadd.f32 %v1025, %v1411
      %v1502 = vadd.f32 %v1028, %v1414
      %v1503 = vadd.f32 %v1033, %v1419
      %v1504 = vadd.f32 %v1036, %v1422
      %v1505 = vadd.f32 %v1041, %v1427
      %v1506 = vadd.f32 %v1044, %v1430
      %v1507 = vadd.f32 %v1049, %v1435
      %v1508 = vadd.f32 %v1052, %v1438
      %v1509 = vadd.f32 %v1057, %v1443
      %v1510 = vadd.f32 %v1060, %v1446
      %v1511 = vadd.f32 %v1065, %v1451
      %v1512 = vadd.f32 %v1068, %v1454
      %v1513 = vadd.f32 %v1073, %v1459
      %v1514 = vadd.f32 %v1076, %v1462
      %v1515 = vadd.f32 %v1081, %v1467
      %v1516 = vadd.f32 %v1084, %v1470
      %v1517 = vadd.f32 %v1089, %v1475
      %v1518 = vadd.f32 %v1092, %v1478
      %v1519 = vld [vmem:[%s313] sm:$0xf]
      %v1520 = vld [vmem:[%s313 + $0x4] sm:$0xf]
      %v1521 = vld [vmem:[%s313 + $0x8] sm:$0xf]
      %v1522 = vld [vmem:[%s313 + $0xc] sm:$0xf]
      %v1523 = vld [vmem:[%s313 + $0x10] sm:$0xf]
      %v1524 = vld [vmem:[%s313 + $0x14] sm:$0xf]
      %v1525 = vld [vmem:[%s313 + $0x18] sm:$0xf]
      %v1526 = vld [vmem:[%s313 + $0x1c] sm:$0xf]
      %v1527 = vld [vmem:[%s313 + $0x20] sm:$0xf]
      %v1528 = vld [vmem:[%s313 + $0x24] sm:$0xf]
      %v1529 = vld [vmem:[%s313 + $0x28] sm:$0xf]
      %v1530 = vld [vmem:[%s313 + $0x2c] sm:$0xf]
      %v1531 = vld [vmem:[%s313 + $0x30] sm:$0xf]
      %v1532 = vld [vmem:[%s313 + $0x34] sm:$0xf]
      %v1533 = vld [vmem:[%s313 + $0x38] sm:$0xf]
      %v1534 = vld [vmem:[%s313 + $0x3c] sm:$0xf]
      %v1535 = vld [vmem:[%s313 + $0x40] sm:$0xf]
      %v1536 = vld [vmem:[%s313 + $0x44] sm:$0xf]
      %v1537 = vld [vmem:[%s313 + $0x48] sm:$0xf]
      %v1538 = vld [vmem:[%s313 + $0x4c] sm:$0xf]
      %v1539 = vld [vmem:[%s313 + $0x50] sm:$0xf]
      %v1540 = vld [vmem:[%s313 + $0x54] sm:$0xf]
      %v1541 = vld [vmem:[%s313 + $0x58] sm:$0xf]
      %v1542 = vld [vmem:[%s313 + $0x5c] sm:$0xf]
      %v1543 = vld [vmem:[%s313 + $0x60] sm:$0xf]
      %v1544 = vld [vmem:[%s313 + $0x64] sm:$0xf]
      %v1545 = vld [vmem:[%s313 + $0x68] sm:$0xf]
      %v1546 = vld [vmem:[%s313 + $0x6c] sm:$0xf]
      %v1547 = vld [vmem:[%s313 + $0x70] sm:$0xf]
      %v1548 = vld [vmem:[%s313 + $0x74] sm:$0xf]
      %v1549 = vld [vmem:[%s313 + $0x78] sm:$0xf]
      %v1550 = vld [vmem:[%s313 + $0x7c] sm:$0xf]
      %v1551 = vld [vmem:[%s313 + $0x80] sm:$0xf]
      %v1552 = vld [vmem:[%s313 + $0x84] sm:$0xf]
      %v1553 = vld [vmem:[%s313 + $0x88] sm:$0xf]
      %v1554 = vld [vmem:[%s313 + $0x8c] sm:$0xf]
      %v1555 = vld [vmem:[%s313 + $0x90] sm:$0xf]
      %v1556 = vld [vmem:[%s313 + $0x94] sm:$0xf]
      %s1557 = scalar_lea.vmem %s4, 24
      %v1558 = vld [vmem:[%s1557] sm:$0xf]
      %v1559 = vld [vmem:[%s1557 + $0x4] sm:$0x3]
      %v1598 = vunpack.c.l.b16 %v1519
      %v1599 = vunpack.c.l.b16 %v1520
      %v1600 = vunpack.c.l.b16 %v1521
      %v1601 = vunpack.c.l.b16 %v1522
      %v1602 = vunpack.c.l.b16 %v1523
      %v1603 = vunpack.c.l.b16 %v1524
      %v1604 = vunpack.c.l.b16 %v1525
      %v1605 = vunpack.c.l.b16 %v1526
      %v1606 = vunpack.c.l.b16 %v1527
      %v1607 = vunpack.c.l.b16 %v1528
      %v1608 = vunpack.c.l.b16 %v1529
      %v1609 = vunpack.c.l.b16 %v1530
      %v1610 = vunpack.c.l.b16 %v1531
      %v1611 = vunpack.c.l.b16 %v1532
      %v1612 = vunpack.c.l.b16 %v1533
      %v1613 = vunpack.c.l.b16 %v1534
      %v1614 = vunpack.c.l.b16 %v1535
      %v1615 = vunpack.c.l.b16 %v1536
      %v1616 = vunpack.c.l.b16 %v1537
      %v1617 = vunpack.c.l.b16 %v1538
      %v1618 = vunpack.c.l.b16 %v1539
      %v1619 = vunpack.c.l.b16 %v1540
      %v1620 = vunpack.c.l.b16 %v1541
      %v1621 = vunpack.c.l.b16 %v1542
      %v1622 = vunpack.c.l.b16 %v1543
      %v1623 = vunpack.c.l.b16 %v1544
      %v1624 = vunpack.c.l.b16 %v1545
      %v1625 = vunpack.c.l.b16 %v1546
      %v1626 = vunpack.c.l.b16 %v1547
      %v1627 = vunpack.c.l.b16 %v1548
      %v1628 = vunpack.c.l.b16 %v1549
      %v1629 = vunpack.c.l.b16 %v1550
      %v1630 = vunpack.c.l.b16 %v1551
      %v1631 = vunpack.c.l.b16 %v1552
      %v1632 = vunpack.c.l.b16 %v1553
      %v1633 = vunpack.c.l.b16 %v1554
      %v1634 = vunpack.c.l.b16 %v1555
      %v1635 = vunpack.c.l.b16 %v1556
      %v1636 = vpack.c.b16 %v1599, %v1598
      %v1637 = vpack.c.b16 %v1601, %v1600
      %v1638 = vpack.c.b16 %v1603, %v1602
      %v1639 = vpack.c.b16 %v1605, %v1604
      %v1640 = vpack.c.b16 %v1607, %v1606
      %v1641 = vpack.c.b16 %v1609, %v1608
      %v1642 = vpack.c.b16 %v1611, %v1610
      %v1643 = vpack.c.b16 %v1613, %v1612
      %v1644 = vpack.c.b16 %v1615, %v1614
      %v1645 = vpack.c.b16 %v1617, %v1616
      %v1646 = vpack.c.b16 %v1619, %v1618
      %v1647 = vpack.c.b16 %v1621, %v1620
      %v1648 = vpack.c.b16 %v1623, %v1622
      %v1649 = vpack.c.b16 %v1625, %v1624
      %v1650 = vpack.c.b16 %v1627, %v1626
      %v1651 = vpack.c.b16 %v1629, %v1628
      %v1652 = vpack.c.b16 %v1631, %v1630
      %v1653 = vpack.c.b16 %v1633, %v1632
      %v1654 = vpack.c.b16 %v1635, %v1634
      %v1657 = vunpack.c.l.b16 %v1558
      %v1658 = vunpack.c.l.b16 %v1559
      %v1659 = vpack.c.b16 %v1658, %v1657
      %v1661 = vsel %vm503, %v1636, 0
      %v1664 = vsel %vm503, %v1637, 0
      %v1667 = vsel %vm503, %v1638, 0
      %v1670 = vsel %vm503, %v1639, 0
      %v1673 = vsel %vm503, %v1640, 0
      %v1676 = vsel %vm503, %v1641, 0
      %v1679 = vsel %vm503, %v1642, 0
      %v1682 = vsel %vm503, %v1643, 0
      %v1685 = vsel %vm503, %v1644, 0
      %v1688 = vsel %vm503, %v1645, 0
      %v1691 = vsel %vm503, %v1646, 0
      %v1694 = vsel %vm503, %v1647, 0
      %v1697 = vsel %vm503, %v1648, 0
      %v1700 = vsel %vm503, %v1649, 0
      %v1703 = vsel %vm503, %v1650, 0
      %v1706 = vsel %vm503, %v1651, 0
      %v1709 = vsel %vm503, %v1652, 0
      %v1712 = vsel %vm503, %v1653, 0
      %v1715 = vsel %vm503, %v1654, 0
      %v1718 = vsel %vm561, %v1659, 0
      %1720 = vmatprep.subr.bf16.mxu0 0
      %1721 = vmatpush1.bf16.msra.mxu0 0
      %1722 = vmatprep.subr.bf16.mxu0 0
      %1723 = vmatpush1.bf16.msra.mxu0 0
      %1724 = vmatprep.subr.bf16.mxu0 0
      %1725 = vmatpush1.bf16.msra.mxu0 0
      %1726 = vmatprep.subr.bf16.mxu0 0
      %1727 = vmatpush1.bf16.msra.mxu0 0
      %1728 = vmatprep.subr.bf16.mxu0 0
      %1729 = vmatpush1.bf16.msra.mxu0 0
      %1730 = vmatprep.subr.bf16.mxu0 0
      %1731 = vmatpush1.bf16.msra.mxu0 0
      %1732 = vmatprep.subr.bf16.mxu0 0
      %1733 = vmatpush1.bf16.msra.mxu0 0
      %1734 = vmatprep.subr.bf16.mxu0 0
      %1735 = vmatpush1.bf16.msra.mxu0 %v1718
      %1736 = vmatprep.subr.bf16.mxu0 0
      %1737 = vmatpush2.bf16.msra.mxu0 0
      %1738 = vmatprep.subr.bf16.mxu0 0
      %1739 = vmatpush2.bf16.msra.mxu0 0
      %1740 = vmatprep.subr.bf16.mxu0 0
      %1741 = vmatpush2.bf16.msra.mxu0 0
      %1742 = vmatprep.subr.bf16.mxu0 0
      %1743 = vmatpush2.bf16.msra.mxu0 0
      %1744 = vmatprep.subr.bf16.mxu0 0
      %1745 = vmatpush2.bf16.msra.mxu0 0
      %1746 = vmatprep.subr.bf16.mxu0 0
      %1747 = vmatpush2.bf16.msra.mxu0 0
      %1748 = vmatprep.subr.bf16.mxu0 0
      %1749 = vmatpush2.bf16.msra.mxu0 0
      %1750 = vmatprep.subr.bf16.mxu0 0
      %1751 = vmatpush2.bf16.msra.mxu0 0
      %1752 = vmatprep.mubr.bf16.mxu0 0
      %1753 = vmatmul.mubr.bf16.gmra.mxu0 %v1661
      %v1754 = vpop.f32.mrf.mxu0
      %v1755 = vadd.f32 0.0, %v1754
      %v1756 = vpop.f32.mrf.mxu0
      %v1757 = vpop.f32.mrf.mxu0
      %v1758 = vadd.f32 0.0, %v1757
      %v1759 = vpop.f32.mrf.mxu0
      %1760 = vmatprep.mubr.bf16.mxu0 0
      %1761 = vmatmul.mubr.bf16.gmra.mxu0 %v1664
      %v1762 = vpop.f32.mrf.mxu0
      %v1763 = vadd.f32 0.0, %v1762
      %v1764 = vpop.f32.mrf.mxu0
      %v1765 = vpop.f32.mrf.mxu0
      %v1766 = vadd.f32 0.0, %v1765
      %v1767 = vpop.f32.mrf.mxu0
      %1768 = vmatprep.mubr.bf16.mxu0 0
      %1769 = vmatmul.mubr.bf16.gmra.mxu0 %v1667
      %v1770 = vpop.f32.mrf.mxu0
      %v1771 = vadd.f32 0.0, %v1770
      %v1772 = vpop.f32.mrf.mxu0
      %v1773 = vpop.f32.mrf.mxu0
      %v1774 = vadd.f32 0.0, %v1773
      %v1775 = vpop.f32.mrf.mxu0
      %1776 = vmatprep.mubr.bf16.mxu0 0
      %1777 = vmatmul.mubr.bf16.gmra.mxu0 %v1670
      %v1778 = vpop.f32.mrf.mxu0
      %v1779 = vadd.f32 0.0, %v1778
      %v1780 = vpop.f32.mrf.mxu0
      %v1781 = vpop.f32.mrf.mxu0
      %v1782 = vadd.f32 0.0, %v1781
      %v1783 = vpop.f32.mrf.mxu0
      %1784 = vmatprep.mubr.bf16.mxu0 0
      %1785 = vmatmul.mubr.bf16.gmra.mxu0 %v1673
      %v1786 = vpop.f32.mrf.mxu0
      %v1787 = vadd.f32 0.0, %v1786
      %v1788 = vpop.f32.mrf.mxu0
      %v1789 = vpop.f32.mrf.mxu0
      %v1790 = vadd.f32 0.0, %v1789
      %v1791 = vpop.f32.mrf.mxu0
      %1792 = vmatprep.mubr.bf16.mxu0 0
      %1793 = vmatmul.mubr.bf16.gmra.mxu0 %v1676
      %v1794 = vpop.f32.mrf.mxu0
      %v1795 = vadd.f32 0.0, %v1794
      %v1796 = vpop.f32.mrf.mxu0
      %v1797 = vpop.f32.mrf.mxu0
      %v1798 = vadd.f32 0.0, %v1797
      %v1799 = vpop.f32.mrf.mxu0
      %1800 = vmatprep.mubr.bf16.mxu0 0
      %1801 = vmatmul.mubr.bf16.gmra.mxu0 %v1679
      %v1802 = vpop.f32.mrf.mxu0
      %v1803 = vadd.f32 0.0, %v1802
      %v1804 = vpop.f32.mrf.mxu0
      %v1805 = vpop.f32.mrf.mxu0
      %v1806 = vadd.f32 0.0, %v1805
      %v1807 = vpop.f32.mrf.mxu0
      %1808 = vmatprep.mubr.bf16.mxu0 0
      %1809 = vmatmul.mubr.bf16.gmra.mxu0 %v1682
      %v1810 = vpop.f32.mrf.mxu0
      %v1811 = vadd.f32 0.0, %v1810
      %v1812 = vpop.f32.mrf.mxu0
      %v1813 = vpop.f32.mrf.mxu0
      %v1814 = vadd.f32 0.0, %v1813
      %v1815 = vpop.f32.mrf.mxu0
      %1816 = vmatprep.mubr.bf16.mxu0 0
      %1817 = vmatmul.mubr.bf16.gmra.mxu0 %v1685
      %v1818 = vpop.f32.mrf.mxu0
      %v1819 = vadd.f32 0.0, %v1818
      %v1820 = vpop.f32.mrf.mxu0
      %v1821 = vpop.f32.mrf.mxu0
      %v1822 = vadd.f32 0.0, %v1821
      %v1823 = vpop.f32.mrf.mxu0
      %1824 = vmatprep.mubr.bf16.mxu0 0
      %1825 = vmatmul.mubr.bf16.gmra.mxu0 %v1688
      %v1826 = vpop.f32.mrf.mxu0
      %v1827 = vadd.f32 0.0, %v1826
      %v1828 = vpop.f32.mrf.mxu0
      %v1829 = vpop.f32.mrf.mxu0
      %v1830 = vadd.f32 0.0, %v1829
      %v1831 = vpop.f32.mrf.mxu0
      %1832 = vmatprep.mubr.bf16.mxu0 0
      %1833 = vmatmul.mubr.bf16.gmra.mxu0 %v1691
      %v1834 = vpop.f32.mrf.mxu0
      %v1835 = vadd.f32 0.0, %v1834
      %v1836 = vpop.f32.mrf.mxu0
      %v1837 = vpop.f32.mrf.mxu0
      %v1838 = vadd.f32 0.0, %v1837
      %v1839 = vpop.f32.mrf.mxu0
      %1840 = vmatprep.mubr.bf16.mxu0 0
      %1841 = vmatmul.mubr.bf16.gmra.mxu0 %v1694
      %v1842 = vpop.f32.mrf.mxu0
      %v1843 = vadd.f32 0.0, %v1842
      %v1844 = vpop.f32.mrf.mxu0
      %v1845 = vpop.f32.mrf.mxu0
      %v1846 = vadd.f32 0.0, %v1845
      %v1847 = vpop.f32.mrf.mxu0
      %1848 = vmatprep.mubr.bf16.mxu0 0
      %1849 = vmatmul.mubr.bf16.gmra.mxu0 %v1697
      %v1850 = vpop.f32.mrf.mxu0
      %v1851 = vadd.f32 0.0, %v1850
      %v1852 = vpop.f32.mrf.mxu0
      %v1853 = vpop.f32.mrf.mxu0
      %v1854 = vadd.f32 0.0, %v1853
      %v1855 = vpop.f32.mrf.mxu0
      %1856 = vmatprep.mubr.bf16.mxu0 0
      %1857 = vmatmul.mubr.bf16.gmra.mxu0 %v1700
      %v1858 = vpop.f32.mrf.mxu0
      %v1859 = vadd.f32 0.0, %v1858
      %v1860 = vpop.f32.mrf.mxu0
      %v1861 = vpop.f32.mrf.mxu0
      %v1862 = vadd.f32 0.0, %v1861
      %v1863 = vpop.f32.mrf.mxu0
      %1864 = vmatprep.mubr.bf16.mxu0 0
      %1865 = vmatmul.mubr.bf16.gmra.mxu0 %v1703
      %v1866 = vpop.f32.mrf.mxu0
      %v1867 = vadd.f32 0.0, %v1866
      %v1868 = vpop.f32.mrf.mxu0
      %v1869 = vpop.f32.mrf.mxu0
      %v1870 = vadd.f32 0.0, %v1869
      %v1871 = vpop.f32.mrf.mxu0
      %1872 = vmatprep.mubr.bf16.mxu0 0
      %1873 = vmatmul.mubr.bf16.gmra.mxu0 %v1706
      %v1874 = vpop.f32.mrf.mxu0
      %v1875 = vadd.f32 0.0, %v1874
      %v1876 = vpop.f32.mrf.mxu0
      %v1877 = vpop.f32.mrf.mxu0
      %v1878 = vadd.f32 0.0, %v1877
      %v1879 = vpop.f32.mrf.mxu0
      %1880 = vmatprep.mubr.bf16.mxu0 0
      %1881 = vmatmul.mubr.bf16.gmra.mxu0 %v1709
      %v1882 = vpop.f32.mrf.mxu0
      %v1883 = vadd.f32 0.0, %v1882
      %v1884 = vpop.f32.mrf.mxu0
      %v1885 = vpop.f32.mrf.mxu0
      %v1886 = vadd.f32 0.0, %v1885
      %v1887 = vpop.f32.mrf.mxu0
      %1888 = vmatprep.mubr.bf16.mxu0 0
      %1889 = vmatmul.mubr.bf16.gmra.mxu0 %v1712
      %v1890 = vpop.f32.mrf.mxu0
      %v1891 = vadd.f32 0.0, %v1890
      %v1892 = vpop.f32.mrf.mxu0
      %v1893 = vpop.f32.mrf.mxu0
      %v1894 = vadd.f32 0.0, %v1893
      %v1895 = vpop.f32.mrf.mxu0
      %1896 = vmatprep.mubr.bf16.mxu0 0
      %1897 = vmatmul.mubr.bf16.gmra.mxu0 %v1715
      %v1898 = vpop.f32.mrf.mxu0
      %v1899 = vadd.f32 0.0, %v1898
      %v1900 = vpop.f32.mrf.mxu0
      %v1901 = vpop.f32.mrf.mxu0
      %v1902 = vadd.f32 0.0, %v1901
      %v1903 = vpop.f32.mrf.mxu0
      %1904 = vdwg.mxu0
      %v1905 = vadd.f32 %v1481, %v1755
      %v1906 = vadd.f32 %v1482, %v1758
      %v1907 = vadd.f32 %v1483, %v1763
      %v1908 = vadd.f32 %v1484, %v1766
      %v1909 = vadd.f32 %v1485, %v1771
      %v1910 = vadd.f32 %v1486, %v1774
      %v1911 = vadd.f32 %v1487, %v1779
      %v1912 = vadd.f32 %v1488, %v1782
      %v1913 = vadd.f32 %v1489, %v1787
      %v1914 = vadd.f32 %v1490, %v1790
      %v1915 = vadd.f32 %v1491, %v1795
      %v1916 = vadd.f32 %v1492, %v1798
      %v1917 = vadd.f32 %v1493, %v1803
      %v1918 = vadd.f32 %v1494, %v1806
      %v1919 = vadd.f32 %v1495, %v1811
      %v1920 = vadd.f32 %v1496, %v1814
      %v1921 = vadd.f32 %v1497, %v1819
      %v1922 = vadd.f32 %v1498, %v1822
      %v1923 = vadd.f32 %v1499, %v1827
      %v1924 = vadd.f32 %v1500, %v1830
      %v1925 = vadd.f32 %v1501, %v1835
      %v1926 = vadd.f32 %v1502, %v1838
      %v1927 = vadd.f32 %v1503, %v1843
      %v1928 = vadd.f32 %v1504, %v1846
      %v1929 = vadd.f32 %v1505, %v1851
      %v1930 = vadd.f32 %v1506, %v1854
      %v1931 = vadd.f32 %v1507, %v1859
      %v1932 = vadd.f32 %v1508, %v1862
      %v1933 = vadd.f32 %v1509, %v1867
      %v1934 = vadd.f32 %v1510, %v1870
      %v1935 = vadd.f32 %v1511, %v1875
      %v1936 = vadd.f32 %v1512, %v1878
      %v1937 = vadd.f32 %v1513, %v1883
      %v1938 = vadd.f32 %v1514, %v1886
      %v1939 = vadd.f32 %v1515, %v1891
      %v1940 = vadd.f32 %v1516, %v1894
      %v1941 = vadd.f32 %v1517, %v1899
      %v1942 = vadd.f32 %v1518, %v1902
      %v1943 = vld [vmem:[%s5] sm:$0x1]
      %v1945 = vlaneseq
      %v1946 = vshrl.u32 %v1945, 7
      %v1947 = vsub.s32 0, %v1946
      %v1948 = vrot.slane %v1943, %v1947
      %v1950 = vadd.f32 %v1905, %v1948
      %v1951 = vadd.f32 %v1906, %v1948
      %v1952 = vadd.f32 %v1907, %v1948
      %v1953 = vadd.f32 %v1908, %v1948
      %v1954 = vadd.f32 %v1909, %v1948
      %v1955 = vadd.f32 %v1910, %v1948
      %v1956 = vadd.f32 %v1911, %v1948
      %v1957 = vadd.f32 %v1912, %v1948
      %v1958 = vadd.f32 %v1913, %v1948
      %v1959 = vadd.f32 %v1914, %v1948
      %v1960 = vadd.f32 %v1915, %v1948
      %v1961 = vadd.f32 %v1916, %v1948
      %v1962 = vadd.f32 %v1917, %v1948
      %v1963 = vadd.f32 %v1918, %v1948
      %v1964 = vadd.f32 %v1919, %v1948
      %v1965 = vadd.f32 %v1920, %v1948
      %v1966 = vadd.f32 %v1921, %v1948
      %v1967 = vadd.f32 %v1922, %v1948
      %v1968 = vadd.f32 %v1923, %v1948
      %v1969 = vadd.f32 %v1924, %v1948
      %v1970 = vadd.f32 %v1925, %v1948
      %v1971 = vadd.f32 %v1926, %v1948
      %v1972 = vadd.f32 %v1927, %v1948
      %v1973 = vadd.f32 %v1928, %v1948
      %v1974 = vadd.f32 %v1929, %v1948
      %v1975 = vadd.f32 %v1930, %v1948
      %v1976 = vadd.f32 %v1931, %v1948
      %v1977 = vadd.f32 %v1932, %v1948
      %v1978 = vadd.f32 %v1933, %v1948
      %v1979 = vadd.f32 %v1934, %v1948
      %v1980 = vadd.f32 %v1935, %v1948
      %v1981 = vadd.f32 %v1936, %v1948
      %v1982 = vadd.f32 %v1937, %v1948
      %v1983 = vadd.f32 %v1938, %v1948
      %v1984 = vadd.f32 %v1939, %v1948
      %v1985 = vadd.f32 %v1940, %v1948
      %v1986 = vadd.f32 %v1941, %v1948
      %v1987 = vadd.f32 %v1942, %v1948
      %v1988 = vsub.f32 0.0, %v1950
      %v1989 = vsub.f32 0.0, %v1951
      %v1990 = vsub.f32 0.0, %v1952
      %v1991 = vsub.f32 0.0, %v1953
      %v1992 = vsub.f32 0.0, %v1954
      %v1993 = vsub.f32 0.0, %v1955
      %v1994 = vsub.f32 0.0, %v1956
      %v1995 = vsub.f32 0.0, %v1957
      %v1996 = vsub.f32 0.0, %v1958
      %v1997 = vsub.f32 0.0, %v1959
      %v1998 = vsub.f32 0.0, %v1960
      %v1999 = vsub.f32 0.0, %v1961
      %v2000 = vsub.f32 0.0, %v1962
      %v2001 = vsub.f32 0.0, %v1963
      %v2002 = vsub.f32 0.0, %v1964
      %v2003 = vsub.f32 0.0, %v1965
      %v2004 = vsub.f32 0.0, %v1966
      %v2005 = vsub.f32 0.0, %v1967
      %v2006 = vsub.f32 0.0, %v1968
      %v2007 = vsub.f32 0.0, %v1969
      %v2008 = vsub.f32 0.0, %v1970
      %v2009 = vsub.f32 0.0, %v1971
      %v2010 = vsub.f32 0.0, %v1972
      %v2011 = vsub.f32 0.0, %v1973
      %v2012 = vsub.f32 0.0, %v1974
      %v2013 = vsub.f32 0.0, %v1975
      %v2014 = vsub.f32 0.0, %v1976
      %v2015 = vsub.f32 0.0, %v1977
      %v2016 = vsub.f32 0.0, %v1978
      %v2017 = vsub.f32 0.0, %v1979
      %v2018 = vsub.f32 0.0, %v1980
      %v2019 = vsub.f32 0.0, %v1981
      %v2020 = vsub.f32 0.0, %v1982
      %v2021 = vsub.f32 0.0, %v1983
      %v2022 = vsub.f32 0.0, %v1984
      %v2023 = vsub.f32 0.0, %v1985
      %v2024 = vsub.f32 0.0, %v1986
      %v2025 = vsub.f32 0.0, %v1987
      %v2026 = vmul.f32 %v1988, 1.442695
      %v2027 = vpow.pop %v2026
      %v2028 = vmul.f32 %v1989, 1.442695
      %v2029 = vpow.pop %v2028
      %v2030 = vmul.f32 %v1990, 1.442695
      %v2031 = vpow.pop %v2030
      %v2032 = vmul.f32 %v1991, 1.442695
      %v2033 = vpow.pop %v2032
      %v2034 = vmul.f32 %v1992, 1.442695
      %v2035 = vpow.pop %v2034
      %v2036 = vmul.f32 %v1993, 1.442695
      %v2037 = vpow.pop %v2036
      %v2038 = vmul.f32 %v1994, 1.442695
      %v2039 = vpow.pop %v2038
      %v2040 = vmul.f32 %v1995, 1.442695
      %v2041 = vpow.pop %v2040
      %v2042 = vmul.f32 %v1996, 1.442695
      %v2043 = vpow.pop %v2042
      %v2044 = vmul.f32 %v1997, 1.442695
      %v2045 = vpow.pop %v2044
      %v2046 = vmul.f32 %v1998, 1.442695
      %v2047 = vpow.pop %v2046
      %v2048 = vmul.f32 %v1999, 1.442695
      %v2049 = vpow.pop %v2048
      %v2050 = vmul.f32 %v2000, 1.442695
      %v2051 = vpow.pop %v2050
      %v2052 = vmul.f32 %v2001, 1.442695
      %v2053 = vpow.pop %v2052
      %v2054 = vmul.f32 %v2002, 1.442695
      %v2055 = vpow.pop %v2054
      %v2056 = vmul.f32 %v2003, 1.442695
      %v2057 = vpow.pop %v2056
      %v2058 = vmul.f32 %v2004, 1.442695
      %v2059 = vpow.pop %v2058
      %v2060 = vmul.f32 %v2005, 1.442695
      %v2061 = vpow.pop %v2060
      %v2062 = vmul.f32 %v2006, 1.442695
      %v2063 = vpow.pop %v2062
      %v2064 = vmul.f32 %v2007, 1.442695
      %v2065 = vpow.pop %v2064
      %v2066 = vmul.f32 %v2008, 1.442695
      %v2067 = vpow.pop %v2066
      %v2068 = vmul.f32 %v2009, 1.442695
      %v2069 = vpow.pop %v2068
      %v2070 = vmul.f32 %v2010, 1.442695
      %v2071 = vpow.pop %v2070
      %v2072 = vmul.f32 %v2011, 1.442695
      %v2073 = vpow.pop %v2072
      %v2074 = vmul.f32 %v2012, 1.442695
      %v2075 = vpow.pop %v2074
      %v2076 = vmul.f32 %v2013, 1.442695
      %v2077 = vpow.pop %v2076
      %v2078 = vmul.f32 %v2014, 1.442695
      %v2079 = vpow.pop %v2078
      %v2080 = vmul.f32 %v2015, 1.442695
      %v2081 = vpow.pop %v2080
      %v2082 = vmul.f32 %v2016, 1.442695
      %v2083 = vpow.pop %v2082
      %v2084 = vmul.f32 %v2017, 1.442695
      %v2085 = vpow.pop %v2084
      %v2086 = vmul.f32 %v2018, 1.442695
      %v2087 = vpow.pop %v2086
      %v2088 = vmul.f32 %v2019, 1.442695
      %v2089 = vpow.pop %v2088
      %v2090 = vmul.f32 %v2020, 1.442695
      %v2091 = vpow.pop %v2090
      %v2092 = vmul.f32 %v2021, 1.442695
      %v2093 = vpow.pop %v2092
      %v2094 = vmul.f32 %v2022, 1.442695
      %v2095 = vpow.pop %v2094
      %v2096 = vmul.f32 %v2023, 1.442695
      %v2097 = vpow.pop %v2096
      %v2098 = vmul.f32 %v2024, 1.442695
      %v2099 = vpow.pop %v2098
      %v2100 = vmul.f32 %v2025, 1.442695
      %v2101 = vpow.pop %v2100
      %v2102 = vadd.f32 %v2027, 1.0
      %v2103 = vadd.f32 %v2029, 1.0
      %v2104 = vadd.f32 %v2031, 1.0
      %v2105 = vadd.f32 %v2033, 1.0
      %v2106 = vadd.f32 %v2035, 1.0
      %v2107 = vadd.f32 %v2037, 1.0
      %v2108 = vadd.f32 %v2039, 1.0
      %v2109 = vadd.f32 %v2041, 1.0
      %v2110 = vadd.f32 %v2043, 1.0
      %v2111 = vadd.f32 %v2045, 1.0
      %v2112 = vadd.f32 %v2047, 1.0
      %v2113 = vadd.f32 %v2049, 1.0
      %v2114 = vadd.f32 %v2051, 1.0
      %v2115 = vadd.f32 %v2053, 1.0
      %v2116 = vadd.f32 %v2055, 1.0
      %v2117 = vadd.f32 %v2057, 1.0
      %v2118 = vadd.f32 %v2059, 1.0
      %v2119 = vadd.f32 %v2061, 1.0
      %v2120 = vadd.f32 %v2063, 1.0
      %v2121 = vadd.f32 %v2065, 1.0
      %v2122 = vadd.f32 %v2067, 1.0
      %v2123 = vadd.f32 %v2069, 1.0
      %v2124 = vadd.f32 %v2071, 1.0
      %v2125 = vadd.f32 %v2073, 1.0
      %v2126 = vadd.f32 %v2075, 1.0
      %v2127 = vadd.f32 %v2077, 1.0
      %v2128 = vadd.f32 %v2079, 1.0
      %v2129 = vadd.f32 %v2081, 1.0
      %v2130 = vadd.f32 %v2083, 1.0
      %v2131 = vadd.f32 %v2085, 1.0
      %v2132 = vadd.f32 %v2087, 1.0
      %v2133 = vadd.f32 %v2089, 1.0
      %v2134 = vadd.f32 %v2091, 1.0
      %v2135 = vadd.f32 %v2093, 1.0
      %v2136 = vadd.f32 %v2095, 1.0
      %v2137 = vadd.f32 %v2097, 1.0
      %v2138 = vadd.f32 %v2099, 1.0
      %v2139 = vadd.f32 %v2101, 1.0
      %v2140 = vrcp.pop %v2102
      %v2141 = vrcp.pop %v2103
      %v2142 = vrcp.pop %v2104
      %v2143 = vrcp.pop %v2105
      %v2144 = vrcp.pop %v2106
      %v2145 = vrcp.pop %v2107
      %v2146 = vrcp.pop %v2108
      %v2147 = vrcp.pop %v2109
      %v2148 = vrcp.pop %v2110
      %v2149 = vrcp.pop %v2111
      %v2150 = vrcp.pop %v2112
      %v2151 = vrcp.pop %v2113
      %v2152 = vrcp.pop %v2114
      %v2153 = vrcp.pop %v2115
      %v2154 = vrcp.pop %v2116
      %v2155 = vrcp.pop %v2117
      %v2156 = vrcp.pop %v2118
      %v2157 = vrcp.pop %v2119
      %v2158 = vrcp.pop %v2120
      %v2159 = vrcp.pop %v2121
      %v2160 = vrcp.pop %v2122
      %v2161 = vrcp.pop %v2123
      %v2162 = vrcp.pop %v2124
      %v2163 = vrcp.pop %v2125
      %v2164 = vrcp.pop %v2126
      %v2165 = vrcp.pop %v2127
      %v2166 = vrcp.pop %v2128
      %v2167 = vrcp.pop %v2129
      %v2168 = vrcp.pop %v2130
      %v2169 = vrcp.pop %v2131
      %v2170 = vrcp.pop %v2132
      %v2171 = vrcp.pop %v2133
      %v2172 = vrcp.pop %v2134
      %v2173 = vrcp.pop %v2135
      %v2174 = vrcp.pop %v2136
      %v2175 = vrcp.pop %v2137
      %v2176 = vrcp.pop %v2138
      %v2177 = vrcp.pop %v2139
      %2178 = vst [vmem:[%s319] sm:$0xff] %v2140
      %2179 = vst [vmem:[%s319 + $0x8] sm:$0xff] %v2141
      %2180 = vst [vmem:[%s319 + $0x10] sm:$0xff] %v2142
      %2181 = vst [vmem:[%s319 + $0x18] sm:$0xff] %v2143
      %2182 = vst [vmem:[%s319 + $0x20] sm:$0xff] %v2144
      %2183 = vst [vmem:[%s319 + $0x28] sm:$0xff] %v2145
      %2184 = vst [vmem:[%s319 + $0x30] sm:$0xff] %v2146
      %2185 = vst [vmem:[%s319 + $0x38] sm:$0xff] %v2147
      %2186 = vst [vmem:[%s319 + $0x40] sm:$0xff] %v2148
      %2187 = vst [vmem:[%s319 + $0x48] sm:$0xff] %v2149
      %2188 = vst [vmem:[%s319 + $0x50] sm:$0xff] %v2150
      %2189 = vst [vmem:[%s319 + $0x58] sm:$0xff] %v2151
      %2190 = vst [vmem:[%s319 + $0x60] sm:$0xff] %v2152
      %2191 = vst [vmem:[%s319 + $0x68] sm:$0xff] %v2153
      %2192 = vst [vmem:[%s319 + $0x70] sm:$0xff] %v2154
      %2193 = vst [vmem:[%s319 + $0x78] sm:$0xff] %v2155
      %2194 = vst [vmem:[%s319 + $0x80] sm:$0xff] %v2156
      %2195 = vst [vmem:[%s319 + $0x88] sm:$0xff] %v2157
      %2196 = vst [vmem:[%s319 + $0x90] sm:$0xff] %v2158
      %2197 = vst [vmem:[%s319 + $0x98] sm:$0xff] %v2159
      %2198 = vst [vmem:[%s319 + $0xa0] sm:$0xff] %v2160
      %2199 = vst [vmem:[%s319 + $0xa8] sm:$0xff] %v2161
      %2200 = vst [vmem:[%s319 + $0xb0] sm:$0xff] %v2162
      %2201 = vst [vmem:[%s319 + $0xb8] sm:$0xff] %v2163
      %2202 = vst [vmem:[%s319 + $0xc0] sm:$0xff] %v2164
      %2203 = vst [vmem:[%s319 + $0xc8] sm:$0xff] %v2165
      %2204 = vst [vmem:[%s319 + $0xd0] sm:$0xff] %v2166
      %2205 = vst [vmem:[%s319 + $0xd8] sm:$0xff] %v2167
      %2206 = vst [vmem:[%s319 + $0xe0] sm:$0xff] %v2168
      %2207 = vst [vmem:[%s319 + $0xe8] sm:$0xff] %v2169
      %2208 = vst [vmem:[%s319 + $0xf0] sm:$0xff] %v2170
      %2209 = vst [vmem:[%s319 + $0xf8] sm:$0xff] %v2171
      %2210 = vst [vmem:[%s319 + $0x100] sm:$0xff] %v2172
      %2211 = vst [vmem:[%s319 + $0x108] sm:$0xff] %v2173
      %2212 = vst [vmem:[%s319 + $0x110] sm:$0xff] %v2174
      %2213 = vst [vmem:[%s319 + $0x118] sm:$0xff] %v2175
      %2214 = vst [vmem:[%s319 + $0x120] sm:$0xff] %v2176
      %2215 = vst [vmem:[%s319 + $0x128] sm:$0xff] %v2177
      %s2216 = smul.u32 38, %s17
      %p2217 = scmp.lt.s32.totalorder %s2216, 75
      %s2218 = scalar_select %p2217, %s2216, 75
      %s2219 = smul.addr %s2218, 8
      %s2220 = scalar_lea.vmem %s6, %s2219
      // Predicated region
      $region45: #{decoder_forward.7} parent=43 // pred_check
        %p2221 = pneg %p181
      $region46: #{decoder_forward.7} parent=43 // pred_check_branch
        %2223 = sbr.rel (%p2221) target = $region48
      $region47: #{decoder_forward.7} parent=43 // pred_region
        %s2224 = smul.u32 38, %s17
      $region48: #{decoder_forward.7} parent=43 // pred_fallthru
        _
    $region44: #{decoder_forward.7} parent=5 // pred_fallthru
      _
    %p2225 = scmp.le.s32.totalorder 2, %s12
    // Predicated region
    $region49: #{decoder_forward.7} parent=5 // pred_check
      %p2226 = pneg %p2225
    $region50: #{decoder_forward.7} parent=5 // pred_check_branch
      %2228 = sbr.rel (%p2226) target = $region52
    $region51: #{decoder_forward.7} parent=5 // pred_region
      %s2229 = ssub.s32 %s12, 2
      // Predicated region
      $region53: #{decoder_forward.7} parent=51 // pred_check
        %p2230 = pneg %p187
      $region54: #{decoder_forward.7} parent=51 // pred_check_branch
        %2232 = sbr.rel (%p2230) target = $region56
      $region55: #{decoder_forward.7} parent=51 // pred_region
        %s2233 = smul.u32 38, %s18
        %p2234 = scmp.lt.s32.totalorder %s2233, 75
        %s2235 = scalar_select %p2234, %s2233, 75
        %s2236 = smul.addr %s2235, 8
        %s2237 = scalar_lea.vmem %s6, %s2236
      $region56: #{decoder_forward.7} parent=51 // pred_fallthru
        _
    $region52: #{decoder_forward.7} parent=5 // pred_fallthru
      _
  $region6: #{decoder_forward.7} parent=0 // loop_footer
    %s16 = sadd.s32 1, %s12
  $region7: #{decoder_forward.7} parent=0 // loop_footer_branch
    %11 = sbr.rel target = $region3
  $region8: #{decoder_forward.7} parent=0 // loop_exit
    _

</llo_original>
